<compile_context>
chip_gen: v7x
topology: tpu7x:2x2x1
jax: 0.10.0
libtpu: 0.0.40
codegen_flags: <defaults>
</compile_context>

<pallas_src>
import functools

import jax
import jax.numpy as jnp
from jax import lax
from jax.experimental import pallas as pl
from jax.experimental.pallas import tpu as pltpu


# ----------------------------- Pallas kernel --------------------------------

def encoder_kernel(*refs, seq_len, batch, num_layers):
    """Fused encoder: embedding gather + num_layers LSTM layers over the sequence.

    Ref layout (inputs, outputs, scratch):
      refs[0]              ids_ref   (S*B, 1)  int32, time-major (row t*B + b)
      refs[1]              emb_ref   (Vpad, E) bf16 embedding table (zero-padded rows)
      refs[2 + 3l + 0]     w_ih_l    (Din, 4H) bf16   gate order (i, f, o, g)
      refs[2 + 3l + 1]     w_hh_l    (H,   4H) bf16   gate order (i, f, o, g)
      refs[2 + 3l + 2]     b_l       (1,   4H) f32    b_ih + b_hh, reordered
      refs[2 + 3L]         h_out_ref (L, B, H) f32
      refs[3 + 3L]         c_out_ref (L, B, H) f32
      refs[4 + 3L]         gx_scr    (S*B, 4H) f32 scratch (layer-0 input projection)
    """
    ids_ref, emb_ref = refs[0], refs[1]
    w_refs = refs[2:2 + 3 * num_layers]
    h_out_ref = refs[2 + 3 * num_layers]
    c_out_ref = refs[3 + 3 * num_layers]
    gx_scr = refs[4 + 3 * num_layers]

    S, B = seq_len, batch
    SB = S * B
    H = w_refs[1].shape[0]          # w_hh_0 is (H, 4H)
    V = emb_ref.shape[0]            # padded vocab (multiple of 128)

    # ---- fused embedding gather: one-hot @ table on the MXU (exact row select) ----
    ids = ids_ref[...]                                           # (SB, 1) int32
    col = lax.broadcasted_iota(jnp.int32, (SB, V), 1)
    onehot = jnp.where(ids == col, 1.0, 0.0).astype(jnp.bfloat16)
    x = jnp.dot(onehot, emb_ref[...], preferred_element_type=jnp.float32)
    # eval-mode dropout on the embedding == identity.
    x_b = x.astype(jnp.bfloat16)                                 # (SB, E) bf16

    # ---- layer-0 input projection hoisted for ALL timesteps (M = S*B) ----
    gx_scr[...] = (jnp.dot(x_b, w_refs[0][...],
                           preferred_element_type=jnp.float32) + w_refs[2][...])

    def cell_update(gates, c_prev):
        # gate order (i, f, o, g): one contiguous sigmoid slab, one tanh slab.
        sig = jax.nn.sigmoid(gates[:, :3 * H])
        i = sig[:, 0:H]
        f = sig[:, H:2 * H]
        o = sig[:, 2 * H:3 * H]
        g = jnp.tanh(gates[:, 3 * H:])
        c_new = f * c_prev + i * g
        h_new = o * jnp.tanh(c_new)
        return h_new, c_new

    h = [jnp.zeros((B, H), jnp.float32) for _ in range(num_layers)]
    c = [jnp.zeros((B, H), jnp.float32) for _ in range(num_layers)]
    hb = [jnp.zeros((B, H), jnp.bfloat16) for _ in range(num_layers)]  # bf16 copy of h

    # ---- wavefront over (layer, timestep): layer l handles step k - l at wavefront
    #      step k.  Fully unrolled (S and L are small and static); every active layer
    #      in a wavefront step reads only the snapshot from step k-1, so the chains
    #      interleave. ----
    for k in range(S + num_layers - 1):
        hb_prev = list(hb)                       # hidden states after wavefront k-1
        for l in range(num_layers):
            t = k - l
            if t < 0 or t >= S:
                continue
            w_ih_l = w_refs[3 * l + 0]
            w_hh_l = w_refs[3 * l + 1]
            b_l = w_refs[3 * l + 2]
            if l == 0:
                gates = gx_scr[t * B:(t + 1) * B, :]             # static, 8-row slab
            else:
                # per-step input projection from the previous layer's step-t output
                # (eval-mode inter-layer dropout == identity).
                gates = (jnp.dot(hb_prev[l - 1], w_ih_l[...],
                                 preferred_element_type=jnp.float32) + b_l[...])
            gates = gates + jnp.dot(hb_prev[l], w_hh_l[...],
                                    preferred_element_type=jnp.float32)
            h[l], c[l] = cell_update(gates, c[l])
            hb[l] = h[l].astype(jnp.bfloat16)

    for l in range(num_layers):
        h_out_ref[l, :, :] = h[l]
        c_out_ref[l, :, :] = c[l]


# ----------------------------- Pallas wrapper --------------------------------

def _vmem():
    return pl.BlockSpec(memory_space=pltpu.MemorySpace.VMEM)


def encoder_forward(kparams, x):
    """x: (B, S) int32 token ids -> (hidden, cell), each (num_layers, B, H) f32."""
    B, S = x.shape
    num_layers = len(kparams["w_ih"])
    H = kparams["w_hh"][0].shape[0]

    # Tiny layout op: time-major flattened ids (row t*B + b), one lane column.
    ids_tm = x.T.reshape(S * B, 1).astype(jnp.int32)

    weight_args = []
    for l in range(num_layers):
        weight_args += [kparams["w_ih"][l], kparams["w_hh"][l], kparams["b"][l]]

    kernel = functools.partial(encoder_kernel, seq_len=S, batch=B,
                               num_layers=num_layers)
    n_in = 2 + 3 * num_layers

    hidden, cell = pl.pallas_call(
        kernel,
        out_shape=(jax.ShapeDtypeStruct((num_layers, B, H), jnp.float32),
                   jax.ShapeDtypeStruct((num_layers, B, H), jnp.float32)),
        in_specs=[_vmem() for _ in range(n_in)],
        out_specs=(_vmem(), _vmem()),
        scratch_shapes=[pltpu.VMEM((S * B, 4 * H), jnp.float32)],
        compiler_params=pltpu.CompilerParams(vmem_limit_bytes=32 * 1024 * 1024),
    )(ids_tm, kparams["embedding"], *weight_args)
    return hidden, cell


encoder_forward = jax.jit(encoder_forward)


# -------------------- PyTorch-layout params -> kernel params ------------------

def _ifgo_to_ifog(w, H):
    """Permute the 4H gate axis (last axis) from PyTorch (i,f,g,o) to (i,f,o,g)."""
    i = w[..., 0 * H:1 * H]
    f = w[..., 1 * H:2 * H]
    g = w[..., 2 * H:3 * H]
    o = w[..., 3 * H:4 * H]
    return jnp.concatenate([i, f, o, g], axis=-1)


def prepare_kernel_params(params):
    """PyTorch-layout params -> transposed / gate-permuted / bf16 kernel params."""
    H = params["w_hh"][0].shape[-1]
    V, E = params["embedding"].shape
    V_pad = ((V + 127) // 128) * 128
    emb = params["embedding"].astype(jnp.bfloat16)
    if V_pad != V:
        emb = jnp.pad(emb, ((0, V_pad - V), (0, 0)))

    w_ih, w_hh, b = [], [], []
    for l in range(len(params["w_ih"])):
        w_ih.append(_ifgo_to_ifog(params["w_ih"][l].T, H).astype(jnp.bfloat16))
        w_hh.append(_ifgo_to_ifog(params["w_hh"][l].T, H).astype(jnp.bfloat16))
        bias = params["b_ih"][l] + params["b_hh"][l]
        b.append(_ifgo_to_ifog(bias, H).reshape(1, 4 * H).astype(jnp.float32))
    return {"embedding": emb, "w_ih": w_ih, "w_hh": w_hh, "b": b}


# ------------------------------- Param init ----------------------------------

def init_params(key, vocab, emb_dim, hidden_dim, num_layers):
    """PyTorch-layout parameters: weight_* are (4H, in), biases (4H,), order (i,f,g,o)."""
    scale = 0.1
    ks = jax.random.split(key, 1 + 4 * num_layers)

    def rnd(k, shape):
        return scale * jax.random.normal(k, shape, dtype=jnp.float32)

    params = {"embedding": rnd(ks[0], (vocab, emb_dim)),
              "w_ih": [], "w_hh": [], "b_ih": [], "b_hh": []}
    for l in range(num_layers):
        din = emb_dim if l == 0 else hidden_dim
        base = 1 + 4 * l
        params["w_ih"].append(rnd(ks[base + 0], (4 * hidden_dim, din)))
        params["w_hh"].append(rnd(ks[base + 1], (4 * hidden_dim, hidden_dim)))
        params["b_ih"].append(rnd(ks[base + 2], (4 * hidden_dim,)))
        params["b_hh"].append(rnd(ks[base + 3], (4 * hidden_dim,)))
    return params


# ---------------------------- pure-JAX reference ------------------------------

def encoder_reference(params, x):
    """Ground-truth math in PyTorch layout / gate order, mirroring the bf16 casts."""
    emb = params["embedding"].astype(jnp.bfloat16).astype(jnp.float32)
    B, S = x.shape
    num_layers = len(params["w_ih"])
    H = params["w_hh"][0].shape[-1]

    layer_in = emb[x]                                            # (B, S, E) f32
    hs, cs = [], []
    for l in range(num_layers):
        w_ih = params["w_ih"][l].T.astype(jnp.bfloat16).astype(jnp.float32)
        w_hh = params["w_hh"][l].T.astype(jnp.bfloat16).astype(jnp.float32)
        bias = params["b_ih"][l] + params["b_hh"][l]
        h = jnp.zeros((B, H), jnp.float32)
        c = jnp.zeros((B, H), jnp.float32)
        ys = []
        for t in range(S):
            x_t = layer_in[:, t, :].astype(jnp.bfloat16).astype(jnp.float32)
            h_b = h.astype(jnp.bfloat16).astype(jnp.float32)
            gates = x_t @ w_ih + h_b @ w_hh + bias
            i = jax.nn.sigmoid(gates[:, 0 * H:1 * H])
            f = jax.nn.sigmoid(gates[:, 1 * H:2 * H])
            g = jnp.tanh(gates[:, 2 * H:3 * H])
            o = jax.nn.sigmoid(gates[:, 3 * H:4 * H])
            c = f * c + i * g
            h = o * jnp.tanh(c)
            ys.append(h)
        hs.append(h)
        cs.append(c)
        layer_in = jnp.stack(ys, axis=1)
    return jnp.stack(hs, 0), jnp.stack(cs, 0)


# ---------------------------------- main --------------------------------------

if __name__ == "__main__":
    B, S = 8, 12
    VOCAB, EMB, HID, NUM_LAYERS = 96, 128, 128, 2

    key = jax.random.PRNGKey(0)
    k_params, k_x = jax.random.split(key, 2)

    params = init_params(k_params, VOCAB, EMB, HID, NUM_LAYERS)
    kparams = prepare_kernel_params(params)
    x = jax.random.randint(k_x, (B, S), 0, VOCAB, dtype=jnp.int32)

    hidden, cell = encoder_forward(kparams, x)
    hidden, cell = jax.block_until_ready((hidden, cell))

    assert hidden.shape == (NUM_LAYERS, B, HID)
    assert cell.shape == (NUM_LAYERS, B, HID)
    assert bool(jnp.all(jnp.isfinite(hidden))) and bool(jnp.all(jnp.isfinite(cell)))

    h_ref, c_ref = encoder_reference(params, x)
    err_h = float(jnp.max(jnp.abs(hidden - h_ref)))
    err_c = float(jnp.max(jnp.abs(cell - c_ref)))
    assert err_h < 1e-2 and err_c < 1e-2, (err_h, err_c)

    print("KERNEL_OK")
</pallas_src>

<mosaic_0001>
module attributes {stable_mosaic.version = 11 : i64} {
  func.func @encoder_kernel(%arg0: memref<96x1xi32, #tpu.memory_space<vmem>>, %arg1: memref<128x128xbf16, #tpu.memory_space<vmem>>, %arg2: memref<128x512xbf16, #tpu.memory_space<vmem>>, %arg3: memref<128x512xbf16, #tpu.memory_space<vmem>>, %arg4: memref<1x512xf32, #tpu.memory_space<vmem>>, %arg5: memref<128x512xbf16, #tpu.memory_space<vmem>>, %arg6: memref<128x512xbf16, #tpu.memory_space<vmem>>, %arg7: memref<1x512xf32, #tpu.memory_space<vmem>>, %arg8: memref<2x8x128xf32, #tpu.memory_space<vmem>>, %arg9: memref<2x8x128xf32, #tpu.memory_space<vmem>>, %arg10: memref<96x512xf32, #tpu.memory_space<vmem>>) attributes {dimension_semantics = [], scalar_prefetch = 0 : i64, scratch_operands = 1 : i64, tpu.core_type = #tpu.core_type<tc>} {
    %c0 = arith.constant 0 : index
    %c0_0 = arith.constant 0 : index
    %0 = vector.load %arg0[%c0, %c0_0] : memref<96x1xi32, #tpu.memory_space<vmem>>, vector<96x1xi32>
    %1 = tpu.iota {dimensions = array<i32: 1>} : vector<96x128xi32>
    %2 = vector.broadcast %0 : vector<96x1xi32> to vector<96x128xi32>
    %3 = arith.cmpi eq, %2, %1 : vector<96x128xi32>
    %cst = arith.constant 1.000000e+00 : f32
    %cst_1 = arith.constant 0.000000e+00 : f32
    %4 = vector.broadcast %cst : f32 to vector<96x128xf32>
    %5 = vector.broadcast %cst_1 : f32 to vector<96x128xf32>
    %6 = arith.select %3, %4, %5 : vector<96x128xi1>, vector<96x128xf32>
    %7 = arith.truncf %6 : vector<96x128xf32> to vector<96x128xbf16>
    %c0_2 = arith.constant 0 : index
    %c0_3 = arith.constant 0 : index
    %8 = vector.load %arg1[%c0_2, %c0_3] : memref<128x128xbf16, #tpu.memory_space<vmem>>, vector<128x128xbf16>
    %cst_4 = arith.constant dense<0.000000e+00> : vector<96x128xf32>
    %9 = tpu.matmul %7, %8, %cst_4 {dimension_numbers = #tpu.dot_dimension_numbers<[1], [0], [0], [1], [0, 0, 1, 1], [], []>} : vector<96x128xbf16>, vector<128x128xbf16>, vector<96x128xf32> -> vector<96x128xf32>
    %10 = arith.truncf %9 : vector<96x128xf32> to vector<96x128xbf16>
    %c0_5 = arith.constant 0 : index
    %c0_6 = arith.constant 0 : index
    %11 = vector.load %arg2[%c0_5, %c0_6] : memref<128x512xbf16, #tpu.memory_space<vmem>>, vector<128x512xbf16>
    %cst_7 = arith.constant dense<0.000000e+00> : vector<96x512xf32>
    %12 = tpu.matmul %10, %11, %cst_7 {dimension_numbers = #tpu.dot_dimension_numbers<[1], [0], [0], [1], [0, 0, 1, 1], [], []>} : vector<96x128xbf16>, vector<128x512xbf16>, vector<96x512xf32> -> vector<96x512xf32>
    %c0_8 = arith.constant 0 : index
    %c0_9 = arith.constant 0 : index
    %13 = vector.load %arg4[%c0_8, %c0_9] : memref<1x512xf32, #tpu.memory_space<vmem>>, vector<1x512xf32>
    %14 = vector.broadcast %13 : vector<1x512xf32> to vector<96x512xf32>
    %15 = arith.addf %12, %14 : vector<96x512xf32>
    %c0_10 = arith.constant 0 : index
    %c0_11 = arith.constant 0 : index
    %16 = vector.load %arg10[%c0_10, %c0_11] : memref<96x512xf32, #tpu.memory_space<vmem>>, vector<96x512xf32>
    tpu.vector_store %arg10[%c0_10, %c0_11], %15 {strides = array<i32>} : memref<96x512xf32, #tpu.memory_space<vmem>>, vector<96x512xf32>,
    %cst_12 = arith.constant 0.000000e+00 : f32
    %17 = vector.broadcast %cst_12 : f32 to vector<8x128xf32>
    %cst_13 = arith.constant 0.000000e+00 : f32
    %18 = vector.broadcast %cst_13 : f32 to vector<8x128xf32>
    %cst_14 = arith.constant 0.000000e+00 : bf16
    %19 = vector.broadcast %cst_14 : bf16 to vector<8x128xbf16>
    %cst_15 = arith.constant 0.000000e+00 : bf16
    %20 = vector.broadcast %cst_15 : bf16 to vector<8x128xbf16>
    %c0_16 = arith.constant 0 : index
    %c0_17 = arith.constant 0 : index
    %21 = vector.load %arg10[%c0_16, %c0_17] : memref<96x512xf32, #tpu.memory_space<vmem>>, vector<8x512xf32>
    %c0_18 = arith.constant 0 : index
    %c0_19 = arith.constant 0 : index
    %22 = vector.load %arg3[%c0_18, %c0_19] : memref<128x512xbf16, #tpu.memory_space<vmem>>, vector<128x512xbf16>
    %cst_20 = arith.constant dense<0.000000e+00> : vector<8x512xf32>
    %23 = tpu.matmul %19, %22, %cst_20 {dimension_numbers = #tpu.dot_dimension_numbers<[1], [0], [0], [1], [0, 0, 1, 1], [], []>} : vector<8x128xbf16>, vector<128x512xbf16>, vector<8x512xf32> -> vector<8x512xf32>
    %24 = arith.addf %21, %23 : vector<8x512xf32>
    %25 = vector.extract_strided_slice %24 {offsets = [0, 0], sizes = [8, 384], strides = [1, 1]} : vector<8x512xf32> to vector<8x384xf32>
    %26 = arith.negf %25 : vector<8x384xf32>
    %27 = math.exp %26 : vector<8x384xf32>
    %cst_21 = arith.constant 1.000000e+00 : f32
    %28 = vector.broadcast %cst_21 : f32 to vector<8x384xf32>
    %29 = arith.addf %28, %27 : vector<8x384xf32>
    %30 = arith.divf %28, %29 : vector<8x384xf32>
    %31 = vector.extract_strided_slice %30 {offsets = [0, 0], sizes = [8, 128], strides = [1, 1]} : vector<8x384xf32> to vector<8x128xf32>
    %32 = vector.extract_strided_slice %30 {offsets = [0, 128], sizes = [8, 128], strides = [1, 1]} : vector<8x384xf32> to vector<8x128xf32>
    %33 = vector.extract_strided_slice %30 {offsets = [0, 256], sizes = [8, 128], strides = [1, 1]} : vector<8x384xf32> to vector<8x128xf32>
    %34 = vector.extract_strided_slice %24 {offsets = [0, 384], sizes = [8, 128], strides = [1, 1]} : vector<8x512xf32> to vector<8x128xf32>
    %35 = math.tanh %34 : vector<8x128xf32>
    %36 = arith.mulf %32, %17 : vector<8x128xf32>
    %37 = arith.mulf %31, %35 : vector<8x128xf32>
    %38 = arith.addf %36, %37 : vector<8x128xf32>
    %39 = math.tanh %38 : vector<8x128xf32>
    %40 = arith.mulf %33, %39 : vector<8x128xf32>
    %41 = arith.truncf %40 : vector<8x128xf32> to vector<8x128xbf16>
    %c8 = arith.constant 8 : index
    %c0_22 = arith.constant 0 : index
    %42 = vector.load %arg10[%c8, %c0_22] : memref<96x512xf32, #tpu.memory_space<vmem>>, vector<8x512xf32>
    %c0_23 = arith.constant 0 : index
    %c0_24 = arith.constant 0 : index
    %43 = vector.load %arg3[%c0_23, %c0_24] : memref<128x512xbf16, #tpu.memory_space<vmem>>, vector<128x512xbf16>
    %cst_25 = arith.constant dense<0.000000e+00> : vector<8x512xf32>
    %44 = tpu.matmul %41, %43, %cst_25 {dimension_numbers = #tpu.dot_dimension_numbers<[1], [0], [0], [1], [0, 0, 1, 1], [], []>} : vector<8x128xbf16>, vector<128x512xbf16>, vector<8x512xf32> -> vector<8x512xf32>
    %45 = arith.addf %42, %44 : vector<8x512xf32>
    %46 = vector.extract_strided_slice %45 {offsets = [0, 0], sizes = [8, 384], strides = [1, 1]} : vector<8x512xf32> to vector<8x384xf32>
    %47 = arith.negf %46 : vector<8x384xf32>
    %48 = math.exp %47 : vector<8x384xf32>
    %cst_26 = arith.constant 1.000000e+00 : f32
    %49 = vector.broadcast %cst_26 : f32 to vector<8x384xf32>
    %50 = arith.addf %49, %48 : vector<8x384xf32>
    %51 = arith.divf %49, %50 : vector<8x384xf32>
    %52 = vector.extract_strided_slice %51 {offsets = [0, 0], sizes = [8, 128], strides = [1, 1]} : vector<8x384xf32> to vector<8x128xf32>
    %53 = vector.extract_strided_slice %51 {offsets = [0, 128], sizes = [8, 128], strides = [1, 1]} : vector<8x384xf32> to vector<8x128xf32>
    %54 = vector.extract_strided_slice %51 {offsets = [0, 256], sizes = [8, 128], strides = [1, 1]} : vector<8x384xf32> to vector<8x128xf32>
    %55 = vector.extract_strided_slice %45 {offsets = [0, 384], sizes = [8, 128], strides = [1, 1]} : vector<8x512xf32> to vector<8x128xf32>
    %56 = math.tanh %55 : vector<8x128xf32>
    %57 = arith.mulf %53, %38 : vector<8x128xf32>
    %58 = arith.mulf %52, %56 : vector<8x128xf32>
    %59 = arith.addf %57, %58 : vector<8x128xf32>
    %60 = math.tanh %59 : vector<8x128xf32>
    %61 = arith.mulf %54, %60 : vector<8x128xf32>
    %62 = arith.truncf %61 : vector<8x128xf32> to vector<8x128xbf16>
    %c0_27 = arith.constant 0 : index
    %c0_28 = arith.constant 0 : index
    %63 = vector.load %arg5[%c0_27, %c0_28] : memref<128x512xbf16, #tpu.memory_space<vmem>>, vector<128x512xbf16>
    %cst_29 = arith.constant dense<0.000000e+00> : vector<8x512xf32>
    %64 = tpu.matmul %41, %63, %cst_29 {dimension_numbers = #tpu.dot_dimension_numbers<[1], [0], [0], [1], [0, 0, 1, 1], [], []>} : vector<8x128xbf16>, vector<128x512xbf16>, vector<8x512xf32> -> vector<8x512xf32>
    %c0_30 = arith.constant 0 : index
    %c0_31 = arith.constant 0 : index
    %65 = vector.load %arg7[%c0_30, %c0_31] : memref<1x512xf32, #tpu.memory_space<vmem>>, vector<1x512xf32>
    %66 = vector.broadcast %65 : vector<1x512xf32> to vector<8x512xf32>
    %67 = arith.addf %64, %66 : vector<8x512xf32>
    %c0_32 = arith.constant 0 : index
    %c0_33 = arith.constant 0 : index
    %68 = vector.load %arg6[%c0_32, %c0_33] : memref<128x512xbf16, #tpu.memory_space<vmem>>, vector<128x512xbf16>
    %cst_34 = arith.constant dense<0.000000e+00> : vector<8x512xf32>
    %69 = tpu.matmul %20, %68, %cst_34 {dimension_numbers = #tpu.dot_dimension_numbers<[1], [0], [0], [1], [0, 0, 1, 1], [], []>} : vector<8x128xbf16>, vector<128x512xbf16>, vector<8x512xf32> -> vector<8x512xf32>
    %70 = arith.addf %67, %69 : vector<8x512xf32>
    %71 = vector.extract_strided_slice %70 {offsets = [0, 0], sizes = [8, 384], strides = [1, 1]} : vector<8x512xf32> to vector<8x384xf32>
    %72 = arith.negf %71 : vector<8x384xf32>
    %73 = math.exp %72 : vector<8x384xf32>
    %cst_35 = arith.constant 1.000000e+00 : f32
    %74 = vector.broadcast %cst_35 : f32 to vector<8x384xf32>
    %75 = arith.addf %74, %73 : vector<8x384xf32>
    %76 = arith.divf %74, %75 : vector<8x384xf32>
    %77 = vector.extract_strided_slice %76 {offsets = [0, 0], sizes = [8, 128], strides = [1, 1]} : vector<8x384xf32> to vector<8x128xf32>
    %78 = vector.extract_strided_slice %76 {offsets = [0, 128], sizes = [8, 128], strides = [1, 1]} : vector<8x384xf32> to vector<8x128xf32>
    %79 = vector.extract_strided_slice %76 {offsets = [0, 256], sizes = [8, 128], strides = [1, 1]} : vector<8x384xf32> to vector<8x128xf32>
    %80 = vector.extract_strided_slice %70 {offsets = [0, 384], sizes = [8, 128], strides = [1, 1]} : vector<8x512xf32> to vector<8x128xf32>
    %81 = math.tanh %80 : vector<8x128xf32>
    %82 = arith.mulf %78, %18 : vector<8x128xf32>
    %83 = arith.mulf %77, %81 : vector<8x128xf32>
    %84 = arith.addf %82, %83 : vector<8x128xf32>
    %85 = math.tanh %84 : vector<8x128xf32>
    %86 = arith.mulf %79, %85 : vector<8x128xf32>
    %87 = arith.truncf %86 : vector<8x128xf32> to vector<8x128xbf16>
    %c16 = arith.constant 16 : index
    %c0_36 = arith.constant 0 : index
    %88 = vector.load %arg10[%c16, %c0_36] : memref<96x512xf32, #tpu.memory_space<vmem>>, vector<8x512xf32>
    %c0_37 = arith.constant 0 : index
    %c0_38 = arith.constant 0 : index
    %89 = vector.load %arg3[%c0_37, %c0_38] : memref<128x512xbf16, #tpu.memory_space<vmem>>, vector<128x512xbf16>
    %cst_39 = arith.constant dense<0.000000e+00> : vector<8x512xf32>
    %90 = tpu.matmul %62, %89, %cst_39 {dimension_numbers = #tpu.dot_dimension_numbers<[1], [0], [0], [1], [0, 0, 1, 1], [], []>} : vector<8x128xbf16>, vector<128x512xbf16>, vector<8x512xf32> -> vector<8x512xf32>
    %91 = arith.addf %88, %90 : vector<8x512xf32>
    %92 = vector.extract_strided_slice %91 {offsets = [0, 0], sizes = [8, 384], strides = [1, 1]} : vector<8x512xf32> to vector<8x384xf32>
    %93 = arith.negf %92 : vector<8x384xf32>
    %94 = math.exp %93 : vector<8x384xf32>
    %cst_40 = arith.constant 1.000000e+00 : f32
    %95 = vector.broadcast %cst_40 : f32 to vector<8x384xf32>
    %96 = arith.addf %95, %94 : vector<8x384xf32>
    %97 = arith.divf %95, %96 : vector<8x384xf32>
    %98 = vector.extract_strided_slice %97 {offsets = [0, 0], sizes = [8, 128], strides = [1, 1]} : vector<8x384xf32> to vector<8x128xf32>
    %99 = vector.extract_strided_slice %97 {offsets = [0, 128], sizes = [8, 128], strides = [1, 1]} : vector<8x384xf32> to vector<8x128xf32>
    %100 = vector.extract_strided_slice %97 {offsets = [0, 256], sizes = [8, 128], strides = [1, 1]} : vector<8x384xf32> to vector<8x128xf32>
    %101 = vector.extract_strided_slice %91 {offsets = [0, 384], sizes = [8, 128], strides = [1, 1]} : vector<8x512xf32> to vector<8x128xf32>
    %102 = math.tanh %101 : vector<8x128xf32>
    %103 = arith.mulf %99, %59 : vector<8x128xf32>
    %104 = arith.mulf %98, %102 : vector<8x128xf32>
    %105 = arith.addf %103, %104 : vector<8x128xf32>
    %106 = math.tanh %105 : vector<8x128xf32>
    %107 = arith.mulf %100, %106 : vector<8x128xf32>
    %108 = arith.truncf %107 : vector<8x128xf32> to vector<8x128xbf16>
    %c0_41 = arith.constant 0 : index
    %c0_42 = arith.constant 0 : index
    %109 = vector.load %arg5[%c0_41, %c0_42] : memref<128x512xbf16, #tpu.memory_space<vmem>>, vector<128x512xbf16>
    %cst_43 = arith.constant dense<0.000000e+00> : vector<8x512xf32>
    %110 = tpu.matmul %62, %109, %cst_43 {dimension_numbers = #tpu.dot_dimension_numbers<[1], [0], [0], [1], [0, 0, 1, 1], [], []>} : vector<8x128xbf16>, vector<128x512xbf16>, vector<8x512xf32> -> vector<8x512xf32>
    %c0_44 = arith.constant 0 : index
    %c0_45 = arith.constant 0 : index
    %111 = vector.load %arg7[%c0_44, %c0_45] : memref<1x512xf32, #tpu.memory_space<vmem>>, vector<1x512xf32>
    %112 = vector.broadcast %111 : vector<1x512xf32> to vector<8x512xf32>
    %113 = arith.addf %110, %112 : vector<8x512xf32>
    %c0_46 = arith.constant 0 : index
    %c0_47 = arith.constant 0 : index
    %114 = vector.load %arg6[%c0_46, %c0_47] : memref<128x512xbf16, #tpu.memory_space<vmem>>, vector<128x512xbf16>
    %cst_48 = arith.constant dense<0.000000e+00> : vector<8x512xf32>
    %115 = tpu.matmul %87, %114, %cst_48 {dimension_numbers = #tpu.dot_dimension_numbers<[1], [0], [0], [1], [0, 0, 1, 1], [], []>} : vector<8x128xbf16>, vector<128x512xbf16>, vector<8x512xf32> -> vector<8x512xf32>
    %116 = arith.addf %113, %115 : vector<8x512xf32>
    %117 = vector.extract_strided_slice %116 {offsets = [0, 0], sizes = [8, 384], strides = [1, 1]} : vector<8x512xf32> to vector<8x384xf32>
    %118 = arith.negf %117 : vector<8x384xf32>
    %119 = math.exp %118 : vector<8x384xf32>
    %cst_49 = arith.constant 1.000000e+00 : f32
    %120 = vector.broadcast %cst_49 : f32 to vector<8x384xf32>
    %121 = arith.addf %120, %119 : vector<8x384xf32>
    %122 = arith.divf %120, %121 : vector<8x384xf32>
    %123 = vector.extract_strided_slice %122 {offsets = [0, 0], sizes = [8, 128], strides = [1, 1]} : vector<8x384xf32> to vector<8x128xf32>
    %124 = vector.extract_strided_slice %122 {offsets = [0, 128], sizes = [8, 128], strides = [1, 1]} : vector<8x384xf32> to vector<8x128xf32>
    %125 = vector.extract_strided_slice %122 {offsets = [0, 256], sizes = [8, 128], strides = [1, 1]} : vector<8x384xf32> to vector<8x128xf32>
    %126 = vector.extract_strided_slice %116 {offsets = [0, 384], sizes = [8, 128], strides = [1, 1]} : vector<8x512xf32> to vector<8x128xf32>
    %127 = math.tanh %126 : vector<8x128xf32>
    %128 = arith.mulf %124, %84 : vector<8x128xf32>
    %129 = arith.mulf %123, %127 : vector<8x128xf32>
    %130 = arith.addf %128, %129 : vector<8x128xf32>
    %131 = math.tanh %130 : vector<8x128xf32>
    %132 = arith.mulf %125, %131 : vector<8x128xf32>
    %133 = arith.truncf %132 : vector<8x128xf32> to vector<8x128xbf16>
    %c24 = arith.constant 24 : index
    %c0_50 = arith.constant 0 : index
    %134 = vector.load %arg10[%c24, %c0_50] : memref<96x512xf32, #tpu.memory_space<vmem>>, vector<8x512xf32>
    %c0_51 = arith.constant 0 : index
    %c0_52 = arith.constant 0 : index
    %135 = vector.load %arg3[%c0_51, %c0_52] : memref<128x512xbf16, #tpu.memory_space<vmem>>, vector<128x512xbf16>
    %cst_53 = arith.constant dense<0.000000e+00> : vector<8x512xf32>
    %136 = tpu.matmul %108, %135, %cst_53 {dimension_numbers = #tpu.dot_dimension_numbers<[1], [0], [0], [1], [0, 0, 1, 1], [], []>} : vector<8x128xbf16>, vector<128x512xbf16>, vector<8x512xf32> -> vector<8x512xf32>
    %137 = arith.addf %134, %136 : vector<8x512xf32>
    %138 = vector.extract_strided_slice %137 {offsets = [0, 0], sizes = [8, 384], strides = [1, 1]} : vector<8x512xf32> to vector<8x384xf32>
    %139 = arith.negf %138 : vector<8x384xf32>
    %140 = math.exp %139 : vector<8x384xf32>
    %cst_54 = arith.constant 1.000000e+00 : f32
    %141 = vector.broadcast %cst_54 : f32 to vector<8x384xf32>
    %142 = arith.addf %141, %140 : vector<8x384xf32>
    %143 = arith.divf %141, %142 : vector<8x384xf32>
    %144 = vector.extract_strided_slice %143 {offsets = [0, 0], sizes = [8, 128], strides = [1, 1]} : vector<8x384xf32> to vector<8x128xf32>
    %145 = vector.extract_strided_slice %143 {offsets = [0, 128], sizes = [8, 128], strides = [1, 1]} : vector<8x384xf32> to vector<8x128xf32>
    %146 = vector.extract_strided_slice %143 {offsets = [0, 256], sizes = [8, 128], strides = [1, 1]} : vector<8x384xf32> to vector<8x128xf32>
    %147 = vector.extract_strided_slice %137 {offsets = [0, 384], sizes = [8, 128], strides = [1, 1]} : vector<8x512xf32> to vector<8x128xf32>
    %148 = math.tanh %147 : vector<8x128xf32>
    %149 = arith.mulf %145, %105 : vector<8x128xf32>
    %150 = arith.mulf %144, %148 : vector<8x128xf32>
    %151 = arith.addf %149, %150 : vector<8x128xf32>
    %152 = math.tanh %151 : vector<8x128xf32>
    %153 = arith.mulf %146, %152 : vector<8x128xf32>
    %154 = arith.truncf %153 : vector<8x128xf32> to vector<8x128xbf16>
    %c0_55 = arith.constant 0 : index
    %c0_56 = arith.constant 0 : index
    %155 = vector.load %arg5[%c0_55, %c0_56] : memref<128x512xbf16, #tpu.memory_space<vmem>>, vector<128x512xbf16>
    %cst_57 = arith.constant dense<0.000000e+00> : vector<8x512xf32>
    %156 = tpu.matmul %108, %155, %cst_57 {dimension_numbers = #tpu.dot_dimension_numbers<[1], [0], [0], [1], [0, 0, 1, 1], [], []>} : vector<8x128xbf16>, vector<128x512xbf16>, vector<8x512xf32> -> vector<8x512xf32>
    %c0_58 = arith.constant 0 : index
    %c0_59 = arith.constant 0 : index
    %157 = vector.load %arg7[%c0_58, %c0_59] : memref<1x512xf32, #tpu.memory_space<vmem>>, vector<1x512xf32>
    %158 = vector.broadcast %157 : vector<1x512xf32> to vector<8x512xf32>
    %159 = arith.addf %156, %158 : vector<8x512xf32>
    %c0_60 = arith.constant 0 : index
    %c0_61 = arith.constant 0 : index
    %160 = vector.load %arg6[%c0_60, %c0_61] : memref<128x512xbf16, #tpu.memory_space<vmem>>, vector<128x512xbf16>
    %cst_62 = arith.constant dense<0.000000e+00> : vector<8x512xf32>
    %161 = tpu.matmul %133, %160, %cst_62 {dimension_numbers = #tpu.dot_dimension_numbers<[1], [0], [0], [1], [0, 0, 1, 1], [], []>} : vector<8x128xbf16>, vector<128x512xbf16>, vector<8x512xf32> -> vector<8x512xf32>
    %162 = arith.addf %159, %161 : vector<8x512xf32>
    %163 = vector.extract_strided_slice %162 {offsets = [0, 0], sizes = [8, 384], strides = [1, 1]} : vector<8x512xf32> to vector<8x384xf32>
    %164 = arith.negf %163 : vector<8x384xf32>
    %165 = math.exp %164 : vector<8x384xf32>
    %cst_63 = arith.constant 1.000000e+00 : f32
    %166 = vector.broadcast %cst_63 : f32 to vector<8x384xf32>
    %167 = arith.addf %166, %165 : vector<8x384xf32>
    %168 = arith.divf %166, %167 : vector<8x384xf32>
    %169 = vector.extract_strided_slice %168 {offsets = [0, 0], sizes = [8, 128], strides = [1, 1]} : vector<8x384xf32> to vector<8x128xf32>
    %170 = vector.extract_strided_slice %168 {offsets = [0, 128], sizes = [8, 128], strides = [1, 1]} : vector<8x384xf32> to vector<8x128xf32>
    %171 = vector.extract_strided_slice %168 {offsets = [0, 256], sizes = [8, 128], strides = [1, 1]} : vector<8x384xf32> to vector<8x128xf32>
    %172 = vector.extract_strided_slice %162 {offsets = [0, 384], sizes = [8, 128], strides = [1, 1]} : vector<8x512xf32> to vector<8x128xf32>
    %173 = math.tanh %172 : vector<8x128xf32>
    %174 = arith.mulf %170, %130 : vector<8x128xf32>
    %175 = arith.mulf %169, %173 : vector<8x128xf32>
    %176 = arith.addf %174, %175 : vector<8x128xf32>
    %177 = math.tanh %176 : vector<8x128xf32>
    %178 = arith.mulf %171, %177 : vector<8x128xf32>
    %179 = arith.truncf %178 : vector<8x128xf32> to vector<8x128xbf16>
    %c32 = arith.constant 32 : index
    %c0_64 = arith.constant 0 : index
    %180 = vector.load %arg10[%c32, %c0_64] : memref<96x512xf32, #tpu.memory_space<vmem>>, vector<8x512xf32>
    %c0_65 = arith.constant 0 : index
    %c0_66 = arith.constant 0 : index
    %181 = vector.load %arg3[%c0_65, %c0_66] : memref<128x512xbf16, #tpu.memory_space<vmem>>, vector<128x512xbf16>
    %cst_67 = arith.constant dense<0.000000e+00> : vector<8x512xf32>
    %182 = tpu.matmul %154, %181, %cst_67 {dimension_numbers = #tpu.dot_dimension_numbers<[1], [0], [0], [1], [0, 0, 1, 1], [], []>} : vector<8x128xbf16>, vector<128x512xbf16>, vector<8x512xf32> -> vector<8x512xf32>
    %183 = arith.addf %180, %182 : vector<8x512xf32>
    %184 = vector.extract_strided_slice %183 {offsets = [0, 0], sizes = [8, 384], strides = [1, 1]} : vector<8x512xf32> to vector<8x384xf32>
    %185 = arith.negf %184 : vector<8x384xf32>
    %186 = math.exp %185 : vector<8x384xf32>
    %cst_68 = arith.constant 1.000000e+00 : f32
    %187 = vector.broadcast %cst_68 : f32 to vector<8x384xf32>
    %188 = arith.addf %187, %186 : vector<8x384xf32>
    %189 = arith.divf %187, %188 : vector<8x384xf32>
    %190 = vector.extract_strided_slice %189 {offsets = [0, 0], sizes = [8, 128], strides = [1, 1]} : vector<8x384xf32> to vector<8x128xf32>
    %191 = vector.extract_strided_slice %189 {offsets = [0, 128], sizes = [8, 128], strides = [1, 1]} : vector<8x384xf32> to vector<8x128xf32>
    %192 = vector.extract_strided_slice %189 {offsets = [0, 256], sizes = [8, 128], strides = [1, 1]} : vector<8x384xf32> to vector<8x128xf32>
    %193 = vector.extract_strided_slice %183 {offsets = [0, 384], sizes = [8, 128], strides = [1, 1]} : vector<8x512xf32> to vector<8x128xf32>
    %194 = math.tanh %193 : vector<8x128xf32>
    %195 = arith.mulf %191, %151 : vector<8x128xf32>
    %196 = arith.mulf %190, %194 : vector<8x128xf32>
    %197 = arith.addf %195, %196 : vector<8x128xf32>
    %198 = math.tanh %197 : vector<8x128xf32>
    %199 = arith.mulf %192, %198 : vector<8x128xf32>
    %200 = arith.truncf %199 : vector<8x128xf32> to vector<8x128xbf16>
    %c0_69 = arith.constant 0 : index
    %c0_70 = arith.constant 0 : index
    %201 = vector.load %arg5[%c0_69, %c0_70] : memref<128x512xbf16, #tpu.memory_space<vmem>>, vector<128x512xbf16>
    %cst_71 = arith.constant dense<0.000000e+00> : vector<8x512xf32>
    %202 = tpu.matmul %154, %201, %cst_71 {dimension_numbers = #tpu.dot_dimension_numbers<[1], [0], [0], [1], [0, 0, 1, 1], [], []>} : vector<8x128xbf16>, vector<128x512xbf16>, vector<8x512xf32> -> vector<8x512xf32>
    %c0_72 = arith.constant 0 : index
    %c0_73 = arith.constant 0 : index
    %203 = vector.load %arg7[%c0_72, %c0_73] : memref<1x512xf32, #tpu.memory_space<vmem>>, vector<1x512xf32>
    %204 = vector.broadcast %203 : vector<1x512xf32> to vector<8x512xf32>
    %205 = arith.addf %202, %204 : vector<8x512xf32>
    %c0_74 = arith.constant 0 : index
    %c0_75 = arith.constant 0 : index
    %206 = vector.load %arg6[%c0_74, %c0_75] : memref<128x512xbf16, #tpu.memory_space<vmem>>, vector<128x512xbf16>
    %cst_76 = arith.constant dense<0.000000e+00> : vector<8x512xf32>
    %207 = tpu.matmul %179, %206, %cst_76 {dimension_numbers = #tpu.dot_dimension_numbers<[1], [0], [0], [1], [0, 0, 1, 1], [], []>} : vector<8x128xbf16>, vector<128x512xbf16>, vector<8x512xf32> -> vector<8x512xf32>
    %208 = arith.addf %205, %207 : vector<8x512xf32>
    %209 = vector.extract_strided_slice %208 {offsets = [0, 0], sizes = [8, 384], strides = [1, 1]} : vector<8x512xf32> to vector<8x384xf32>
    %210 = arith.negf %209 : vector<8x384xf32>
    %211 = math.exp %210 : vector<8x384xf32>
    %cst_77 = arith.constant 1.000000e+00 : f32
    %212 = vector.broadcast %cst_77 : f32 to vector<8x384xf32>
    %213 = arith.addf %212, %211 : vector<8x384xf32>
    %214 = arith.divf %212, %213 : vector<8x384xf32>
    %215 = vector.extract_strided_slice %214 {offsets = [0, 0], sizes = [8, 128], strides = [1, 1]} : vector<8x384xf32> to vector<8x128xf32>
    %216 = vector.extract_strided_slice %214 {offsets = [0, 128], sizes = [8, 128], strides = [1, 1]} : vector<8x384xf32> to vector<8x128xf32>
    %217 = vector.extract_strided_slice %214 {offsets = [0, 256], sizes = [8, 128], strides = [1, 1]} : vector<8x384xf32> to vector<8x128xf32>
    %218 = vector.extract_strided_slice %208 {offsets = [0, 384], sizes = [8, 128], strides = [1, 1]} : vector<8x512xf32> to vector<8x128xf32>
    %219 = math.tanh %218 : vector<8x128xf32>
    %220 = arith.mulf %216, %176 : vector<8x128xf32>
    %221 = arith.mulf %215, %219 : vector<8x128xf32>
    %222 = arith.addf %220, %221 : vector<8x128xf32>
    %223 = math.tanh %222 : vector<8x128xf32>
    %224 = arith.mulf %217, %223 : vector<8x128xf32>
    %225 = arith.truncf %224 : vector<8x128xf32> to vector<8x128xbf16>
    %c40 = arith.constant 40 : index
    %c0_78 = arith.constant 0 : index
    %226 = vector.load %arg10[%c40, %c0_78] : memref<96x512xf32, #tpu.memory_space<vmem>>, vector<8x512xf32>
    %c0_79 = arith.constant 0 : index
    %c0_80 = arith.constant 0 : index
    %227 = vector.load %arg3[%c0_79, %c0_80] : memref<128x512xbf16, #tpu.memory_space<vmem>>, vector<128x512xbf16>
    %cst_81 = arith.constant dense<0.000000e+00> : vector<8x512xf32>
    %228 = tpu.matmul %200, %227, %cst_81 {dimension_numbers = #tpu.dot_dimension_numbers<[1], [0], [0], [1], [0, 0, 1, 1], [], []>} : vector<8x128xbf16>, vector<128x512xbf16>, vector<8x512xf32> -> vector<8x512xf32>
    %229 = arith.addf %226, %228 : vector<8x512xf32>
    %230 = vector.extract_strided_slice %229 {offsets = [0, 0], sizes = [8, 384], strides = [1, 1]} : vector<8x512xf32> to vector<8x384xf32>
    %231 = arith.negf %230 : vector<8x384xf32>
    %232 = math.exp %231 : vector<8x384xf32>
    %cst_82 = arith.constant 1.000000e+00 : f32
    %233 = vector.broadcast %cst_82 : f32 to vector<8x384xf32>
    %234 = arith.addf %233, %232 : vector<8x384xf32>
    %235 = arith.divf %233, %234 : vector<8x384xf32>
    %236 = vector.extract_strided_slice %235 {offsets = [0, 0], sizes = [8, 128], strides = [1, 1]} : vector<8x384xf32> to vector<8x128xf32>
    %237 = vector.extract_strided_slice %235 {offsets = [0, 128], sizes = [8, 128], strides = [1, 1]} : vector<8x384xf32> to vector<8x128xf32>
    %238 = vector.extract_strided_slice %235 {offsets = [0, 256], sizes = [8, 128], strides = [1, 1]} : vector<8x384xf32> to vector<8x128xf32>
    %239 = vector.extract_strided_slice %229 {offsets = [0, 384], sizes = [8, 128], strides = [1, 1]} : vector<8x512xf32> to vector<8x128xf32>
    %240 = math.tanh %239 : vector<8x128xf32>
    %241 = arith.mulf %237, %197 : vector<8x128xf32>
    %242 = arith.mulf %236, %240 : vector<8x128xf32>
    %243 = arith.addf %241, %242 : vector<8x128xf32>
    %244 = math.tanh %243 : vector<8x128xf32>
    %245 = arith.mulf %238, %244 : vector<8x128xf32>
    %246 = arith.truncf %245 : vector<8x128xf32> to vector<8x128xbf16>
    %c0_83 = arith.constant 0 : index
    %c0_84 = arith.constant 0 : index
    %247 = vector.load %arg5[%c0_83, %c0_84] : memref<128x512xbf16, #tpu.memory_space<vmem>>, vector<128x512xbf16>
    %cst_85 = arith.constant dense<0.000000e+00> : vector<8x512xf32>
    %248 = tpu.matmul %200, %247, %cst_85 {dimension_numbers = #tpu.dot_dimension_numbers<[1], [0], [0], [1], [0, 0, 1, 1], [], []>} : vector<8x128xbf16>, vector<128x512xbf16>, vector<8x512xf32> -> vector<8x512xf32>
    %c0_86 = arith.constant 0 : index
    %c0_87 = arith.constant 0 : index
    %249 = vector.load %arg7[%c0_86, %c0_87] : memref<1x512xf32, #tpu.memory_space<vmem>>, vector<1x512xf32>
    %250 = vector.broadcast %249 : vector<1x512xf32> to vector<8x512xf32>
    %251 = arith.addf %248, %250 : vector<8x512xf32>
    %c0_88 = arith.constant 0 : index
    %c0_89 = arith.constant 0 : index
    %252 = vector.load %arg6[%c0_88, %c0_89] : memref<128x512xbf16, #tpu.memory_space<vmem>>, vector<128x512xbf16>
    %cst_90 = arith.constant dense<0.000000e+00> : vector<8x512xf32>
    %253 = tpu.matmul %225, %252, %cst_90 {dimension_numbers = #tpu.dot_dimension_numbers<[1], [0], [0], [1], [0, 0, 1, 1], [], []>} : vector<8x128xbf16>, vector<128x512xbf16>, vector<8x512xf32> -> vector<8x512xf32>
    %254 = arith.addf %251, %253 : vector<8x512xf32>
    %255 = vector.extract_strided_slice %254 {offsets = [0, 0], sizes = [8, 384], strides = [1, 1]} : vector<8x512xf32> to vector<8x384xf32>
    %256 = arith.negf %255 : vector<8x384xf32>
    %257 = math.exp %256 : vector<8x384xf32>
    %cst_91 = arith.constant 1.000000e+00 : f32
    %258 = vector.broadcast %cst_91 : f32 to vector<8x384xf32>
    %259 = arith.addf %258, %257 : vector<8x384xf32>
    %260 = arith.divf %258, %259 : vector<8x384xf32>
    %261 = vector.extract_strided_slice %260 {offsets = [0, 0], sizes = [8, 128], strides = [1, 1]} : vector<8x384xf32> to vector<8x128xf32>
    %262 = vector.extract_strided_slice %260 {offsets = [0, 128], sizes = [8, 128], strides = [1, 1]} : vector<8x384xf32> to vector<8x128xf32>
    %263 = vector.extract_strided_slice %260 {offsets = [0, 256], sizes = [8, 128], strides = [1, 1]} : vector<8x384xf32> to vector<8x128xf32>
    %264 = vector.extract_strided_slice %254 {offsets = [0, 384], sizes = [8, 128], strides = [1, 1]} : vector<8x512xf32> to vector<8x128xf32>
    %265 = math.tanh %264 : vector<8x128xf32>
    %266 = arith.mulf %262, %222 : vector<8x128xf32>
    %267 = arith.mulf %261, %265 : vector<8x128xf32>
    %268 = arith.addf %266, %267 : vector<8x128xf32>
    %269 = math.tanh %268 : vector<8x128xf32>
    %270 = arith.mulf %263, %269 : vector<8x128xf32>
    %271 = arith.truncf %270 : vector<8x128xf32> to vector<8x128xbf16>
    %c48 = arith.constant 48 : index
    %c0_92 = arith.constant 0 : index
    %272 = vector.load %arg10[%c48, %c0_92] : memref<96x512xf32, #tpu.memory_space<vmem>>, vector<8x512xf32>
    %c0_93 = arith.constant 0 : index
    %c0_94 = arith.constant 0 : index
    %273 = vector.load %arg3[%c0_93, %c0_94] : memref<128x512xbf16, #tpu.memory_space<vmem>>, vector<128x512xbf16>
    %cst_95 = arith.constant dense<0.000000e+00> : vector<8x512xf32>
    %274 = tpu.matmul %246, %273, %cst_95 {dimension_numbers = #tpu.dot_dimension_numbers<[1], [0], [0], [1], [0, 0, 1, 1], [], []>} : vector<8x128xbf16>, vector<128x512xbf16>, vector<8x512xf32> -> vector<8x512xf32>
    %275 = arith.addf %272, %274 : vector<8x512xf32>
    %276 = vector.extract_strided_slice %275 {offsets = [0, 0], sizes = [8, 384], strides = [1, 1]} : vector<8x512xf32> to vector<8x384xf32>
    %277 = arith.negf %276 : vector<8x384xf32>
    %278 = math.exp %277 : vector<8x384xf32>
    %cst_96 = arith.constant 1.000000e+00 : f32
    %279 = vector.broadcast %cst_96 : f32 to vector<8x384xf32>
    %280 = arith.addf %279, %278 : vector<8x384xf32>
    %281 = arith.divf %279, %280 : vector<8x384xf32>
    %282 = vector.extract_strided_slice %281 {offsets = [0, 0], sizes = [8, 128], strides = [1, 1]} : vector<8x384xf32> to vector<8x128xf32>
    %283 = vector.extract_strided_slice %281 {offsets = [0, 128], sizes = [8, 128], strides = [1, 1]} : vector<8x384xf32> to vector<8x128xf32>
    %284 = vector.extract_strided_slice %281 {offsets = [0, 256], sizes = [8, 128], strides = [1, 1]} : vector<8x384xf32> to vector<8x128xf32>
    %285 = vector.extract_strided_slice %275 {offsets = [0, 384], sizes = [8, 128], strides = [1, 1]} : vector<8x512xf32> to vector<8x128xf32>
    %286 = math.tanh %285 : vector<8x128xf32>
    %287 = arith.mulf %283, %243 : vector<8x128xf32>
    %288 = arith.mulf %282, %286 : vector<8x128xf32>
    %289 = arith.addf %287, %288 : vector<8x128xf32>
    %290 = math.tanh %289 : vector<8x128xf32>
    %291 = arith.mulf %284, %290 : vector<8x128xf32>
    %292 = arith.truncf %291 : vector<8x128xf32> to vector<8x128xbf16>
    %c0_97 = arith.constant 0 : index
    %c0_98 = arith.constant 0 : index
    %293 = vector.load %arg5[%c0_97, %c0_98] : memref<128x512xbf16, #tpu.memory_space<vmem>>, vector<128x512xbf16>
    %cst_99 = arith.constant dense<0.000000e+00> : vector<8x512xf32>
    %294 = tpu.matmul %246, %293, %cst_99 {dimension_numbers = #tpu.dot_dimension_numbers<[1], [0], [0], [1], [0, 0, 1, 1], [], []>} : vector<8x128xbf16>, vector<128x512xbf16>, vector<8x512xf32> -> vector<8x512xf32>
    %c0_100 = arith.constant 0 : index
    %c0_101 = arith.constant 0 : index
    %295 = vector.load %arg7[%c0_100, %c0_101] : memref<1x512xf32, #tpu.memory_space<vmem>>, vector<1x512xf32>
    %296 = vector.broadcast %295 : vector<1x512xf32> to vector<8x512xf32>
    %297 = arith.addf %294, %296 : vector<8x512xf32>
    %c0_102 = arith.constant 0 : index
    %c0_103 = arith.constant 0 : index
    %298 = vector.load %arg6[%c0_102, %c0_103] : memref<128x512xbf16, #tpu.memory_space<vmem>>, vector<128x512xbf16>
    %cst_104 = arith.constant dense<0.000000e+00> : vector<8x512xf32>
    %299 = tpu.matmul %271, %298, %cst_104 {dimension_numbers = #tpu.dot_dimension_numbers<[1], [0], [0], [1], [0, 0, 1, 1], [], []>} : vector<8x128xbf16>, vector<128x512xbf16>, vector<8x512xf32> -> vector<8x512xf32>
    %300 = arith.addf %297, %299 : vector<8x512xf32>
    %301 = vector.extract_strided_slice %300 {offsets = [0, 0], sizes = [8, 384], strides = [1, 1]} : vector<8x512xf32> to vector<8x384xf32>
    %302 = arith.negf %301 : vector<8x384xf32>
    %303 = math.exp %302 : vector<8x384xf32>
    %cst_105 = arith.constant 1.000000e+00 : f32
    %304 = vector.broadcast %cst_105 : f32 to vector<8x384xf32>
    %305 = arith.addf %304, %303 : vector<8x384xf32>
    %306 = arith.divf %304, %305 : vector<8x384xf32>
    %307 = vector.extract_strided_slice %306 {offsets = [0, 0], sizes = [8, 128], strides = [1, 1]} : vector<8x384xf32> to vector<8x128xf32>
    %308 = vector.extract_strided_slice %306 {offsets = [0, 128], sizes = [8, 128], strides = [1, 1]} : vector<8x384xf32> to vector<8x128xf32>
    %309 = vector.extract_strided_slice %306 {offsets = [0, 256], sizes = [8, 128], strides = [1, 1]} : vector<8x384xf32> to vector<8x128xf32>
    %310 = vector.extract_strided_slice %300 {offsets = [0, 384], sizes = [8, 128], strides = [1, 1]} : vector<8x512xf32> to vector<8x128xf32>
    %311 = math.tanh %310 : vector<8x128xf32>
    %312 = arith.mulf %308, %268 : vector<8x128xf32>
    %313 = arith.mulf %307, %311 : vector<8x128xf32>
    %314 = arith.addf %312, %313 : vector<8x128xf32>
    %315 = math.tanh %314 : vector<8x128xf32>
    %316 = arith.mulf %309, %315 : vector<8x128xf32>
    %317 = arith.truncf %316 : vector<8x128xf32> to vector<8x128xbf16>
    %c56 = arith.constant 56 : index
    %c0_106 = arith.constant 0 : index
    %318 = vector.load %arg10[%c56, %c0_106] : memref<96x512xf32, #tpu.memory_space<vmem>>, vector<8x512xf32>
    %c0_107 = arith.constant 0 : index
    %c0_108 = arith.constant 0 : index
    %319 = vector.load %arg3[%c0_107, %c0_108] : memref<128x512xbf16, #tpu.memory_space<vmem>>, vector<128x512xbf16>
    %cst_109 = arith.constant dense<0.000000e+00> : vector<8x512xf32>
    %320 = tpu.matmul %292, %319, %cst_109 {dimension_numbers = #tpu.dot_dimension_numbers<[1], [0], [0], [1], [0, 0, 1, 1], [], []>} : vector<8x128xbf16>, vector<128x512xbf16>, vector<8x512xf32> -> vector<8x512xf32>
    %321 = arith.addf %318, %320 : vector<8x512xf32>
    %322 = vector.extract_strided_slice %321 {offsets = [0, 0], sizes = [8, 384], strides = [1, 1]} : vector<8x512xf32> to vector<8x384xf32>
    %323 = arith.negf %322 : vector<8x384xf32>
    %324 = math.exp %323 : vector<8x384xf32>
    %cst_110 = arith.constant 1.000000e+00 : f32
    %325 = vector.broadcast %cst_110 : f32 to vector<8x384xf32>
    %326 = arith.addf %325, %324 : vector<8x384xf32>
    %327 = arith.divf %325, %326 : vector<8x384xf32>
    %328 = vector.extract_strided_slice %327 {offsets = [0, 0], sizes = [8, 128], strides = [1, 1]} : vector<8x384xf32> to vector<8x128xf32>
    %329 = vector.extract_strided_slice %327 {offsets = [0, 128], sizes = [8, 128], strides = [1, 1]} : vector<8x384xf32> to vector<8x128xf32>
    %330 = vector.extract_strided_slice %327 {offsets = [0, 256], sizes = [8, 128], strides = [1, 1]} : vector<8x384xf32> to vector<8x128xf32>
    %331 = vector.extract_strided_slice %321 {offsets = [0, 384], sizes = [8, 128], strides = [1, 1]} : vector<8x512xf32> to vector<8x128xf32>
    %332 = math.tanh %331 : vector<8x128xf32>
    %333 = arith.mulf %329, %289 : vector<8x128xf32>
    %334 = arith.mulf %328, %332 : vector<8x128xf32>
    %335 = arith.addf %333, %334 : vector<8x128xf32>
    %336 = math.tanh %335 : vector<8x128xf32>
    %337 = arith.mulf %330, %336 : vector<8x128xf32>
    %338 = arith.truncf %337 : vector<8x128xf32> to vector<8x128xbf16>
    %c0_111 = arith.constant 0 : index
    %c0_112 = arith.constant 0 : index
    %339 = vector.load %arg5[%c0_111, %c0_112] : memref<128x512xbf16, #tpu.memory_space<vmem>>, vector<128x512xbf16>
    %cst_113 = arith.constant dense<0.000000e+00> : vector<8x512xf32>
    %340 = tpu.matmul %292, %339, %cst_113 {dimension_numbers = #tpu.dot_dimension_numbers<[1], [0], [0], [1], [0, 0, 1, 1], [], []>} : vector<8x128xbf16>, vector<128x512xbf16>, vector<8x512xf32> -> vector<8x512xf32>
    %c0_114 = arith.constant 0 : index
    %c0_115 = arith.constant 0 : index
    %341 = vector.load %arg7[%c0_114, %c0_115] : memref<1x512xf32, #tpu.memory_space<vmem>>, vector<1x512xf32>
    %342 = vector.broadcast %341 : vector<1x512xf32> to vector<8x512xf32>
    %343 = arith.addf %340, %342 : vector<8x512xf32>
    %c0_116 = arith.constant 0 : index
    %c0_117 = arith.constant 0 : index
    %344 = vector.load %arg6[%c0_116, %c0_117] : memref<128x512xbf16, #tpu.memory_space<vmem>>, vector<128x512xbf16>
    %cst_118 = arith.constant dense<0.000000e+00> : vector<8x512xf32>
    %345 = tpu.matmul %317, %344, %cst_118 {dimension_numbers = #tpu.dot_dimension_numbers<[1], [0], [0], [1], [0, 0, 1, 1], [], []>} : vector<8x128xbf16>, vector<128x512xbf16>, vector<8x512xf32> -> vector<8x512xf32>
    %346 = arith.addf %343, %345 : vector<8x512xf32>
    %347 = vector.extract_strided_slice %346 {offsets = [0, 0], sizes = [8, 384], strides = [1, 1]} : vector<8x512xf32> to vector<8x384xf32>
    %348 = arith.negf %347 : vector<8x384xf32>
    %349 = math.exp %348 : vector<8x384xf32>
    %cst_119 = arith.constant 1.000000e+00 : f32
    %350 = vector.broadcast %cst_119 : f32 to vector<8x384xf32>
    %351 = arith.addf %350, %349 : vector<8x384xf32>
    %352 = arith.divf %350, %351 : vector<8x384xf32>
    %353 = vector.extract_strided_slice %352 {offsets = [0, 0], sizes = [8, 128], strides = [1, 1]} : vector<8x384xf32> to vector<8x128xf32>
    %354 = vector.extract_strided_slice %352 {offsets = [0, 128], sizes = [8, 128], strides = [1, 1]} : vector<8x384xf32> to vector<8x128xf32>
    %355 = vector.extract_strided_slice %352 {offsets = [0, 256], sizes = [8, 128], strides = [1, 1]} : vector<8x384xf32> to vector<8x128xf32>
    %356 = vector.extract_strided_slice %346 {offsets = [0, 384], sizes = [8, 128], strides = [1, 1]} : vector<8x512xf32> to vector<8x128xf32>
    %357 = math.tanh %356 : vector<8x128xf32>
    %358 = arith.mulf %354, %314 : vector<8x128xf32>
    %359 = arith.mulf %353, %357 : vector<8x128xf32>
    %360 = arith.addf %358, %359 : vector<8x128xf32>
    %361 = math.tanh %360 : vector<8x128xf32>
    %362 = arith.mulf %355, %361 : vector<8x128xf32>
    %363 = arith.truncf %362 : vector<8x128xf32> to vector<8x128xbf16>
    %c64 = arith.constant 64 : index
    %c0_120 = arith.constant 0 : index
    %364 = vector.load %arg10[%c64, %c0_120] : memref<96x512xf32, #tpu.memory_space<vmem>>, vector<8x512xf32>
    %c0_121 = arith.constant 0 : index
    %c0_122 = arith.constant 0 : index
    %365 = vector.load %arg3[%c0_121, %c0_122] : memref<128x512xbf16, #tpu.memory_space<vmem>>, vector<128x512xbf16>
    %cst_123 = arith.constant dense<0.000000e+00> : vector<8x512xf32>
    %366 = tpu.matmul %338, %365, %cst_123 {dimension_numbers = #tpu.dot_dimension_numbers<[1], [0], [0], [1], [0, 0, 1, 1], [], []>} : vector<8x128xbf16>, vector<128x512xbf16>, vector<8x512xf32> -> vector<8x512xf32>
    %367 = arith.addf %364, %366 : vector<8x512xf32>
    %368 = vector.extract_strided_slice %367 {offsets = [0, 0], sizes = [8, 384], strides = [1, 1]} : vector<8x512xf32> to vector<8x384xf32>
    %369 = arith.negf %368 : vector<8x384xf32>
    %370 = math.exp %369 : vector<8x384xf32>
    %cst_124 = arith.constant 1.000000e+00 : f32
    %371 = vector.broadcast %cst_124 : f32 to vector<8x384xf32>
    %372 = arith.addf %371, %370 : vector<8x384xf32>
    %373 = arith.divf %371, %372 : vector<8x384xf32>
    %374 = vector.extract_strided_slice %373 {offsets = [0, 0], sizes = [8, 128], strides = [1, 1]} : vector<8x384xf32> to vector<8x128xf32>
    %375 = vector.extract_strided_slice %373 {offsets = [0, 128], sizes = [8, 128], strides = [1, 1]} : vector<8x384xf32> to vector<8x128xf32>
    %376 = vector.extract_strided_slice %373 {offsets = [0, 256], sizes = [8, 128], strides = [1, 1]} : vector<8x384xf32> to vector<8x128xf32>
    %377 = vector.extract_strided_slice %367 {offsets = [0, 384], sizes = [8, 128], strides = [1, 1]} : vector<8x512xf32> to vector<8x128xf32>
    %378 = math.tanh %377 : vector<8x128xf32>
    %379 = arith.mulf %375, %335 : vector<8x128xf32>
    %380 = arith.mulf %374, %378 : vector<8x128xf32>
    %381 = arith.addf %379, %380 : vector<8x128xf32>
    %382 = math.tanh %381 : vector<8x128xf32>
    %383 = arith.mulf %376, %382 : vector<8x128xf32>
    %384 = arith.truncf %383 : vector<8x128xf32> to vector<8x128xbf16>
    %c0_125 = arith.constant 0 : index
    %c0_126 = arith.constant 0 : index
    %385 = vector.load %arg5[%c0_125, %c0_126] : memref<128x512xbf16, #tpu.memory_space<vmem>>, vector<128x512xbf16>
    %cst_127 = arith.constant dense<0.000000e+00> : vector<8x512xf32>
    %386 = tpu.matmul %338, %385, %cst_127 {dimension_numbers = #tpu.dot_dimension_numbers<[1], [0], [0], [1], [0, 0, 1, 1], [], []>} : vector<8x128xbf16>, vector<128x512xbf16>, vector<8x512xf32> -> vector<8x512xf32>
    %c0_128 = arith.constant 0 : index
    %c0_129 = arith.constant 0 : index
    %387 = vector.load %arg7[%c0_128, %c0_129] : memref<1x512xf32, #tpu.memory_space<vmem>>, vector<1x512xf32>
    %388 = vector.broadcast %387 : vector<1x512xf32> to vector<8x512xf32>
    %389 = arith.addf %386, %388 : vector<8x512xf32>
    %c0_130 = arith.constant 0 : index
    %c0_131 = arith.constant 0 : index
    %390 = vector.load %arg6[%c0_130, %c0_131] : memref<128x512xbf16, #tpu.memory_space<vmem>>, vector<128x512xbf16>
    %cst_132 = arith.constant dense<0.000000e+00> : vector<8x512xf32>
    %391 = tpu.matmul %363, %390, %cst_132 {dimension_numbers = #tpu.dot_dimension_numbers<[1], [0], [0], [1], [0, 0, 1, 1], [], []>} : vector<8x128xbf16>, vector<128x512xbf16>, vector<8x512xf32> -> vector<8x512xf32>
    %392 = arith.addf %389, %391 : vector<8x512xf32>
    %393 = vector.extract_strided_slice %392 {offsets = [0, 0], sizes = [8, 384], strides = [1, 1]} : vector<8x512xf32> to vector<8x384xf32>
    %394 = arith.negf %393 : vector<8x384xf32>
    %395 = math.exp %394 : vector<8x384xf32>
    %cst_133 = arith.constant 1.000000e+00 : f32
    %396 = vector.broadcast %cst_133 : f32 to vector<8x384xf32>
    %397 = arith.addf %396, %395 : vector<8x384xf32>
    %398 = arith.divf %396, %397 : vector<8x384xf32>
    %399 = vector.extract_strided_slice %398 {offsets = [0, 0], sizes = [8, 128], strides = [1, 1]} : vector<8x384xf32> to vector<8x128xf32>
    %400 = vector.extract_strided_slice %398 {offsets = [0, 128], sizes = [8, 128], strides = [1, 1]} : vector<8x384xf32> to vector<8x128xf32>
    %401 = vector.extract_strided_slice %398 {offsets = [0, 256], sizes = [8, 128], strides = [1, 1]} : vector<8x384xf32> to vector<8x128xf32>
    %402 = vector.extract_strided_slice %392 {offsets = [0, 384], sizes = [8, 128], strides = [1, 1]} : vector<8x512xf32> to vector<8x128xf32>
    %403 = math.tanh %402 : vector<8x128xf32>
    %404 = arith.mulf %400, %360 : vector<8x128xf32>
    %405 = arith.mulf %399, %403 : vector<8x128xf32>
    %406 = arith.addf %404, %405 : vector<8x128xf32>
    %407 = math.tanh %406 : vector<8x128xf32>
    %408 = arith.mulf %401, %407 : vector<8x128xf32>
    %409 = arith.truncf %408 : vector<8x128xf32> to vector<8x128xbf16>
    %c72 = arith.constant 72 : index
    %c0_134 = arith.constant 0 : index
    %410 = vector.load %arg10[%c72, %c0_134] : memref<96x512xf32, #tpu.memory_space<vmem>>, vector<8x512xf32>
    %c0_135 = arith.constant 0 : index
    %c0_136 = arith.constant 0 : index
    %411 = vector.load %arg3[%c0_135, %c0_136] : memref<128x512xbf16, #tpu.memory_space<vmem>>, vector<128x512xbf16>
    %cst_137 = arith.constant dense<0.000000e+00> : vector<8x512xf32>
    %412 = tpu.matmul %384, %411, %cst_137 {dimension_numbers = #tpu.dot_dimension_numbers<[1], [0], [0], [1], [0, 0, 1, 1], [], []>} : vector<8x128xbf16>, vector<128x512xbf16>, vector<8x512xf32> -> vector<8x512xf32>
    %413 = arith.addf %410, %412 : vector<8x512xf32>
    %414 = vector.extract_strided_slice %413 {offsets = [0, 0], sizes = [8, 384], strides = [1, 1]} : vector<8x512xf32> to vector<8x384xf32>
    %415 = arith.negf %414 : vector<8x384xf32>
    %416 = math.exp %415 : vector<8x384xf32>
    %cst_138 = arith.constant 1.000000e+00 : f32
    %417 = vector.broadcast %cst_138 : f32 to vector<8x384xf32>
    %418 = arith.addf %417, %416 : vector<8x384xf32>
    %419 = arith.divf %417, %418 : vector<8x384xf32>
    %420 = vector.extract_strided_slice %419 {offsets = [0, 0], sizes = [8, 128], strides = [1, 1]} : vector<8x384xf32> to vector<8x128xf32>
    %421 = vector.extract_strided_slice %419 {offsets = [0, 128], sizes = [8, 128], strides = [1, 1]} : vector<8x384xf32> to vector<8x128xf32>
    %422 = vector.extract_strided_slice %419 {offsets = [0, 256], sizes = [8, 128], strides = [1, 1]} : vector<8x384xf32> to vector<8x128xf32>
    %423 = vector.extract_strided_slice %413 {offsets = [0, 384], sizes = [8, 128], strides = [1, 1]} : vector<8x512xf32> to vector<8x128xf32>
    %424 = math.tanh %423 : vector<8x128xf32>
    %425 = arith.mulf %421, %381 : vector<8x128xf32>
    %426 = arith.mulf %420, %424 : vector<8x128xf32>
    %427 = arith.addf %425, %426 : vector<8x128xf32>
    %428 = math.tanh %427 : vector<8x128xf32>
    %429 = arith.mulf %422, %428 : vector<8x128xf32>
    %430 = arith.truncf %429 : vector<8x128xf32> to vector<8x128xbf16>
    %c0_139 = arith.constant 0 : index
    %c0_140 = arith.constant 0 : index
    %431 = vector.load %arg5[%c0_139, %c0_140] : memref<128x512xbf16, #tpu.memory_space<vmem>>, vector<128x512xbf16>
    %cst_141 = arith.constant dense<0.000000e+00> : vector<8x512xf32>
    %432 = tpu.matmul %384, %431, %cst_141 {dimension_numbers = #tpu.dot_dimension_numbers<[1], [0], [0], [1], [0, 0, 1, 1], [], []>} : vector<8x128xbf16>, vector<128x512xbf16>, vector<8x512xf32> -> vector<8x512xf32>
    %c0_142 = arith.constant 0 : index
    %c0_143 = arith.constant 0 : index
    %433 = vector.load %arg7[%c0_142, %c0_143] : memref<1x512xf32, #tpu.memory_space<vmem>>, vector<1x512xf32>
    %434 = vector.broadcast %433 : vector<1x512xf32> to vector<8x512xf32>
    %435 = arith.addf %432, %434 : vector<8x512xf32>
    %c0_144 = arith.constant 0 : index
    %c0_145 = arith.constant 0 : index
    %436 = vector.load %arg6[%c0_144, %c0_145] : memref<128x512xbf16, #tpu.memory_space<vmem>>, vector<128x512xbf16>
    %cst_146 = arith.constant dense<0.000000e+00> : vector<8x512xf32>
    %437 = tpu.matmul %409, %436, %cst_146 {dimension_numbers = #tpu.dot_dimension_numbers<[1], [0], [0], [1], [0, 0, 1, 1], [], []>} : vector<8x128xbf16>, vector<128x512xbf16>, vector<8x512xf32> -> vector<8x512xf32>
    %438 = arith.addf %435, %437 : vector<8x512xf32>
    %439 = vector.extract_strided_slice %438 {offsets = [0, 0], sizes = [8, 384], strides = [1, 1]} : vector<8x512xf32> to vector<8x384xf32>
    %440 = arith.negf %439 : vector<8x384xf32>
    %441 = math.exp %440 : vector<8x384xf32>
    %cst_147 = arith.constant 1.000000e+00 : f32
    %442 = vector.broadcast %cst_147 : f32 to vector<8x384xf32>
    %443 = arith.addf %442, %441 : vector<8x384xf32>
    %444 = arith.divf %442, %443 : vector<8x384xf32>
    %445 = vector.extract_strided_slice %444 {offsets = [0, 0], sizes = [8, 128], strides = [1, 1]} : vector<8x384xf32> to vector<8x128xf32>
    %446 = vector.extract_strided_slice %444 {offsets = [0, 128], sizes = [8, 128], strides = [1, 1]} : vector<8x384xf32> to vector<8x128xf32>
    %447 = vector.extract_strided_slice %444 {offsets = [0, 256], sizes = [8, 128], strides = [1, 1]} : vector<8x384xf32> to vector<8x128xf32>
    %448 = vector.extract_strided_slice %438 {offsets = [0, 384], sizes = [8, 128], strides = [1, 1]} : vector<8x512xf32> to vector<8x128xf32>
    %449 = math.tanh %448 : vector<8x128xf32>
    %450 = arith.mulf %446, %406 : vector<8x128xf32>
    %451 = arith.mulf %445, %449 : vector<8x128xf32>
    %452 = arith.addf %450, %451 : vector<8x128xf32>
    %453 = math.tanh %452 : vector<8x128xf32>
    %454 = arith.mulf %447, %453 : vector<8x128xf32>
    %455 = arith.truncf %454 : vector<8x128xf32> to vector<8x128xbf16>
    %c80 = arith.constant 80 : index
    %c0_148 = arith.constant 0 : index
    %456 = vector.load %arg10[%c80, %c0_148] : memref<96x512xf32, #tpu.memory_space<vmem>>, vector<8x512xf32>
    %c0_149 = arith.constant 0 : index
    %c0_150 = arith.constant 0 : index
    %457 = vector.load %arg3[%c0_149, %c0_150] : memref<128x512xbf16, #tpu.memory_space<vmem>>, vector<128x512xbf16>
    %cst_151 = arith.constant dense<0.000000e+00> : vector<8x512xf32>
    %458 = tpu.matmul %430, %457, %cst_151 {dimension_numbers = #tpu.dot_dimension_numbers<[1], [0], [0], [1], [0, 0, 1, 1], [], []>} : vector<8x128xbf16>, vector<128x512xbf16>, vector<8x512xf32> -> vector<8x512xf32>
    %459 = arith.addf %456, %458 : vector<8x512xf32>
    %460 = vector.extract_strided_slice %459 {offsets = [0, 0], sizes = [8, 384], strides = [1, 1]} : vector<8x512xf32> to vector<8x384xf32>
    %461 = arith.negf %460 : vector<8x384xf32>
    %462 = math.exp %461 : vector<8x384xf32>
    %cst_152 = arith.constant 1.000000e+00 : f32
    %463 = vector.broadcast %cst_152 : f32 to vector<8x384xf32>
    %464 = arith.addf %463, %462 : vector<8x384xf32>
    %465 = arith.divf %463, %464 : vector<8x384xf32>
    %466 = vector.extract_strided_slice %465 {offsets = [0, 0], sizes = [8, 128], strides = [1, 1]} : vector<8x384xf32> to vector<8x128xf32>
    %467 = vector.extract_strided_slice %465 {offsets = [0, 128], sizes = [8, 128], strides = [1, 1]} : vector<8x384xf32> to vector<8x128xf32>
    %468 = vector.extract_strided_slice %465 {offsets = [0, 256], sizes = [8, 128], strides = [1, 1]} : vector<8x384xf32> to vector<8x128xf32>
    %469 = vector.extract_strided_slice %459 {offsets = [0, 384], sizes = [8, 128], strides = [1, 1]} : vector<8x512xf32> to vector<8x128xf32>
    %470 = math.tanh %469 : vector<8x128xf32>
    %471 = arith.mulf %467, %427 : vector<8x128xf32>
    %472 = arith.mulf %466, %470 : vector<8x128xf32>
    %473 = arith.addf %471, %472 : vector<8x128xf32>
    %474 = math.tanh %473 : vector<8x128xf32>
    %475 = arith.mulf %468, %474 : vector<8x128xf32>
    %476 = arith.truncf %475 : vector<8x128xf32> to vector<8x128xbf16>
    %c0_153 = arith.constant 0 : index
    %c0_154 = arith.constant 0 : index
    %477 = vector.load %arg5[%c0_153, %c0_154] : memref<128x512xbf16, #tpu.memory_space<vmem>>, vector<128x512xbf16>
    %cst_155 = arith.constant dense<0.000000e+00> : vector<8x512xf32>
    %478 = tpu.matmul %430, %477, %cst_155 {dimension_numbers = #tpu.dot_dimension_numbers<[1], [0], [0], [1], [0, 0, 1, 1], [], []>} : vector<8x128xbf16>, vector<128x512xbf16>, vector<8x512xf32> -> vector<8x512xf32>
    %c0_156 = arith.constant 0 : index
    %c0_157 = arith.constant 0 : index
    %479 = vector.load %arg7[%c0_156, %c0_157] : memref<1x512xf32, #tpu.memory_space<vmem>>, vector<1x512xf32>
    %480 = vector.broadcast %479 : vector<1x512xf32> to vector<8x512xf32>
    %481 = arith.addf %478, %480 : vector<8x512xf32>
    %c0_158 = arith.constant 0 : index
    %c0_159 = arith.constant 0 : index
    %482 = vector.load %arg6[%c0_158, %c0_159] : memref<128x512xbf16, #tpu.memory_space<vmem>>, vector<128x512xbf16>
    %cst_160 = arith.constant dense<0.000000e+00> : vector<8x512xf32>
    %483 = tpu.matmul %455, %482, %cst_160 {dimension_numbers = #tpu.dot_dimension_numbers<[1], [0], [0], [1], [0, 0, 1, 1], [], []>} : vector<8x128xbf16>, vector<128x512xbf16>, vector<8x512xf32> -> vector<8x512xf32>
    %484 = arith.addf %481, %483 : vector<8x512xf32>
    %485 = vector.extract_strided_slice %484 {offsets = [0, 0], sizes = [8, 384], strides = [1, 1]} : vector<8x512xf32> to vector<8x384xf32>
    %486 = arith.negf %485 : vector<8x384xf32>
    %487 = math.exp %486 : vector<8x384xf32>
    %cst_161 = arith.constant 1.000000e+00 : f32
    %488 = vector.broadcast %cst_161 : f32 to vector<8x384xf32>
    %489 = arith.addf %488, %487 : vector<8x384xf32>
    %490 = arith.divf %488, %489 : vector<8x384xf32>
    %491 = vector.extract_strided_slice %490 {offsets = [0, 0], sizes = [8, 128], strides = [1, 1]} : vector<8x384xf32> to vector<8x128xf32>
    %492 = vector.extract_strided_slice %490 {offsets = [0, 128], sizes = [8, 128], strides = [1, 1]} : vector<8x384xf32> to vector<8x128xf32>
    %493 = vector.extract_strided_slice %490 {offsets = [0, 256], sizes = [8, 128], strides = [1, 1]} : vector<8x384xf32> to vector<8x128xf32>
    %494 = vector.extract_strided_slice %484 {offsets = [0, 384], sizes = [8, 128], strides = [1, 1]} : vector<8x512xf32> to vector<8x128xf32>
    %495 = math.tanh %494 : vector<8x128xf32>
    %496 = arith.mulf %492, %452 : vector<8x128xf32>
    %497 = arith.mulf %491, %495 : vector<8x128xf32>
    %498 = arith.addf %496, %497 : vector<8x128xf32>
    %499 = math.tanh %498 : vector<8x128xf32>
    %500 = arith.mulf %493, %499 : vector<8x128xf32>
    %501 = arith.truncf %500 : vector<8x128xf32> to vector<8x128xbf16>
    %c88 = arith.constant 88 : index
    %c0_162 = arith.constant 0 : index
    %502 = vector.load %arg10[%c88, %c0_162] : memref<96x512xf32, #tpu.memory_space<vmem>>, vector<8x512xf32>
    %c0_163 = arith.constant 0 : index
    %c0_164 = arith.constant 0 : index
    %503 = vector.load %arg3[%c0_163, %c0_164] : memref<128x512xbf16, #tpu.memory_space<vmem>>, vector<128x512xbf16>
    %cst_165 = arith.constant dense<0.000000e+00> : vector<8x512xf32>
    %504 = tpu.matmul %476, %503, %cst_165 {dimension_numbers = #tpu.dot_dimension_numbers<[1], [0], [0], [1], [0, 0, 1, 1], [], []>} : vector<8x128xbf16>, vector<128x512xbf16>, vector<8x512xf32> -> vector<8x512xf32>
    %505 = arith.addf %502, %504 : vector<8x512xf32>
    %506 = vector.extract_strided_slice %505 {offsets = [0, 0], sizes = [8, 384], strides = [1, 1]} : vector<8x512xf32> to vector<8x384xf32>
    %507 = arith.negf %506 : vector<8x384xf32>
    %508 = math.exp %507 : vector<8x384xf32>
    %cst_166 = arith.constant 1.000000e+00 : f32
    %509 = vector.broadcast %cst_166 : f32 to vector<8x384xf32>
    %510 = arith.addf %509, %508 : vector<8x384xf32>
    %511 = arith.divf %509, %510 : vector<8x384xf32>
    %512 = vector.extract_strided_slice %511 {offsets = [0, 0], sizes = [8, 128], strides = [1, 1]} : vector<8x384xf32> to vector<8x128xf32>
    %513 = vector.extract_strided_slice %511 {offsets = [0, 128], sizes = [8, 128], strides = [1, 1]} : vector<8x384xf32> to vector<8x128xf32>
    %514 = vector.extract_strided_slice %511 {offsets = [0, 256], sizes = [8, 128], strides = [1, 1]} : vector<8x384xf32> to vector<8x128xf32>
    %515 = vector.extract_strided_slice %505 {offsets = [0, 384], sizes = [8, 128], strides = [1, 1]} : vector<8x512xf32> to vector<8x128xf32>
    %516 = math.tanh %515 : vector<8x128xf32>
    %517 = arith.mulf %513, %473 : vector<8x128xf32>
    %518 = arith.mulf %512, %516 : vector<8x128xf32>
    %519 = arith.addf %517, %518 : vector<8x128xf32>
    %520 = math.tanh %519 : vector<8x128xf32>
    %521 = arith.mulf %514, %520 : vector<8x128xf32>
    %522 = arith.truncf %521 : vector<8x128xf32> to vector<8x128xbf16>
    %c0_167 = arith.constant 0 : index
    %c0_168 = arith.constant 0 : index
    %523 = vector.load %arg5[%c0_167, %c0_168] : memref<128x512xbf16, #tpu.memory_space<vmem>>, vector<128x512xbf16>
    %cst_169 = arith.constant dense<0.000000e+00> : vector<8x512xf32>
    %524 = tpu.matmul %476, %523, %cst_169 {dimension_numbers = #tpu.dot_dimension_numbers<[1], [0], [0], [1], [0, 0, 1, 1], [], []>} : vector<8x128xbf16>, vector<128x512xbf16>, vector<8x512xf32> -> vector<8x512xf32>
    %c0_170 = arith.constant 0 : index
    %c0_171 = arith.constant 0 : index
    %525 = vector.load %arg7[%c0_170, %c0_171] : memref<1x512xf32, #tpu.memory_space<vmem>>, vector<1x512xf32>
    %526 = vector.broadcast %525 : vector<1x512xf32> to vector<8x512xf32>
    %527 = arith.addf %524, %526 : vector<8x512xf32>
    %c0_172 = arith.constant 0 : index
    %c0_173 = arith.constant 0 : index
    %528 = vector.load %arg6[%c0_172, %c0_173] : memref<128x512xbf16, #tpu.memory_space<vmem>>, vector<128x512xbf16>
    %cst_174 = arith.constant dense<0.000000e+00> : vector<8x512xf32>
    %529 = tpu.matmul %501, %528, %cst_174 {dimension_numbers = #tpu.dot_dimension_numbers<[1], [0], [0], [1], [0, 0, 1, 1], [], []>} : vector<8x128xbf16>, vector<128x512xbf16>, vector<8x512xf32> -> vector<8x512xf32>
    %530 = arith.addf %527, %529 : vector<8x512xf32>
    %531 = vector.extract_strided_slice %530 {offsets = [0, 0], sizes = [8, 384], strides = [1, 1]} : vector<8x512xf32> to vector<8x384xf32>
    %532 = arith.negf %531 : vector<8x384xf32>
    %533 = math.exp %532 : vector<8x384xf32>
    %cst_175 = arith.constant 1.000000e+00 : f32
    %534 = vector.broadcast %cst_175 : f32 to vector<8x384xf32>
    %535 = arith.addf %534, %533 : vector<8x384xf32>
    %536 = arith.divf %534, %535 : vector<8x384xf32>
    %537 = vector.extract_strided_slice %536 {offsets = [0, 0], sizes = [8, 128], strides = [1, 1]} : vector<8x384xf32> to vector<8x128xf32>
    %538 = vector.extract_strided_slice %536 {offsets = [0, 128], sizes = [8, 128], strides = [1, 1]} : vector<8x384xf32> to vector<8x128xf32>
    %539 = vector.extract_strided_slice %536 {offsets = [0, 256], sizes = [8, 128], strides = [1, 1]} : vector<8x384xf32> to vector<8x128xf32>
    %540 = vector.extract_strided_slice %530 {offsets = [0, 384], sizes = [8, 128], strides = [1, 1]} : vector<8x512xf32> to vector<8x128xf32>
    %541 = math.tanh %540 : vector<8x128xf32>
    %542 = arith.mulf %538, %498 : vector<8x128xf32>
    %543 = arith.mulf %537, %541 : vector<8x128xf32>
    %544 = arith.addf %542, %543 : vector<8x128xf32>
    %545 = math.tanh %544 : vector<8x128xf32>
    %546 = arith.mulf %539, %545 : vector<8x128xf32>
    %547 = arith.truncf %546 : vector<8x128xf32> to vector<8x128xbf16>
    %c0_176 = arith.constant 0 : index
    %c0_177 = arith.constant 0 : index
    %548 = vector.load %arg5[%c0_176, %c0_177] : memref<128x512xbf16, #tpu.memory_space<vmem>>, vector<128x512xbf16>
    %cst_178 = arith.constant dense<0.000000e+00> : vector<8x512xf32>
    %549 = tpu.matmul %522, %548, %cst_178 {dimension_numbers = #tpu.dot_dimension_numbers<[1], [0], [0], [1], [0, 0, 1, 1], [], []>} : vector<8x128xbf16>, vector<128x512xbf16>, vector<8x512xf32> -> vector<8x512xf32>
    %c0_179 = arith.constant 0 : index
    %c0_180 = arith.constant 0 : index
    %550 = vector.load %arg7[%c0_179, %c0_180] : memref<1x512xf32, #tpu.memory_space<vmem>>, vector<1x512xf32>
    %551 = vector.broadcast %550 : vector<1x512xf32> to vector<8x512xf32>
    %552 = arith.addf %549, %551 : vector<8x512xf32>
    %c0_181 = arith.constant 0 : index
    %c0_182 = arith.constant 0 : index
    %553 = vector.load %arg6[%c0_181, %c0_182] : memref<128x512xbf16, #tpu.memory_space<vmem>>, vector<128x512xbf16>
    %cst_183 = arith.constant dense<0.000000e+00> : vector<8x512xf32>
    %554 = tpu.matmul %547, %553, %cst_183 {dimension_numbers = #tpu.dot_dimension_numbers<[1], [0], [0], [1], [0, 0, 1, 1], [], []>} : vector<8x128xbf16>, vector<128x512xbf16>, vector<8x512xf32> -> vector<8x512xf32>
    %555 = arith.addf %552, %554 : vector<8x512xf32>
    %556 = vector.extract_strided_slice %555 {offsets = [0, 0], sizes = [8, 384], strides = [1, 1]} : vector<8x512xf32> to vector<8x384xf32>
    %557 = arith.negf %556 : vector<8x384xf32>
    %558 = math.exp %557 : vector<8x384xf32>
    %cst_184 = arith.constant 1.000000e+00 : f32
    %559 = vector.broadcast %cst_184 : f32 to vector<8x384xf32>
    %560 = arith.addf %559, %558 : vector<8x384xf32>
    %561 = arith.divf %559, %560 : vector<8x384xf32>
    %562 = vector.extract_strided_slice %561 {offsets = [0, 0], sizes = [8, 128], strides = [1, 1]} : vector<8x384xf32> to vector<8x128xf32>
    %563 = vector.extract_strided_slice %561 {offsets = [0, 128], sizes = [8, 128], strides = [1, 1]} : vector<8x384xf32> to vector<8x128xf32>
    %564 = vector.extract_strided_slice %561 {offsets = [0, 256], sizes = [8, 128], strides = [1, 1]} : vector<8x384xf32> to vector<8x128xf32>
    %565 = vector.extract_strided_slice %555 {offsets = [0, 384], sizes = [8, 128], strides = [1, 1]} : vector<8x512xf32> to vector<8x128xf32>
    %566 = math.tanh %565 : vector<8x128xf32>
    %567 = arith.mulf %563, %544 : vector<8x128xf32>
    %568 = arith.mulf %562, %566 : vector<8x128xf32>
    %569 = arith.addf %567, %568 : vector<8x128xf32>
    %570 = math.tanh %569 : vector<8x128xf32>
    %571 = arith.mulf %564, %570 : vector<8x128xf32>
    %c0_185 = arith.constant 0 : index
    %c0_186 = arith.constant 0 : index
    %c0_187 = arith.constant 0 : index
    %572 = vector.load %arg8[%c0_185, %c0_186, %c0_187] : memref<2x8x128xf32, #tpu.memory_space<vmem>>, vector<1x8x128xf32>
    %573 = vector.shape_cast %572 : vector<1x8x128xf32> to vector<8x128xf32>
    %574 = vector.shape_cast %521 : vector<8x128xf32> to vector<1x8x128xf32>
    tpu.vector_store %arg8[%c0_185, %c0_186, %c0_187], %574 {strides = array<i32>} : memref<2x8x128xf32, #tpu.memory_space<vmem>>, vector<1x8x128xf32>,
    %c0_188 = arith.constant 0 : index
    %c0_189 = arith.constant 0 : index
    %c0_190 = arith.constant 0 : index
    %575 = vector.load %arg9[%c0_188, %c0_189, %c0_190] : memref<2x8x128xf32, #tpu.memory_space<vmem>>, vector<1x8x128xf32>
    %576 = vector.shape_cast %575 : vector<1x8x128xf32> to vector<8x128xf32>
    %577 = vector.shape_cast %519 : vector<8x128xf32> to vector<1x8x128xf32>
    tpu.vector_store %arg9[%c0_188, %c0_189, %c0_190], %577 {strides = array<i32>} : memref<2x8x128xf32, #tpu.memory_space<vmem>>, vector<1x8x128xf32>,
    %c1 = arith.constant 1 : index
    %c0_191 = arith.constant 0 : index
    %c0_192 = arith.constant 0 : index
    %578 = vector.load %arg8[%c1, %c0_191, %c0_192] : memref<2x8x128xf32, #tpu.memory_space<vmem>>, vector<1x8x128xf32>
    %579 = vector.shape_cast %578 : vector<1x8x128xf32> to vector<8x128xf32>
    %580 = vector.shape_cast %571 : vector<8x128xf32> to vector<1x8x128xf32>
    tpu.vector_store %arg8[%c1, %c0_191, %c0_192], %580 {strides = array<i32>} : memref<2x8x128xf32, #tpu.memory_space<vmem>>, vector<1x8x128xf32>,
    %c1_193 = arith.constant 1 : index
    %c0_194 = arith.constant 0 : index
    %c0_195 = arith.constant 0 : index
    %581 = vector.load %arg9[%c1_193, %c0_194, %c0_195] : memref<2x8x128xf32, #tpu.memory_space<vmem>>, vector<1x8x128xf32>
    %582 = vector.shape_cast %581 : vector<1x8x128xf32> to vector<8x128xf32>
    %583 = vector.shape_cast %569 : vector<8x128xf32> to vector<1x8x128xf32>
    tpu.vector_store %arg9[%c1_193, %c0_194, %c0_195], %583 {strides = array<i32>} : memref<2x8x128xf32, #tpu.memory_space<vmem>>, vector<1x8x128xf32>,
    return
  }
}

</mosaic_0001>

<llo_original>
// kernel: encoder_forward.1
$region0: #{encoder_forward.1}
  #allocation0 [shape = 'u32[]', space=smem, size = 0x4, offset = 0x4, fixed_abs, tag = 'smem constant byte address 0x4 - core index']
  #allocation1 [shape = 'u32[144,128]{1,0:T(1,128)}', space=vmem, size = 0x12000, scoped, tag = 'internal scratch']
  #allocation2 [shape = 'f32[96,512]{1,0:T(8,128)}', space=vmem, size = 0x30000, scoped, tag = 'scratch operand']
  %s0 = inlined_call_operand.vmem [shape: s32[96,1], index: 0, kind: input, shape index: {}]
  %s1 = inlined_call_operand.vmem [shape: bf16[128,128], index: 1, kind: input, shape index: {}]
  %s2 = inlined_call_operand.hbm [shape: bf16[128,512], index: 2, kind: input, shape index: {}]
  %s3 = inlined_call_operand.hbm [shape: bf16[128,512], index: 3, kind: input, shape index: {}]
  %s4 = inlined_call_operand.vmem [shape: f32[1,512], index: 4, kind: input, shape index: {}]
  %s5 = inlined_call_operand.hbm [shape: bf16[128,512], index: 5, kind: input, shape index: {}]
  %s6 = inlined_call_operand.hbm [shape: bf16[128,512], index: 6, kind: input, shape index: {}]
  %s7 = inlined_call_operand.vmem [shape: f32[1,512], index: 7, kind: input, shape index: {}]
  %s8 = inlined_call_operand.hbm [shape: f32[2,8,128], index: 8, kind: output, shape index: {0}]
  %s9 = inlined_call_operand.hbm [shape: f32[2,8,128], index: 9, kind: output, shape index: {1}]
  %10 = xla_tuple %s8, %s9
  %s11 = sld [smem:[#allocation0]]
  $region66: #{encoder_forward.1} parent=0
    _
  %s13 = ssub.s32 1, %s11
  %s14 = scalar_select 0, %s13, %s11
  $region1: #{encoder_forward.1} parent=0
    #allocation3 [shape = 'u8[131072]{0}', space=vmem, size = 0x20000, scoped, tag = 'input window, operand 2, single buffered']
    #allocation4 [shape = 's32[1]{0}', space=sflag, size = 0x4, scoped, tag = 'scoped memory for encoder_forward.1']
    #allocation5 [shape = 's32[1]{0}', space=sflag, size = 0x4, scoped, tag = 'scoped memory for encoder_forward.1']
    #allocation6 [shape = 'u8[131072]{0}', space=vmem, size = 0x20000, scoped, tag = 'input window, operand 3, single buffered']
    #allocation7 [shape = 's32[1]{0}', space=sflag, size = 0x4, scoped, tag = 'scoped memory for encoder_forward.1']
    #allocation8 [shape = 'u8[131072]{0}', space=vmem, size = 0x20000, scoped, tag = 'input window, operand 5, single buffered']
    #allocation9 [shape = 'u8[131072]{0}', space=vmem, size = 0x20000, scoped, tag = 'input window, operand 6, single buffered']
    #allocation10 [shape = 's32[1]{0}', space=sflag, size = 0x4, scoped, tag = 'scoped memory for encoder_forward.1']
    #allocation11 [shape = 'u8[8192]{0}', space=vmem, size = 0x2000, scoped, tag = 'output window, operand 0, single buffered']
    #allocation12 [shape = 'u8[8192]{0}', space=vmem, size = 0x2000, scoped, tag = 'output window, operand 1, single buffered']
    #allocation13 [shape = 's32[1]{0}', space=sflag, size = 0x4, scoped, tag = 'scoped memory for encoder_forward.1']
    %15 = vsyncpa [#allocation4], 0
    %16 = vsyncpa [#allocation7], 0
    %17 = vsyncpa [#allocation10], 0
    %18 = vsyncpa [#allocation5], 0
    %19 = vsyncpa [#allocation13], 0
    // Predicated region
    $region2: #{encoder_forward.1} parent=1 // pred_check
      _
    $region3: #{encoder_forward.1} parent=1 // pred_check_branch
      %21 = sbr.rel (0) target = $region5
    $region4: #{encoder_forward.1} parent=1 // pred_region
      _
    $region5: #{encoder_forward.1} parent=1 // pred_fallthru
      _
    // Predicated region
    $region6: #{encoder_forward.1} parent=1 // pred_check
      _
    $region7: #{encoder_forward.1} parent=1 // pred_check_branch
      %23 = sbr.rel (0) target = $region9
    $region8: #{encoder_forward.1} parent=1 // pred_region
      _
    $region9: #{encoder_forward.1} parent=1 // pred_fallthru
      _
    // Predicated region
    $region10: #{encoder_forward.1} parent=1 // pred_check
      _
    $region11: #{encoder_forward.1} parent=1 // pred_check_branch
      %25 = sbr.rel (0) target = $region13
    $region12: #{encoder_forward.1} parent=1 // pred_region
      %s27 = ssub.s32 4096, 4096
      %28 = vsyncadd [#allocation4], %s27
      %s29 = sshll.u32 [#allocation3], 4
      %s30 = int_to_ptr.vmem [resolvable:$true] %s29
      %35 = dma.hbm_to_vmem [thread:$0]  %s2, 4096, %s30, [#allocation4], 256, 256, 16
    $region13: #{encoder_forward.1} parent=1 // pred_fallthru
      _
    // Predicated region
    $region14: #{encoder_forward.1} parent=1 // pred_check
      _
    $region15: #{encoder_forward.1} parent=1 // pred_check_branch
      %37 = sbr.rel (0) target = $region17
    $region16: #{encoder_forward.1} parent=1 // pred_region
      %s39 = ssub.s32 4096, 4096
      %40 = vsyncadd [#allocation7], %s39
      %s41 = sshll.u32 [#allocation6], 4
      %s42 = int_to_ptr.vmem [resolvable:$true] %s41
      %47 = dma.hbm_to_vmem [thread:$0]  %s3, 4096, %s42, [#allocation7], 256, 256, 16
    $region17: #{encoder_forward.1} parent=1 // pred_fallthru
      _
    // Predicated region
    $region18: #{encoder_forward.1} parent=1 // pred_check
      _
    $region19: #{encoder_forward.1} parent=1 // pred_check_branch
      %49 = sbr.rel (0) target = $region21
    $region20: #{encoder_forward.1} parent=1 // pred_region
      _
    $region21: #{encoder_forward.1} parent=1 // pred_fallthru
      _
    // Predicated region
    $region22: #{encoder_forward.1} parent=1 // pred_check
      _
    $region23: #{encoder_forward.1} parent=1 // pred_check_branch
      %51 = sbr.rel (0) target = $region25
    $region24: #{encoder_forward.1} parent=1 // pred_region
      %s53 = ssub.s32 4096, 4096
      %54 = vsyncadd [#allocation7], %s53
      %s55 = sshll.u32 [#allocation8], 4
      %s56 = int_to_ptr.vmem [resolvable:$true] %s55
      %61 = dma.hbm_to_vmem [thread:$0]  %s5, 4096, %s56, [#allocation7], 256, 256, 16
    $region25: #{encoder_forward.1} parent=1 // pred_fallthru
      _
    // Predicated region
    $region26: #{encoder_forward.1} parent=1 // pred_check
      _
    $region27: #{encoder_forward.1} parent=1 // pred_check_branch
      %63 = sbr.rel (0) target = $region29
    $region28: #{encoder_forward.1} parent=1 // pred_region
      %s65 = ssub.s32 4096, 4096
      %66 = vsyncadd [#allocation10], %s65
      %s67 = sshll.u32 [#allocation9], 4
      %s68 = int_to_ptr.vmem [resolvable:$true] %s67
      %73 = dma.hbm_to_vmem [thread:$0]  %s6, 4096, %s68, [#allocation10], 256, 256, 16
    $region29: #{encoder_forward.1} parent=1 // pred_fallthru
      _
    // Predicated region
    $region30: #{encoder_forward.1} parent=1 // pred_check
      _
    $region31: #{encoder_forward.1} parent=1 // pred_check_branch
      %75 = sbr.rel (0) target = $region33
    $region32: #{encoder_forward.1} parent=1 // pred_region
      _
    $region33: #{encoder_forward.1} parent=1 // pred_fallthru
      _
    // Predicated region
    $region34: #{encoder_forward.1} parent=1 // pred_check
      _
    $region35: #{encoder_forward.1} parent=1 // pred_check_branch
      %77 = sbr.rel (0) target = $region37
    $region36: #{encoder_forward.1} parent=1 // pred_region
      %78 = dma.done [#allocation4], 4096
    $region37: #{encoder_forward.1} parent=1 // pred_fallthru
      _
    // Predicated region
    $region38: #{encoder_forward.1} parent=1 // pred_check
      _
    $region39: #{encoder_forward.1} parent=1 // pred_check_branch
      %80 = sbr.rel (0) target = $region41
    $region40: #{encoder_forward.1} parent=1 // pred_region
      %81 = dma.done [#allocation7], 4096
    $region41: #{encoder_forward.1} parent=1 // pred_fallthru
      _
    // Predicated region
    $region42: #{encoder_forward.1} parent=1 // pred_check
      _
    $region43: #{encoder_forward.1} parent=1 // pred_check_branch
      %83 = sbr.rel (0) target = $region45
    $region44: #{encoder_forward.1} parent=1 // pred_region
      %84 = dma.done [#allocation7], 4096
    $region45: #{encoder_forward.1} parent=1 // pred_fallthru
      _
    // Predicated region
    $region46: #{encoder_forward.1} parent=1 // pred_check
      _
    $region47: #{encoder_forward.1} parent=1 // pred_check_branch
      %86 = sbr.rel (0) target = $region49
    $region48: #{encoder_forward.1} parent=1 // pred_region
      %87 = dma.done [#allocation10], 4096
    $region49: #{encoder_forward.1} parent=1 // pred_fallthru
      _
    %v89 = vld [vmem:[%s0] sm:$0xff]
    %v90 = vld [vmem:[%s0 + $0x8] sm:$0xff]
    %v91 = vld [vmem:[%s0 + $0x10] sm:$0xff]
    %v92 = vld [vmem:[%s0 + $0x18] sm:$0xff]
    %v93 = vld [vmem:[%s0 + $0x20] sm:$0xff]
    %v94 = vld [vmem:[%s0 + $0x28] sm:$0xff]
    %v95 = vld [vmem:[%s0 + $0x30] sm:$0xff]
    %v96 = vld [vmem:[%s0 + $0x38] sm:$0xff]
    %v97 = vld [vmem:[%s0 + $0x40] sm:$0xff]
    %v98 = vld [vmem:[%s0 + $0x48] sm:$0xff]
    %v99 = vld [vmem:[%s0 + $0x50] sm:$0xff]
    %v100 = vld [vmem:[%s0 + $0x58] sm:$0xff]
    %v101 = vlaneseq
    %v102 = vand.u32 %v101, 127
    %103 = vset.pattern.permute.xlu0 0
    %104 = vperm.xlu0 %103, %v89
    %v105 = vpop.permute.xlu0 %104
    %106 = vset.pattern.permute.xlu0 0
    %107 = vperm.xlu0 %106, %v90
    %v108 = vpop.permute.xlu0 %107
    %109 = vset.pattern.permute.xlu0 0
    %110 = vperm.xlu0 %109, %v91
    %v111 = vpop.permute.xlu0 %110
    %112 = vset.pattern.permute.xlu0 0
    %113 = vperm.xlu0 %112, %v92
    %v114 = vpop.permute.xlu0 %113
    %115 = vset.pattern.permute.xlu0 0
    %116 = vperm.xlu0 %115, %v93
    %v117 = vpop.permute.xlu0 %116
    %118 = vset.pattern.permute.xlu0 0
    %119 = vperm.xlu0 %118, %v94
    %v120 = vpop.permute.xlu0 %119
    %121 = vset.pattern.permute.xlu0 0
    %122 = vperm.xlu0 %121, %v95
    %v123 = vpop.permute.xlu0 %122
    %124 = vset.pattern.permute.xlu0 0
    %125 = vperm.xlu0 %124, %v96
    %v126 = vpop.permute.xlu0 %125
    %127 = vset.pattern.permute.xlu0 0
    %128 = vperm.xlu0 %127, %v97
    %v129 = vpop.permute.xlu0 %128
    %130 = vset.pattern.permute.xlu0 0
    %131 = vperm.xlu0 %130, %v98
    %v132 = vpop.permute.xlu0 %131
    %133 = vset.pattern.permute.xlu0 0
    %134 = vperm.xlu0 %133, %v99
    %v135 = vpop.permute.xlu0 %134
    %136 = vset.pattern.permute.xlu0 0
    %137 = vperm.xlu0 %136, %v100
    %v138 = vpop.permute.xlu0 %137
    %vm139 = vcmp.eq.s32.totalorder %v105, %v102
    %vm140 = vcmp.eq.s32.totalorder %v108, %v102
    %vm141 = vcmp.eq.s32.totalorder %v111, %v102
    %vm142 = vcmp.eq.s32.totalorder %v114, %v102
    %vm143 = vcmp.eq.s32.totalorder %v117, %v102
    %vm144 = vcmp.eq.s32.totalorder %v120, %v102
    %vm145 = vcmp.eq.s32.totalorder %v123, %v102
    %vm146 = vcmp.eq.s32.totalorder %v126, %v102
    %vm147 = vcmp.eq.s32.totalorder %v129, %v102
    %vm148 = vcmp.eq.s32.totalorder %v132, %v102
    %vm149 = vcmp.eq.s32.totalorder %v135, %v102
    %vm150 = vcmp.eq.s32.totalorder %v138, %v102
    %v151 = vsel %vm139, 1.0, 0.0
    %v152 = vsel %vm140, 1.0, 0.0
    %v153 = vsel %vm141, 1.0, 0.0
    %v154 = vsel %vm142, 1.0, 0.0
    %v155 = vsel %vm143, 1.0, 0.0
    %v156 = vsel %vm144, 1.0, 0.0
    %v157 = vsel %vm145, 1.0, 0.0
    %v158 = vsel %vm146, 1.0, 0.0
    %v159 = vsel %vm147, 1.0, 0.0
    %v160 = vsel %vm148, 1.0, 0.0
    %v161 = vsel %vm149, 1.0, 0.0
    %v162 = vsel %vm150, 1.0, 0.0
    %v163 = vpack.c.bf16 %v152, %v151
    %v164 = vpack.c.bf16 %v154, %v153
    %v165 = vpack.c.bf16 %v156, %v155
    %v166 = vpack.c.bf16 %v158, %v157
    %v167 = vpack.c.bf16 %v160, %v159
    %v168 = vpack.c.bf16 %v162, %v161
    %v169 = vld [vmem:[%s1] sm:$0xf]
    %v170 = vld [vmem:[%s1 + $0x4] sm:$0xf]
    %v171 = vld [vmem:[%s1 + $0x8] sm:$0xf]
    %v172 = vld [vmem:[%s1 + $0xc] sm:$0xf]
    %v173 = vld [vmem:[%s1 + $0x10] sm:$0xf]
    %v174 = vld [vmem:[%s1 + $0x14] sm:$0xf]
    %v175 = vld [vmem:[%s1 + $0x18] sm:$0xf]
    %v176 = vld [vmem:[%s1 + $0x1c] sm:$0xf]
    %v177 = vld [vmem:[%s1 + $0x20] sm:$0xf]
    %v178 = vld [vmem:[%s1 + $0x24] sm:$0xf]
    %v179 = vld [vmem:[%s1 + $0x28] sm:$0xf]
    %v180 = vld [vmem:[%s1 + $0x2c] sm:$0xf]
    %v181 = vld [vmem:[%s1 + $0x30] sm:$0xf]
    %v182 = vld [vmem:[%s1 + $0x34] sm:$0xf]
    %v183 = vld [vmem:[%s1 + $0x38] sm:$0xf]
    %v184 = vld [vmem:[%s1 + $0x3c] sm:$0xf]
    %v201 = vunpack.c.l.b16 %v169
    %v202 = vunpack.c.l.b16 %v170
    %v203 = vunpack.c.l.b16 %v171
    %v204 = vunpack.c.l.b16 %v172
    %v205 = vunpack.c.l.b16 %v173
    %v206 = vunpack.c.l.b16 %v174
    %v207 = vunpack.c.l.b16 %v175
    %v208 = vunpack.c.l.b16 %v176
    %v209 = vunpack.c.l.b16 %v177
    %v210 = vunpack.c.l.b16 %v178
    %v211 = vunpack.c.l.b16 %v179
    %v212 = vunpack.c.l.b16 %v180
    %v213 = vunpack.c.l.b16 %v181
    %v214 = vunpack.c.l.b16 %v182
    %v215 = vunpack.c.l.b16 %v183
    %v216 = vunpack.c.l.b16 %v184
    %v217 = vpack.c.b16 %v202, %v201
    %v218 = vpack.c.b16 %v204, %v203
    %v219 = vpack.c.b16 %v206, %v205
    %v220 = vpack.c.b16 %v208, %v207
    %v221 = vpack.c.b16 %v210, %v209
    %v222 = vpack.c.b16 %v212, %v211
    %v223 = vpack.c.b16 %v214, %v213
    %v224 = vpack.c.b16 %v216, %v215
    %233 = vmatprep.subr.bf16.mxu0 0
    %234 = vmatpush1.bf16.msra.mxu0 %v217
    %235 = vmatprep.subr.bf16.mxu0 0
    %236 = vmatpush1.bf16.msra.mxu0 %v218
    %237 = vmatprep.subr.bf16.mxu0 0
    %238 = vmatpush1.bf16.msra.mxu0 %v219
    %239 = vmatprep.subr.bf16.mxu0 0
    %240 = vmatpush1.bf16.msra.mxu0 %v220
    %241 = vmatprep.subr.bf16.mxu0 0
    %242 = vmatpush1.bf16.msra.mxu0 %v221
    %243 = vmatprep.subr.bf16.mxu0 0
    %244 = vmatpush1.bf16.msra.mxu0 %v222
    %245 = vmatprep.subr.bf16.mxu0 0
    %246 = vmatpush1.bf16.msra.mxu0 %v223
    %247 = vmatprep.subr.bf16.mxu0 0
    %248 = vmatpush1.bf16.msra.mxu0 %v224
    %249 = vmatprep.subr.bf16.mxu0 0
    %250 = vmatpush1.bf16.msra.mxu0 0
    %251 = vmatprep.subr.bf16.mxu0 0
    %252 = vmatpush1.bf16.msra.mxu0 0
    %253 = vmatprep.subr.bf16.mxu0 0
    %254 = vmatpush1.bf16.msra.mxu0 0
    %255 = vmatprep.subr.bf16.mxu0 0
    %256 = vmatpush1.bf16.msra.mxu0 0
    %257 = vmatprep.subr.bf16.mxu0 0
    %258 = vmatpush1.bf16.msra.mxu0 0
    %259 = vmatprep.subr.bf16.mxu0 0
    %260 = vmatpush1.bf16.msra.mxu0 0
    %261 = vmatprep.subr.bf16.mxu0 0
    %262 = vmatpush1.bf16.msra.mxu0 0
    %263 = vmatprep.subr.bf16.mxu0 0
    %264 = vmatpush1.bf16.msra.mxu0 0
    %265 = vmatprep.mubr.bf16.mxu0 0
    %266 = vmatmul.mubr.bf16.gmra.mrb[0].mxu0 %v163
    %v267 = vpop.f32.mrb[0].mxu0
    %v268 = vadd.f32 0.0, %v267
    %v269 = vpop.f32.mrb[0].mxu0
    %v270 = vpop.f32.mrb[0].mxu0
    %v271 = vadd.f32 0.0, %v270
    %v272 = vpop.f32.mrb[0].mxu0
    %273 = vmatprep.mubr.bf16.mxu0 0
    %274 = vmatmul.mubr.bf16.gmra.mrb[0].mxu0 %v164
    %v275 = vpop.f32.mrb[0].mxu0
    %v276 = vadd.f32 0.0, %v275
    %v277 = vpop.f32.mrb[0].mxu0
    %v278 = vpop.f32.mrb[0].mxu0
    %v279 = vadd.f32 0.0, %v278
    %v280 = vpop.f32.mrb[0].mxu0
    %281 = vmatprep.mubr.bf16.mxu0 0
    %282 = vmatmul.mubr.bf16.gmra.mrb[0].mxu0 %v165
    %v283 = vpop.f32.mrb[0].mxu0
    %v284 = vadd.f32 0.0, %v283
    %v285 = vpop.f32.mrb[0].mxu0
    %v286 = vpop.f32.mrb[0].mxu0
    %v287 = vadd.f32 0.0, %v286
    %v288 = vpop.f32.mrb[0].mxu0
    %289 = vmatprep.mubr.bf16.mxu0 0
    %290 = vmatmul.mubr.bf16.gmra.mrb[0].mxu0 %v166
    %v291 = vpop.f32.mrb[0].mxu0
    %v292 = vadd.f32 0.0, %v291
    %v293 = vpop.f32.mrb[0].mxu0
    %v294 = vpop.f32.mrb[0].mxu0
    %v295 = vadd.f32 0.0, %v294
    %v296 = vpop.f32.mrb[0].mxu0
    %297 = vmatprep.mubr.bf16.mxu0 0
    %298 = vmatmul.mubr.bf16.gmra.mrb[0].mxu0 %v167
    %v299 = vpop.f32.mrb[0].mxu0
    %v300 = vadd.f32 0.0, %v299
    %v301 = vpop.f32.mrb[0].mxu0
    %v302 = vpop.f32.mrb[0].mxu0
    %v303 = vadd.f32 0.0, %v302
    %v304 = vpop.f32.mrb[0].mxu0
    %305 = vmatprep.mubr.bf16.mxu0 0
    %306 = vmatmul.mubr.bf16.gmra.mrb[0].mxu0 %v168
    %v307 = vpop.f32.mrb[0].mxu0
    %v308 = vadd.f32 0.0, %v307
    %v309 = vpop.f32.mrb[0].mxu0
    %v310 = vpop.f32.mrb[0].mxu0
    %v311 = vadd.f32 0.0, %v310
    %v312 = vpop.f32.mrb[0].mxu0
    %313 = vdwg.mxu0
    %v314 = vpack.c.bf16 %v271, %v268
    %v315 = vpack.c.bf16 %v279, %v276
    %v316 = vpack.c.bf16 %v287, %v284
    %v317 = vpack.c.bf16 %v295, %v292
    %v318 = vpack.c.bf16 %v303, %v300
    %v319 = vpack.c.bf16 %v311, %v308
    %v320 = vld [vmem:[#allocation3] sm:$0xff]
    %v321 = vld [vmem:[#allocation3 + $0x8] sm:$0xff]
    %v322 = vld [vmem:[#allocation3 + $0x10] sm:$0xff]
    %v323 = vld [vmem:[#allocation3 + $0x18] sm:$0xff]
    %v324 = vld [vmem:[#allocation3 + $0x20] sm:$0xff]
    %v325 = vld [vmem:[#allocation3 + $0x28] sm:$0xff]
    %v326 = vld [vmem:[#allocation3 + $0x30] sm:$0xff]
    %v327 = vld [vmem:[#allocation3 + $0x38] sm:$0xff]
    %v328 = vld [vmem:[#allocation3 + $0x40] sm:$0xff]
    %v329 = vld [vmem:[#allocation3 + $0x48] sm:$0xff]
    %v330 = vld [vmem:[#allocation3 + $0x50] sm:$0xff]
    %v331 = vld [vmem:[#allocation3 + $0x58] sm:$0xff]
    %v332 = vld [vmem:[#allocation3 + $0x60] sm:$0xff]
    %v333 = vld [vmem:[#allocation3 + $0x68] sm:$0xff]
    %v334 = vld [vmem:[#allocation3 + $0x70] sm:$0xff]
    %v335 = vld [vmem:[#allocation3 + $0x78] sm:$0xff]
    %v336 = vld [vmem:[#allocation3 + $0x80] sm:$0xff]
    %v337 = vld [vmem:[#allocation3 + $0x88] sm:$0xff]
    %v338 = vld [vmem:[#allocation3 + $0x90] sm:$0xff]
    %v339 = vld [vmem:[#allocation3 + $0x98] sm:$0xff]
    %v340 = vld [vmem:[#allocation3 + $0xa0] sm:$0xff]
    %v341 = vld [vmem:[#allocation3 + $0xa8] sm:$0xff]
    %v342 = vld [vmem:[#allocation3 + $0xb0] sm:$0xff]
    %v343 = vld [vmem:[#allocation3 + $0xb8] sm:$0xff]
    %v344 = vld [vmem:[#allocation3 + $0xc0] sm:$0xff]
    %v345 = vld [vmem:[#allocation3 + $0xc8] sm:$0xff]
    %v346 = vld [vmem:[#allocation3 + $0xd0] sm:$0xff]
    %v347 = vld [vmem:[#allocation3 + $0xd8] sm:$0xff]
    %v348 = vld [vmem:[#allocation3 + $0xe0] sm:$0xff]
    %v349 = vld [vmem:[#allocation3 + $0xe8] sm:$0xff]
    %v350 = vld [vmem:[#allocation3 + $0xf0] sm:$0xff]
    %v351 = vld [vmem:[#allocation3 + $0xf8] sm:$0xff]
    %v352 = vld [vmem:[%s4] sm:$0xf]
    %v354 = vlaneseq
    %v355 = vshrl.u32 %v354, 7
    %v356 = vsub.s32 0, %v355
    %v357 = vrot.slane %v352, %v356
    %v358 = vlaneseq
    %v359 = vshrl.u32 %v358, 7
    %v360 = vsub.s32 1, %v359
    %v361 = vrot.slane %v352, %v360
    %v362 = vlaneseq
    %v363 = vshrl.u32 %v362, 7
    %v364 = vsub.s32 2, %v363
    %v365 = vrot.slane %v352, %v364
    %v366 = vlaneseq
    %v367 = vshrl.u32 %v366, 7
    %v368 = vsub.s32 3, %v367
    %v369 = vrot.slane %v352, %v368
    %v406 = vunpack.c.l.b16 %v320
    %v407 = vunpack.c.h.b16 %v320
    %v408 = vunpack.c.l.b16 %v321
    %v409 = vunpack.c.h.b16 %v321
    %v410 = vunpack.c.l.b16 %v322
    %v411 = vunpack.c.h.b16 %v322
    %v412 = vunpack.c.l.b16 %v323
    %v413 = vunpack.c.h.b16 %v323
    %v414 = vunpack.c.l.b16 %v324
    %v415 = vunpack.c.h.b16 %v324
    %v416 = vunpack.c.l.b16 %v325
    %v417 = vunpack.c.h.b16 %v325
    %v418 = vunpack.c.l.b16 %v326
    %v419 = vunpack.c.h.b16 %v326
    %v420 = vunpack.c.l.b16 %v327
    %v421 = vunpack.c.h.b16 %v327
    %v422 = vunpack.c.l.b16 %v328
    %v423 = vunpack.c.h.b16 %v328
    %v424 = vunpack.c.l.b16 %v329
    %v425 = vunpack.c.h.b16 %v329
    %v426 = vunpack.c.l.b16 %v330
    %v427 = vunpack.c.h.b16 %v330
    %v428 = vunpack.c.l.b16 %v331
    %v429 = vunpack.c.h.b16 %v331
    %v430 = vunpack.c.l.b16 %v332
    %v431 = vunpack.c.h.b16 %v332
    %v432 = vunpack.c.l.b16 %v333
    %v433 = vunpack.c.h.b16 %v333
    %v434 = vunpack.c.l.b16 %v334
    %v435 = vunpack.c.h.b16 %v334
    %v436 = vunpack.c.l.b16 %v335
    %v437 = vunpack.c.h.b16 %v335
    %v438 = vunpack.c.l.b16 %v336
    %v439 = vunpack.c.h.b16 %v336
    %v440 = vunpack.c.l.b16 %v337
    %v441 = vunpack.c.h.b16 %v337
    %v442 = vunpack.c.l.b16 %v338
    %v443 = vunpack.c.h.b16 %v338
    %v444 = vunpack.c.l.b16 %v339
    %v445 = vunpack.c.h.b16 %v339
    %v446 = vunpack.c.l.b16 %v340
    %v447 = vunpack.c.h.b16 %v340
    %v448 = vunpack.c.l.b16 %v341
    %v449 = vunpack.c.h.b16 %v341
    %v450 = vunpack.c.l.b16 %v342
    %v451 = vunpack.c.h.b16 %v342
    %v452 = vunpack.c.l.b16 %v343
    %v453 = vunpack.c.h.b16 %v343
    %v454 = vunpack.c.l.b16 %v344
    %v455 = vunpack.c.h.b16 %v344
    %v456 = vunpack.c.l.b16 %v345
    %v457 = vunpack.c.h.b16 %v345
    %v458 = vunpack.c.l.b16 %v346
    %v459 = vunpack.c.h.b16 %v346
    %v460 = vunpack.c.l.b16 %v347
    %v461 = vunpack.c.h.b16 %v347
    %v462 = vunpack.c.l.b16 %v348
    %v463 = vunpack.c.h.b16 %v348
    %v464 = vunpack.c.l.b16 %v349
    %v465 = vunpack.c.h.b16 %v349
    %v466 = vunpack.c.l.b16 %v350
    %v467 = vunpack.c.h.b16 %v350
    %v468 = vunpack.c.l.b16 %v351
    %v469 = vunpack.c.h.b16 %v351
    %v470 = vpack.c.b16 %v410, %v406
    %v471 = vpack.c.b16 %v411, %v407
    %v472 = vpack.c.b16 %v412, %v408
    %v473 = vpack.c.b16 %v413, %v409
    %v474 = vpack.c.b16 %v418, %v414
    %v475 = vpack.c.b16 %v419, %v415
    %v476 = vpack.c.b16 %v420, %v416
    %v477 = vpack.c.b16 %v421, %v417
    %v478 = vpack.c.b16 %v426, %v422
    %v479 = vpack.c.b16 %v427, %v423
    %v480 = vpack.c.b16 %v428, %v424
    %v481 = vpack.c.b16 %v429, %v425
    %v482 = vpack.c.b16 %v434, %v430
    %v483 = vpack.c.b16 %v435, %v431
    %v484 = vpack.c.b16 %v436, %v432
    %v485 = vpack.c.b16 %v437, %v433
    %v486 = vpack.c.b16 %v442, %v438
    %v487 = vpack.c.b16 %v443, %v439
    %v488 = vpack.c.b16 %v444, %v440
    %v489 = vpack.c.b16 %v445, %v441
    %v490 = vpack.c.b16 %v450, %v446
    %v491 = vpack.c.b16 %v451, %v447
    %v492 = vpack.c.b16 %v452, %v448
    %v493 = vpack.c.b16 %v453, %v449
    %v494 = vpack.c.b16 %v458, %v454
    %v495 = vpack.c.b16 %v459, %v455
    %v496 = vpack.c.b16 %v460, %v456
    %v497 = vpack.c.b16 %v461, %v457
    %v498 = vpack.c.b16 %v466, %v462
    %v499 = vpack.c.b16 %v467, %v463
    %v500 = vpack.c.b16 %v468, %v464
    %v501 = vpack.c.b16 %v469, %v465
    %534 = vmatprep.subr.bf16.mxu0 %v471
    %535 = vmatpush1.bf16.msra.mxu0 %v470
    %536 = vmatprep.subr.bf16.mxu0 %v475
    %537 = vmatpush1.bf16.msra.mxu0 %v474
    %538 = vmatprep.subr.bf16.mxu0 %v479
    %539 = vmatpush1.bf16.msra.mxu0 %v478
    %540 = vmatprep.subr.bf16.mxu0 %v483
    %541 = vmatpush1.bf16.msra.mxu0 %v482
    %542 = vmatprep.subr.bf16.mxu0 %v487
    %543 = vmatpush1.bf16.msra.mxu0 %v486
    %544 = vmatprep.subr.bf16.mxu0 %v491
    %545 = vmatpush1.bf16.msra.mxu0 %v490
    %546 = vmatprep.subr.bf16.mxu0 %v495
    %547 = vmatpush1.bf16.msra.mxu0 %v494
    %548 = vmatprep.subr.bf16.mxu0 %v499
    %549 = vmatpush1.bf16.msra.mxu0 %v498
    %550 = vmatprep.subr.bf16.mxu0 0
    %551 = vmatpush1.bf16.msra.mxu0 0
    %552 = vmatprep.subr.bf16.mxu0 0
    %553 = vmatpush1.bf16.msra.mxu0 0
    %554 = vmatprep.subr.bf16.mxu0 0
    %555 = vmatpush1.bf16.msra.mxu0 0
    %556 = vmatprep.subr.bf16.mxu0 0
    %557 = vmatpush1.bf16.msra.mxu0 0
    %558 = vmatprep.subr.bf16.mxu0 0
    %559 = vmatpush1.bf16.msra.mxu0 0
    %560 = vmatprep.subr.bf16.mxu0 0
    %561 = vmatpush1.bf16.msra.mxu0 0
    %562 = vmatprep.subr.bf16.mxu0 0
    %563 = vmatpush1.bf16.msra.mxu0 0
    %564 = vmatprep.subr.bf16.mxu0 0
    %565 = vmatpush1.bf16.msra.mxu0 0
    %566 = vmatprep.mubr.bf16.mxu0 0
    %567 = vmatmul.mubr.bf16.gmra.mrb[0].mxu0 %v314
    %v568 = vpop.f32.mrb[0].mxu0
    %v569 = vadd.f32 %v357, %v568
    %v570 = vpop.f32.mrb[0].mxu0
    %v571 = vadd.f32 %v361, %v570
    %v572 = vpop.f32.mrb[0].mxu0
    %v573 = vadd.f32 %v357, %v572
    %v574 = vpop.f32.mrb[0].mxu0
    %v575 = vadd.f32 %v361, %v574
    %576 = vmatprep.mubr.bf16.mxu0 0
    %577 = vmatmul.mubr.bf16.gmra.mrb[0].mxu0 %v315
    %v578 = vpop.f32.mrb[0].mxu0
    %v579 = vadd.f32 %v357, %v578
    %v580 = vpop.f32.mrb[0].mxu0
    %v581 = vadd.f32 %v361, %v580
    %v582 = vpop.f32.mrb[0].mxu0
    %v583 = vadd.f32 %v357, %v582
    %v584 = vpop.f32.mrb[0].mxu0
    %v585 = vadd.f32 %v361, %v584
    %586 = vmatprep.mubr.bf16.mxu0 0
    %587 = vmatmul.mubr.bf16.gmra.mrb[0].mxu0 %v316
    %v588 = vpop.f32.mrb[0].mxu0
    %v589 = vadd.f32 %v357, %v588
    %v590 = vpop.f32.mrb[0].mxu0
    %v591 = vadd.f32 %v361, %v590
    %v592 = vpop.f32.mrb[0].mxu0
    %v593 = vadd.f32 %v357, %v592
    %v594 = vpop.f32.mrb[0].mxu0
    %v595 = vadd.f32 %v361, %v594
    %596 = vmatprep.mubr.bf16.mxu0 0
    %597 = vmatmul.mubr.bf16.gmra.mrb[0].mxu0 %v317
    %v598 = vpop.f32.mrb[0].mxu0
    %v599 = vadd.f32 %v357, %v598
    %v600 = vpop.f32.mrb[0].mxu0
    %v601 = vadd.f32 %v361, %v600
    %v602 = vpop.f32.mrb[0].mxu0
    %v603 = vadd.f32 %v357, %v602
    %v604 = vpop.f32.mrb[0].mxu0
    %v605 = vadd.f32 %v361, %v604
    %606 = vmatprep.mubr.bf16.mxu0 0
    %607 = vmatmul.mubr.bf16.gmra.mrb[0].mxu0 %v318
    %v608 = vpop.f32.mrb[0].mxu0
    %v609 = vadd.f32 %v357, %v608
    %v610 = vpop.f32.mrb[0].mxu0
    %v611 = vadd.f32 %v361, %v610
    %v612 = vpop.f32.mrb[0].mxu0
    %v613 = vadd.f32 %v357, %v612
    %v614 = vpop.f32.mrb[0].mxu0
    %v615 = vadd.f32 %v361, %v614
    %616 = vmatprep.mubr.bf16.mxu0 0
    %617 = vmatmul.mubr.bf16.gmra.mrb[0].mxu0 %v319
    %v618 = vpop.f32.mrb[0].mxu0
    %v619 = vadd.f32 %v357, %v618
    %v620 = vpop.f32.mrb[0].mxu0
    %v621 = vadd.f32 %v361, %v620
    %v622 = vpop.f32.mrb[0].mxu0
    %v623 = vadd.f32 %v357, %v622
    %v624 = vpop.f32.mrb[0].mxu0
    %v625 = vadd.f32 %v361, %v624
    %626 = vdwg.mxu0
    %627 = vmatprep.subr.bf16.mxu0 %v473
    %628 = vmatpush1.bf16.msra.mxu0 %v472
    %629 = vmatprep.subr.bf16.mxu0 %v477
    %630 = vmatpush1.bf16.msra.mxu0 %v476
    %631 = vmatprep.subr.bf16.mxu0 %v481
    %632 = vmatpush1.bf16.msra.mxu0 %v480
    %633 = vmatprep.subr.bf16.mxu0 %v485
    %634 = vmatpush1.bf16.msra.mxu0 %v484
    %635 = vmatprep.subr.bf16.mxu0 %v489
    %636 = vmatpush1.bf16.msra.mxu0 %v488
    %637 = vmatprep.subr.bf16.mxu0 %v493
    %638 = vmatpush1.bf16.msra.mxu0 %v492
    %639 = vmatprep.subr.bf16.mxu0 %v497
    %640 = vmatpush1.bf16.msra.mxu0 %v496
    %641 = vmatprep.subr.bf16.mxu0 %v501
    %642 = vmatpush1.bf16.msra.mxu0 %v500
    %643 = vmatprep.subr.bf16.mxu0 0
    %644 = vmatpush1.bf16.msra.mxu0 0
    %645 = vmatprep.subr.bf16.mxu0 0
    %646 = vmatpush1.bf16.msra.mxu0 0
    %647 = vmatprep.subr.bf16.mxu0 0
    %648 = vmatpush1.bf16.msra.mxu0 0
    %649 = vmatprep.subr.bf16.mxu0 0
    %650 = vmatpush1.bf16.msra.mxu0 0
    %651 = vmatprep.subr.bf16.mxu0 0
    %652 = vmatpush1.bf16.msra.mxu0 0
    %653 = vmatprep.subr.bf16.mxu0 0
    %654 = vmatpush1.bf16.msra.mxu0 0
    %655 = vmatprep.subr.bf16.mxu0 0
    %656 = vmatpush1.bf16.msra.mxu0 0
    %657 = vmatprep.subr.bf16.mxu0 0
    %658 = vmatpush1.bf16.msra.mxu0 0
    %659 = vmatprep.mubr.bf16.mxu0 0
    %660 = vmatmul.mubr.bf16.gmra.mrb[0].mxu0 %v314
    %v661 = vpop.f32.mrb[0].mxu0
    %v662 = vadd.f32 %v365, %v661
    %v663 = vpop.f32.mrb[0].mxu0
    %v664 = vadd.f32 %v369, %v663
    %v665 = vpop.f32.mrb[0].mxu0
    %v666 = vadd.f32 %v365, %v665
    %v667 = vpop.f32.mrb[0].mxu0
    %v668 = vadd.f32 %v369, %v667
    %669 = vmatprep.mubr.bf16.mxu0 0
    %670 = vmatmul.mubr.bf16.gmra.mrb[0].mxu0 %v315
    %v671 = vpop.f32.mrb[0].mxu0
    %v672 = vadd.f32 %v365, %v671
    %v673 = vpop.f32.mrb[0].mxu0
    %v674 = vadd.f32 %v369, %v673
    %v675 = vpop.f32.mrb[0].mxu0
    %v676 = vadd.f32 %v365, %v675
    %v677 = vpop.f32.mrb[0].mxu0
    %v678 = vadd.f32 %v369, %v677
    %679 = vmatprep.mubr.bf16.mxu0 0
    %680 = vmatmul.mubr.bf16.gmra.mrb[0].mxu0 %v316
    %v681 = vpop.f32.mrb[0].mxu0
    %v682 = vadd.f32 %v365, %v681
    %v683 = vpop.f32.mrb[0].mxu0
    %v684 = vadd.f32 %v369, %v683
    %v685 = vpop.f32.mrb[0].mxu0
    %v686 = vadd.f32 %v365, %v685
    %v687 = vpop.f32.mrb[0].mxu0
    %v688 = vadd.f32 %v369, %v687
    %689 = vmatprep.mubr.bf16.mxu0 0
    %690 = vmatmul.mubr.bf16.gmra.mrb[0].mxu0 %v317
    %v691 = vpop.f32.mrb[0].mxu0
    %v692 = vadd.f32 %v365, %v691
    %v693 = vpop.f32.mrb[0].mxu0
    %v694 = vadd.f32 %v369, %v693
    %v695 = vpop.f32.mrb[0].mxu0
    %v696 = vadd.f32 %v365, %v695
    %v697 = vpop.f32.mrb[0].mxu0
    %v698 = vadd.f32 %v369, %v697
    %699 = vmatprep.mubr.bf16.mxu0 0
    %700 = vmatmul.mubr.bf16.gmra.mrb[0].mxu0 %v318
    %v701 = vpop.f32.mrb[0].mxu0
    %v702 = vadd.f32 %v365, %v701
    %v703 = vpop.f32.mrb[0].mxu0
    %v704 = vadd.f32 %v369, %v703
    %v705 = vpop.f32.mrb[0].mxu0
    %v706 = vadd.f32 %v365, %v705
    %v707 = vpop.f32.mrb[0].mxu0
    %v708 = vadd.f32 %v369, %v707
    %709 = vmatprep.mubr.bf16.mxu0 0
    %710 = vmatmul.mubr.bf16.gmra.mrb[0].mxu0 %v319
    %v711 = vpop.f32.mrb[0].mxu0
    %v712 = vadd.f32 %v365, %v711
    %v713 = vpop.f32.mrb[0].mxu0
    %v714 = vadd.f32 %v369, %v713
    %v715 = vpop.f32.mrb[0].mxu0
    %v716 = vadd.f32 %v365, %v715
    %v717 = vpop.f32.mrb[0].mxu0
    %v718 = vadd.f32 %v369, %v717
    %719 = vdwg.mxu0
    %720 = vst [vmem:[#allocation2] sm:$0xff] %v569
    %721 = vst [vmem:[#allocation2 + $0x8] sm:$0xff] %v571
    %722 = vst [vmem:[#allocation2 + $0x10] sm:$0xff] %v662
    %723 = vst [vmem:[#allocation2 + $0x18] sm:$0xff] %v664
    %724 = vst [vmem:[#allocation2 + $0x20] sm:$0xff] %v573
    %725 = vst [vmem:[#allocation2 + $0x28] sm:$0xff] %v575
    %726 = vst [vmem:[#allocation2 + $0x30] sm:$0xff] %v666
    %727 = vst [vmem:[#allocation2 + $0x38] sm:$0xff] %v668
    %728 = vst [vmem:[#allocation2 + $0x40] sm:$0xff] %v579
    %729 = vst [vmem:[#allocation2 + $0x48] sm:$0xff] %v581
    %730 = vst [vmem:[#allocation2 + $0x50] sm:$0xff] %v672
    %731 = vst [vmem:[#allocation2 + $0x58] sm:$0xff] %v674
    %732 = vst [vmem:[#allocation2 + $0x60] sm:$0xff] %v583
    %733 = vst [vmem:[#allocation2 + $0x68] sm:$0xff] %v585
    %734 = vst [vmem:[#allocation2 + $0x70] sm:$0xff] %v676
    %735 = vst [vmem:[#allocation2 + $0x78] sm:$0xff] %v678
    %736 = vst [vmem:[#allocation2 + $0x80] sm:$0xff] %v589
    %737 = vst [vmem:[#allocation2 + $0x88] sm:$0xff] %v591
    %738 = vst [vmem:[#allocation2 + $0x90] sm:$0xff] %v682
    %739 = vst [vmem:[#allocation2 + $0x98] sm:$0xff] %v684
    %740 = vst [vmem:[#allocation2 + $0xa0] sm:$0xff] %v593
    %741 = vst [vmem:[#allocation2 + $0xa8] sm:$0xff] %v595
    %742 = vst [vmem:[#allocation2 + $0xb0] sm:$0xff] %v686
    %743 = vst [vmem:[#allocation2 + $0xb8] sm:$0xff] %v688
    %744 = vst [vmem:[#allocation2 + $0xc0] sm:$0xff] %v599
    %745 = vst [vmem:[#allocation2 + $0xc8] sm:$0xff] %v601
    %746 = vst [vmem:[#allocation2 + $0xd0] sm:$0xff] %v692
    %747 = vst [vmem:[#allocation2 + $0xd8] sm:$0xff] %v694
    %748 = vst [vmem:[#allocation2 + $0xe0] sm:$0xff] %v603
    %749 = vst [vmem:[#allocation2 + $0xe8] sm:$0xff] %v605
    %750 = vst [vmem:[#allocation2 + $0xf0] sm:$0xff] %v696
    %751 = vst [vmem:[#allocation2 + $0xf8] sm:$0xff] %v698
    %752 = vst [vmem:[#allocation2 + $0x100] sm:$0xff] %v609
    %753 = vst [vmem:[#allocation2 + $0x108] sm:$0xff] %v611
    %754 = vst [vmem:[#allocation2 + $0x110] sm:$0xff] %v702
    %755 = vst [vmem:[#allocation2 + $0x118] sm:$0xff] %v704
    %756 = vst [vmem:[#allocation2 + $0x120] sm:$0xff] %v613
    %757 = vst [vmem:[#allocation2 + $0x128] sm:$0xff] %v615
    %758 = vst [vmem:[#allocation2 + $0x130] sm:$0xff] %v706
    %759 = vst [vmem:[#allocation2 + $0x138] sm:$0xff] %v708
    %760 = vst [vmem:[#allocation2 + $0x140] sm:$0xff] %v619
    %761 = vst [vmem:[#allocation2 + $0x148] sm:$0xff] %v621
    %762 = vst [vmem:[#allocation2 + $0x150] sm:$0xff] %v712
    %763 = vst [vmem:[#allocation2 + $0x158] sm:$0xff] %v714
    %764 = vst [vmem:[#allocation2 + $0x160] sm:$0xff] %v623
    %765 = vst [vmem:[#allocation2 + $0x168] sm:$0xff] %v625
    %766 = vst [vmem:[#allocation2 + $0x170] sm:$0xff] %v716
    %767 = vst [vmem:[#allocation2 + $0x178] sm:$0xff] %v718
    %v768 = vld [vmem:[#allocation2] sm:$0xff]
    %v769 = vld [vmem:[#allocation2 + $0x8] sm:$0xff]
    %v770 = vld [vmem:[#allocation2 + $0x10] sm:$0xff]
    %v771 = vld [vmem:[#allocation2 + $0x18] sm:$0xff]
    %v772 = vld [vmem:[#allocation6] sm:$0xff]
    %v773 = vld [vmem:[#allocation6 + $0x8] sm:$0xff]
    %v774 = vld [vmem:[#allocation6 + $0x10] sm:$0xff]
    %v775 = vld [vmem:[#allocation6 + $0x18] sm:$0xff]
    %v776 = vld [vmem:[#allocation6 + $0x20] sm:$0xff]
    %v777 = vld [vmem:[#allocation6 + $0x28] sm:$0xff]
    %v778 = vld [vmem:[#allocation6 + $0x30] sm:$0xff]
    %v779 = vld [vmem:[#allocation6 + $0x38] sm:$0xff]
    %v780 = vld [vmem:[#allocation6 + $0x40] sm:$0xff]
    %v781 = vld [vmem:[#allocation6 + $0x48] sm:$0xff]
    %v782 = vld [vmem:[#allocation6 + $0x50] sm:$0xff]
    %v783 = vld [vmem:[#allocation6 + $0x58] sm:$0xff]
    %v784 = vld [vmem:[#allocation6 + $0x60] sm:$0xff]
    %v785 = vld [vmem:[#allocation6 + $0x68] sm:$0xff]
    %v786 = vld [vmem:[#allocation6 + $0x70] sm:$0xff]
    %v787 = vld [vmem:[#allocation6 + $0x78] sm:$0xff]
    %v788 = vld [vmem:[#allocation6 + $0x80] sm:$0xff]
    %v789 = vld [vmem:[#allocation6 + $0x88] sm:$0xff]
    %v790 = vld [vmem:[#allocation6 + $0x90] sm:$0xff]
    %v791 = vld [vmem:[#allocation6 + $0x98] sm:$0xff]
    %v792 = vld [vmem:[#allocation6 + $0xa0] sm:$0xff]
    %v793 = vld [vmem:[#allocation6 + $0xa8] sm:$0xff]
    %v794 = vld [vmem:[#allocation6 + $0xb0] sm:$0xff]
    %v795 = vld [vmem:[#allocation6 + $0xb8] sm:$0xff]
    %v796 = vld [vmem:[#allocation6 + $0xc0] sm:$0xff]
    %v797 = vld [vmem:[#allocation6 + $0xc8] sm:$0xff]
    %v798 = vld [vmem:[#allocation6 + $0xd0] sm:$0xff]
    %v799 = vld [vmem:[#allocation6 + $0xd8] sm:$0xff]
    %v800 = vld [vmem:[#allocation6 + $0xe0] sm:$0xff]
    %v801 = vld [vmem:[#allocation6 + $0xe8] sm:$0xff]
    %v802 = vld [vmem:[#allocation6 + $0xf0] sm:$0xff]
    %v803 = vld [vmem:[#allocation6 + $0xf8] sm:$0xff]
    %v836 = vunpack.c.l.b16 %v772
    %v837 = vunpack.c.h.b16 %v772
    %v838 = vunpack.c.l.b16 %v773
    %v839 = vunpack.c.h.b16 %v773
    %v840 = vunpack.c.l.b16 %v774
    %v841 = vunpack.c.h.b16 %v774
    %v842 = vunpack.c.l.b16 %v775
    %v843 = vunpack.c.h.b16 %v775
    %v844 = vunpack.c.l.b16 %v776
    %v845 = vunpack.c.h.b16 %v776
    %v846 = vunpack.c.l.b16 %v777
    %v847 = vunpack.c.h.b16 %v777
    %v848 = vunpack.c.l.b16 %v778
    %v849 = vunpack.c.h.b16 %v778
    %v850 = vunpack.c.l.b16 %v779
    %v851 = vunpack.c.h.b16 %v779
    %v852 = vunpack.c.l.b16 %v780
    %v853 = vunpack.c.h.b16 %v780
    %v854 = vunpack.c.l.b16 %v781
    %v855 = vunpack.c.h.b16 %v781
    %v856 = vunpack.c.l.b16 %v782
    %v857 = vunpack.c.h.b16 %v782
    %v858 = vunpack.c.l.b16 %v783
    %v859 = vunpack.c.h.b16 %v783
    %v860 = vunpack.c.l.b16 %v784
    %v861 = vunpack.c.h.b16 %v784
    %v862 = vunpack.c.l.b16 %v785
    %v863 = vunpack.c.h.b16 %v785
    %v864 = vunpack.c.l.b16 %v786
    %v865 = vunpack.c.h.b16 %v786
    %v866 = vunpack.c.l.b16 %v787
    %v867 = vunpack.c.h.b16 %v787
    %v868 = vunpack.c.l.b16 %v788
    %v869 = vunpack.c.h.b16 %v788
    %v870 = vunpack.c.l.b16 %v789
    %v871 = vunpack.c.h.b16 %v789
    %v872 = vunpack.c.l.b16 %v790
    %v873 = vunpack.c.h.b16 %v790
    %v874 = vunpack.c.l.b16 %v791
    %v875 = vunpack.c.h.b16 %v791
    %v876 = vunpack.c.l.b16 %v792
    %v877 = vunpack.c.h.b16 %v792
    %v878 = vunpack.c.l.b16 %v793
    %v879 = vunpack.c.h.b16 %v793
    %v880 = vunpack.c.l.b16 %v794
    %v881 = vunpack.c.h.b16 %v794
    %v882 = vunpack.c.l.b16 %v795
    %v883 = vunpack.c.h.b16 %v795
    %v884 = vunpack.c.l.b16 %v796
    %v885 = vunpack.c.h.b16 %v796
    %v886 = vunpack.c.l.b16 %v797
    %v887 = vunpack.c.h.b16 %v797
    %v888 = vunpack.c.l.b16 %v798
    %v889 = vunpack.c.h.b16 %v798
    %v890 = vunpack.c.l.b16 %v799
    %v891 = vunpack.c.h.b16 %v799
    %v892 = vunpack.c.l.b16 %v800
    %v893 = vunpack.c.h.b16 %v800
    %v894 = vunpack.c.l.b16 %v801
    %v895 = vunpack.c.h.b16 %v801
    %v896 = vunpack.c.l.b16 %v802
    %v897 = vunpack.c.h.b16 %v802
    %v898 = vunpack.c.l.b16 %v803
    %v899 = vunpack.c.h.b16 %v803
    %v900 = vpack.c.b16 %v840, %v836
    %v901 = vpack.c.b16 %v841, %v837
    %v902 = vpack.c.b16 %v842, %v838
    %v903 = vpack.c.b16 %v843, %v839
    %v904 = vpack.c.b16 %v848, %v844
    %v905 = vpack.c.b16 %v849, %v845
    %v906 = vpack.c.b16 %v850, %v846
    %v907 = vpack.c.b16 %v851, %v847
    %v908 = vpack.c.b16 %v856, %v852
    %v909 = vpack.c.b16 %v857, %v853
    %v910 = vpack.c.b16 %v858, %v854
    %v911 = vpack.c.b16 %v859, %v855
    %v912 = vpack.c.b16 %v864, %v860
    %v913 = vpack.c.b16 %v865, %v861
    %v914 = vpack.c.b16 %v866, %v862
    %v915 = vpack.c.b16 %v867, %v863
    %v916 = vpack.c.b16 %v872, %v868
    %v917 = vpack.c.b16 %v873, %v869
    %v918 = vpack.c.b16 %v874, %v870
    %v919 = vpack.c.b16 %v875, %v871
    %v920 = vpack.c.b16 %v880, %v876
    %v921 = vpack.c.b16 %v881, %v877
    %v922 = vpack.c.b16 %v882, %v878
    %v923 = vpack.c.b16 %v883, %v879
    %v924 = vpack.c.b16 %v888, %v884
    %v925 = vpack.c.b16 %v889, %v885
    %v926 = vpack.c.b16 %v890, %v886
    %v927 = vpack.c.b16 %v891, %v887
    %v928 = vpack.c.b16 %v896, %v892
    %v929 = vpack.c.b16 %v897, %v893
    %v930 = vpack.c.b16 %v898, %v894
    %v931 = vpack.c.b16 %v899, %v895
    %964 = vmatprep.subr.bf16.mxu0 %v901
    %965 = vmatpush1.bf16.msra.mxu0 %v900
    %966 = vmatprep.subr.bf16.mxu0 %v905
    %967 = vmatpush1.bf16.msra.mxu0 %v904
    %968 = vmatprep.subr.bf16.mxu0 %v909
    %969 = vmatpush1.bf16.msra.mxu0 %v908
    %970 = vmatprep.subr.bf16.mxu0 %v913
    %971 = vmatpush1.bf16.msra.mxu0 %v912
    %972 = vmatprep.subr.bf16.mxu0 %v917
    %973 = vmatpush1.bf16.msra.mxu0 %v916
    %974 = vmatprep.subr.bf16.mxu0 %v921
    %975 = vmatpush1.bf16.msra.mxu0 %v920
    %976 = vmatprep.subr.bf16.mxu0 %v925
    %977 = vmatpush1.bf16.msra.mxu0 %v924
    %978 = vmatprep.subr.bf16.mxu0 %v929
    %979 = vmatpush1.bf16.msra.mxu0 %v928
    %980 = vmatprep.subr.bf16.mxu0 0
    %981 = vmatpush1.bf16.msra.mxu0 0
    %982 = vmatprep.subr.bf16.mxu0 0
    %983 = vmatpush1.bf16.msra.mxu0 0
    %984 = vmatprep.subr.bf16.mxu0 0
    %985 = vmatpush1.bf16.msra.mxu0 0
    %986 = vmatprep.subr.bf16.mxu0 0
    %987 = vmatpush1.bf16.msra.mxu0 0
    %988 = vmatprep.subr.bf16.mxu0 0
    %989 = vmatpush1.bf16.msra.mxu0 0
    %990 = vmatprep.subr.bf16.mxu0 0
    %991 = vmatpush1.bf16.msra.mxu0 0
    %992 = vmatprep.subr.bf16.mxu0 0
    %993 = vmatpush1.bf16.msra.mxu0 0
    %994 = vmatprep.subr.bf16.mxu0 0
    %995 = vmatpush1.bf16.msra.mxu0 0
    %996 = vmatprep.mubr.bf16.mxu0 0
    %997 = vmatmul.mubr.bf16.gmra.mrb[0].mxu0 0
    %v998 = vpop.f32.mrb[0].mxu0
    %v999 = vadd.f32 0.0, %v998
    %v1000 = vpop.f32.mrb[0].mxu0
    %v1001 = vadd.f32 0.0, %v1000
    %v1002 = vpop.f32.mrb[0].mxu0
    %v1003 = vpop.f32.mrb[0].mxu0
    %1004 = vdwg.mxu0
    %1005 = vmatprep.subr.bf16.mxu0 %v903
    %1006 = vmatpush1.bf16.msra.mxu0 %v902
    %1007 = vmatprep.subr.bf16.mxu0 %v907
    %1008 = vmatpush1.bf16.msra.mxu0 %v906
    %1009 = vmatprep.subr.bf16.mxu0 %v911
    %1010 = vmatpush1.bf16.msra.mxu0 %v910
    %1011 = vmatprep.subr.bf16.mxu0 %v915
    %1012 = vmatpush1.bf16.msra.mxu0 %v914
    %1013 = vmatprep.subr.bf16.mxu0 %v919
    %1014 = vmatpush1.bf16.msra.mxu0 %v918
    %1015 = vmatprep.subr.bf16.mxu0 %v923
    %1016 = vmatpush1.bf16.msra.mxu0 %v922
    %1017 = vmatprep.subr.bf16.mxu0 %v927
    %1018 = vmatpush1.bf16.msra.mxu0 %v926
    %1019 = vmatprep.subr.bf16.mxu0 %v931
    %1020 = vmatpush1.bf16.msra.mxu0 %v930
    %1021 = vmatprep.subr.bf16.mxu0 0
    %1022 = vmatpush1.bf16.msra.mxu0 0
    %1023 = vmatprep.subr.bf16.mxu0 0
    %1024 = vmatpush1.bf16.msra.mxu0 0
    %1025 = vmatprep.subr.bf16.mxu0 0
    %1026 = vmatpush1.bf16.msra.mxu0 0
    %1027 = vmatprep.subr.bf16.mxu0 0
    %1028 = vmatpush1.bf16.msra.mxu0 0
    %1029 = vmatprep.subr.bf16.mxu0 0
    %1030 = vmatpush1.bf16.msra.mxu0 0
    %1031 = vmatprep.subr.bf16.mxu0 0
    %1032 = vmatpush1.bf16.msra.mxu0 0
    %1033 = vmatprep.subr.bf16.mxu0 0
    %1034 = vmatpush1.bf16.msra.mxu0 0
    %1035 = vmatprep.subr.bf16.mxu0 0
    %1036 = vmatpush1.bf16.msra.mxu0 0
    %1037 = vmatprep.mubr.bf16.mxu0 0
    %1038 = vmatmul.mubr.bf16.gmra.mrb[0].mxu0 0
    %v1039 = vpop.f32.mrb[0].mxu0
    %v1040 = vadd.f32 0.0, %v1039
    %v1041 = vpop.f32.mrb[0].mxu0
    %v1042 = vadd.f32 0.0, %v1041
    %v1043 = vpop.f32.mrb[0].mxu0
    %v1044 = vpop.f32.mrb[0].mxu0
    %1045 = vdwg.mxu0
    %v1046 = vadd.f32 %v768, %v999
    %v1047 = vadd.f32 %v769, %v1001
    %v1048 = vadd.f32 %v770, %v1040
    %v1049 = vadd.f32 %v771, %v1042
    %v1050 = vxor.u32 %v1046, 2147483648
    %v1051 = vxor.u32 %v1047, 2147483648
    %v1052 = vxor.u32 %v1048, 2147483648
    %v1053 = vmul.f32 %v1050, 1.442695
    %v1054 = vpow.pop %v1053
    %v1055 = vmul.f32 %v1051, 1.442695
    %v1056 = vpow.pop %v1055
    %v1057 = vmul.f32 %v1052, 1.442695
    %v1058 = vpow.pop %v1057
    %v1059 = vadd.f32 %v1054, 1.0
    %v1060 = vadd.f32 %v1056, 1.0
    %v1061 = vadd.f32 %v1058, 1.0
    %v1062 = vrcp.pop %v1059
    %v1063 = vmul.f32 1.0, %v1062
    %v1064 = vrcp.pop %v1060
    %v1065 = vmul.f32 1.0, %v1064
    %v1066 = vrcp.pop %v1061
    %v1067 = vmul.f32 1.0, %v1066
    %v1068 = vtanh.pop %v1049
    %v1069 = vmul.f32 %v1065, 0.0
    %v1070 = vmul.f32 %v1063, %v1068
    %v1071 = vadd.f32 %v1069, %v1070
    %v1072 = vtanh.pop %v1071
    %v1073 = vmul.f32 %v1067, %v1072
    %v1074 = vpack.c.bf16 %v1073, %v1073
    %v1075 = vld [vmem:[#allocation2 + $0x20] sm:$0xff]
    %v1076 = vld [vmem:[#allocation2 + $0x28] sm:$0xff]
    %v1077 = vld [vmem:[#allocation2 + $0x30] sm:$0xff]
    %v1078 = vld [vmem:[#allocation2 + $0x38] sm:$0xff]
    %1079 = vmatprep.subr.bf16.mxu0 %v901
    %1080 = vmatpush1.bf16.msra.mxu0 %v900
    %1081 = vmatprep.subr.bf16.mxu0 %v905
    %1082 = vmatpush1.bf16.msra.mxu0 %v904
    %1083 = vmatprep.subr.bf16.mxu0 %v909
    %1084 = vmatpush1.bf16.msra.mxu0 %v908
    %1085 = vmatprep.subr.bf16.mxu0 %v913
    %1086 = vmatpush1.bf16.msra.mxu0 %v912
    %1087 = vmatprep.subr.bf16.mxu0 %v917
    %1088 = vmatpush1.bf16.msra.mxu0 %v916
    %1089 = vmatprep.subr.bf16.mxu0 %v921
    %1090 = vmatpush1.bf16.msra.mxu0 %v920
    %1091 = vmatprep.subr.bf16.mxu0 %v925
    %1092 = vmatpush1.bf16.msra.mxu0 %v924
    %1093 = vmatprep.subr.bf16.mxu0 %v929
    %1094 = vmatpush1.bf16.msra.mxu0 %v928
    %1095 = vmatprep.subr.bf16.mxu0 0
    %1096 = vmatpush1.bf16.msra.mxu0 0
    %1097 = vmatprep.subr.bf16.mxu0 0
    %1098 = vmatpush1.bf16.msra.mxu0 0
    %1099 = vmatprep.subr.bf16.mxu0 0
    %1100 = vmatpush1.bf16.msra.mxu0 0
    %1101 = vmatprep.subr.bf16.mxu0 0
    %1102 = vmatpush1.bf16.msra.mxu0 0
    %1103 = vmatprep.subr.bf16.mxu0 0
    %1104 = vmatpush1.bf16.msra.mxu0 0
    %1105 = vmatprep.subr.bf16.mxu0 0
    %1106 = vmatpush1.bf16.msra.mxu0 0
    %1107 = vmatprep.subr.bf16.mxu0 0
    %1108 = vmatpush1.bf16.msra.mxu0 0
    %1109 = vmatprep.subr.bf16.mxu0 0
    %1110 = vmatpush1.bf16.msra.mxu0 0
    %1111 = vmatprep.mubr.bf16.mxu0 0
    %1112 = vmatmul.mubr.bf16.gmra.mrb[0].mxu0 %v1074
    %v1113 = vpop.f32.mrb[0].mxu0
    %v1114 = vadd.f32 0.0, %v1113
    %v1115 = vpop.f32.mrb[0].mxu0
    %v1116 = vadd.f32 0.0, %v1115
    %v1117 = vpop.f32.mrb[0].mxu0
    %v1118 = vpop.f32.mrb[0].mxu0
    %1119 = vdwg.mxu0
    %1120 = vmatprep.subr.bf16.mxu0 %v903
    %1121 = vmatpush1.bf16.msra.mxu0 %v902
    %1122 = vmatprep.subr.bf16.mxu0 %v907
    %1123 = vmatpush1.bf16.msra.mxu0 %v906
    %1124 = vmatprep.subr.bf16.mxu0 %v911
    %1125 = vmatpush1.bf16.msra.mxu0 %v910
    %1126 = vmatprep.subr.bf16.mxu0 %v915
    %1127 = vmatpush1.bf16.msra.mxu0 %v914
    %1128 = vmatprep.subr.bf16.mxu0 %v919
    %1129 = vmatpush1.bf16.msra.mxu0 %v918
    %1130 = vmatprep.subr.bf16.mxu0 %v923
    %1131 = vmatpush1.bf16.msra.mxu0 %v922
    %1132 = vmatprep.subr.bf16.mxu0 %v927
    %1133 = vmatpush1.bf16.msra.mxu0 %v926
    %1134 = vmatprep.subr.bf16.mxu0 %v931
    %1135 = vmatpush1.bf16.msra.mxu0 %v930
    %1136 = vmatprep.subr.bf16.mxu0 0
    %1137 = vmatpush1.bf16.msra.mxu0 0
    %1138 = vmatprep.subr.bf16.mxu0 0
    %1139 = vmatpush1.bf16.msra.mxu0 0
    %1140 = vmatprep.subr.bf16.mxu0 0
    %1141 = vmatpush1.bf16.msra.mxu0 0
    %1142 = vmatprep.subr.bf16.mxu0 0
    %1143 = vmatpush1.bf16.msra.mxu0 0
    %1144 = vmatprep.subr.bf16.mxu0 0
    %1145 = vmatpush1.bf16.msra.mxu0 0
    %1146 = vmatprep.subr.bf16.mxu0 0
    %1147 = vmatpush1.bf16.msra.mxu0 0
    %1148 = vmatprep.subr.bf16.mxu0 0
    %1149 = vmatpush1.bf16.msra.mxu0 0
    %1150 = vmatprep.subr.bf16.mxu0 0
    %1151 = vmatpush1.bf16.msra.mxu0 0
    %1152 = vmatprep.mubr.bf16.mxu0 0
    %1153 = vmatmul.mubr.bf16.gmra.mrb[0].mxu0 %v1074
    %v1154 = vpop.f32.mrb[0].mxu0
    %v1155 = vadd.f32 0.0, %v1154
    %v1156 = vpop.f32.mrb[0].mxu0
    %v1157 = vadd.f32 0.0, %v1156
    %v1158 = vpop.f32.mrb[0].mxu0
    %v1159 = vpop.f32.mrb[0].mxu0
    %1160 = vdwg.mxu0
    %v1161 = vadd.f32 %v1075, %v1114
    %v1162 = vadd.f32 %v1076, %v1116
    %v1163 = vadd.f32 %v1077, %v1155
    %v1164 = vadd.f32 %v1078, %v1157
    %v1165 = vxor.u32 %v1161, 2147483648
    %v1166 = vxor.u32 %v1162, 2147483648
    %v1167 = vxor.u32 %v1163, 2147483648
    %v1168 = vmul.f32 %v1165, 1.442695
    %v1169 = vpow.pop %v1168
    %v1170 = vmul.f32 %v1166, 1.442695
    %v1171 = vpow.pop %v1170
    %v1172 = vmul.f32 %v1167, 1.442695
    %v1173 = vpow.pop %v1172
    %v1174 = vadd.f32 %v1169, 1.0
    %v1175 = vadd.f32 %v1171, 1.0
    %v1176 = vadd.f32 %v1173, 1.0
    %v1177 = vrcp.pop %v1174
    %v1178 = vmul.f32 1.0, %v1177
    %v1179 = vrcp.pop %v1175
    %v1180 = vmul.f32 1.0, %v1179
    %v1181 = vrcp.pop %v1176
    %v1182 = vmul.f32 1.0, %v1181
    %v1183 = vtanh.pop %v1164
    %v1184 = vmul.f32 %v1180, %v1071
    %v1185 = vmul.f32 %v1178, %v1183
    %v1186 = vadd.f32 %v1184, %v1185
    %v1187 = vtanh.pop %v1186
    %v1188 = vmul.f32 %v1182, %v1187
    %v1189 = vpack.c.bf16 %v1188, %v1188
    %v1190 = vld [vmem:[#allocation8] sm:$0xff]
    %v1191 = vld [vmem:[#allocation8 + $0x8] sm:$0xff]
    %v1192 = vld [vmem:[#allocation8 + $0x10] sm:$0xff]
    %v1193 = vld [vmem:[#allocation8 + $0x18] sm:$0xff]
    %v1194 = vld [vmem:[#allocation8 + $0x20] sm:$0xff]
    %v1195 = vld [vmem:[#allocation8 + $0x28] sm:$0xff]
    %v1196 = vld [vmem:[#allocation8 + $0x30] sm:$0xff]
    %v1197 = vld [vmem:[#allocation8 + $0x38] sm:$0xff]
    %v1198 = vld [vmem:[#allocation8 + $0x40] sm:$0xff]
    %v1199 = vld [vmem:[#allocation8 + $0x48] sm:$0xff]
    %v1200 = vld [vmem:[#allocation8 + $0x50] sm:$0xff]
    %v1201 = vld [vmem:[#allocation8 + $0x58] sm:$0xff]
    %v1202 = vld [vmem:[#allocation8 + $0x60] sm:$0xff]
    %v1203 = vld [vmem:[#allocation8 + $0x68] sm:$0xff]
    %v1204 = vld [vmem:[#allocation8 + $0x70] sm:$0xff]
    %v1205 = vld [vmem:[#allocation8 + $0x78] sm:$0xff]
    %v1206 = vld [vmem:[#allocation8 + $0x80] sm:$0xff]
    %v1207 = vld [vmem:[#allocation8 + $0x88] sm:$0xff]
    %v1208 = vld [vmem:[#allocation8 + $0x90] sm:$0xff]
    %v1209 = vld [vmem:[#allocation8 + $0x98] sm:$0xff]
    %v1210 = vld [vmem:[#allocation8 + $0xa0] sm:$0xff]
    %v1211 = vld [vmem:[#allocation8 + $0xa8] sm:$0xff]
    %v1212 = vld [vmem:[#allocation8 + $0xb0] sm:$0xff]
    %v1213 = vld [vmem:[#allocation8 + $0xb8] sm:$0xff]
    %v1214 = vld [vmem:[#allocation8 + $0xc0] sm:$0xff]
    %v1215 = vld [vmem:[#allocation8 + $0xc8] sm:$0xff]
    %v1216 = vld [vmem:[#allocation8 + $0xd0] sm:$0xff]
    %v1217 = vld [vmem:[#allocation8 + $0xd8] sm:$0xff]
    %v1218 = vld [vmem:[#allocation8 + $0xe0] sm:$0xff]
    %v1219 = vld [vmem:[#allocation8 + $0xe8] sm:$0xff]
    %v1220 = vld [vmem:[#allocation8 + $0xf0] sm:$0xff]
    %v1221 = vld [vmem:[#allocation8 + $0xf8] sm:$0xff]
    %v1222 = vld [vmem:[%s7] sm:$0xf]
    %v1224 = vlaneseq
    %v1225 = vshrl.u32 %v1224, 7
    %v1226 = vsub.s32 0, %v1225
    %v1227 = vrot.slane %v1222, %v1226
    %v1228 = vlaneseq
    %v1229 = vshrl.u32 %v1228, 7
    %v1230 = vsub.s32 1, %v1229
    %v1231 = vrot.slane %v1222, %v1230
    %v1232 = vlaneseq
    %v1233 = vshrl.u32 %v1232, 7
    %v1234 = vsub.s32 2, %v1233
    %v1235 = vrot.slane %v1222, %v1234
    %v1236 = vlaneseq
    %v1237 = vshrl.u32 %v1236, 7
    %v1238 = vsub.s32 3, %v1237
    %v1239 = vrot.slane %v1222, %v1238
    %v1276 = vunpack.c.l.b16 %v1190
    %v1277 = vunpack.c.h.b16 %v1190
    %v1278 = vunpack.c.l.b16 %v1191
    %v1279 = vunpack.c.h.b16 %v1191
    %v1280 = vunpack.c.l.b16 %v1192
    %v1281 = vunpack.c.h.b16 %v1192
    %v1282 = vunpack.c.l.b16 %v1193
    %v1283 = vunpack.c.h.b16 %v1193
    %v1284 = vunpack.c.l.b16 %v1194
    %v1285 = vunpack.c.h.b16 %v1194
    %v1286 = vunpack.c.l.b16 %v1195
    %v1287 = vunpack.c.h.b16 %v1195
    %v1288 = vunpack.c.l.b16 %v1196
    %v1289 = vunpack.c.h.b16 %v1196
    %v1290 = vunpack.c.l.b16 %v1197
    %v1291 = vunpack.c.h.b16 %v1197
    %v1292 = vunpack.c.l.b16 %v1198
    %v1293 = vunpack.c.h.b16 %v1198
    %v1294 = vunpack.c.l.b16 %v1199
    %v1295 = vunpack.c.h.b16 %v1199
    %v1296 = vunpack.c.l.b16 %v1200
    %v1297 = vunpack.c.h.b16 %v1200
    %v1298 = vunpack.c.l.b16 %v1201
    %v1299 = vunpack.c.h.b16 %v1201
    %v1300 = vunpack.c.l.b16 %v1202
    %v1301 = vunpack.c.h.b16 %v1202
    %v1302 = vunpack.c.l.b16 %v1203
    %v1303 = vunpack.c.h.b16 %v1203
    %v1304 = vunpack.c.l.b16 %v1204
    %v1305 = vunpack.c.h.b16 %v1204
    %v1306 = vunpack.c.l.b16 %v1205
    %v1307 = vunpack.c.h.b16 %v1205
    %v1308 = vunpack.c.l.b16 %v1206
    %v1309 = vunpack.c.h.b16 %v1206
    %v1310 = vunpack.c.l.b16 %v1207
    %v1311 = vunpack.c.h.b16 %v1207
    %v1312 = vunpack.c.l.b16 %v1208
    %v1313 = vunpack.c.h.b16 %v1208
    %v1314 = vunpack.c.l.b16 %v1209
    %v1315 = vunpack.c.h.b16 %v1209
    %v1316 = vunpack.c.l.b16 %v1210
    %v1317 = vunpack.c.h.b16 %v1210
    %v1318 = vunpack.c.l.b16 %v1211
    %v1319 = vunpack.c.h.b16 %v1211
    %v1320 = vunpack.c.l.b16 %v1212
    %v1321 = vunpack.c.h.b16 %v1212
    %v1322 = vunpack.c.l.b16 %v1213
    %v1323 = vunpack.c.h.b16 %v1213
    %v1324 = vunpack.c.l.b16 %v1214
    %v1325 = vunpack.c.h.b16 %v1214
    %v1326 = vunpack.c.l.b16 %v1215
    %v1327 = vunpack.c.h.b16 %v1215
    %v1328 = vunpack.c.l.b16 %v1216
    %v1329 = vunpack.c.h.b16 %v1216
    %v1330 = vunpack.c.l.b16 %v1217
    %v1331 = vunpack.c.h.b16 %v1217
    %v1332 = vunpack.c.l.b16 %v1218
    %v1333 = vunpack.c.h.b16 %v1218
    %v1334 = vunpack.c.l.b16 %v1219
    %v1335 = vunpack.c.h.b16 %v1219
    %v1336 = vunpack.c.l.b16 %v1220
    %v1337 = vunpack.c.h.b16 %v1220
    %v1338 = vunpack.c.l.b16 %v1221
    %v1339 = vunpack.c.h.b16 %v1221
    %v1340 = vpack.c.b16 %v1280, %v1276
    %v1341 = vpack.c.b16 %v1281, %v1277
    %v1342 = vpack.c.b16 %v1282, %v1278
    %v1343 = vpack.c.b16 %v1283, %v1279
    %v1344 = vpack.c.b16 %v1288, %v1284
    %v1345 = vpack.c.b16 %v1289, %v1285
    %v1346 = vpack.c.b16 %v1290, %v1286
    %v1347 = vpack.c.b16 %v1291, %v1287
    %v1348 = vpack.c.b16 %v1296, %v1292
    %v1349 = vpack.c.b16 %v1297, %v1293
    %v1350 = vpack.c.b16 %v1298, %v1294
    %v1351 = vpack.c.b16 %v1299, %v1295
    %v1352 = vpack.c.b16 %v1304, %v1300
    %v1353 = vpack.c.b16 %v1305, %v1301
    %v1354 = vpack.c.b16 %v1306, %v1302
    %v1355 = vpack.c.b16 %v1307, %v1303
    %v1356 = vpack.c.b16 %v1312, %v1308
    %v1357 = vpack.c.b16 %v1313, %v1309
    %v1358 = vpack.c.b16 %v1314, %v1310
    %v1359 = vpack.c.b16 %v1315, %v1311
    %v1360 = vpack.c.b16 %v1320, %v1316
    %v1361 = vpack.c.b16 %v1321, %v1317
    %v1362 = vpack.c.b16 %v1322, %v1318
    %v1363 = vpack.c.b16 %v1323, %v1319
    %v1364 = vpack.c.b16 %v1328, %v1324
    %v1365 = vpack.c.b16 %v1329, %v1325
    %v1366 = vpack.c.b16 %v1330, %v1326
    %v1367 = vpack.c.b16 %v1331, %v1327
    %v1368 = vpack.c.b16 %v1336, %v1332
    %v1369 = vpack.c.b16 %v1337, %v1333
    %v1370 = vpack.c.b16 %v1338, %v1334
    %v1371 = vpack.c.b16 %v1339, %v1335
    %1404 = vmatprep.subr.bf16.mxu0 %v1341
    %1405 = vmatpush1.bf16.msra.mxu0 %v1340
    %1406 = vmatprep.subr.bf16.mxu0 %v1345
    %1407 = vmatpush1.bf16.msra.mxu0 %v1344
    %1408 = vmatprep.subr.bf16.mxu0 %v1349
    %1409 = vmatpush1.bf16.msra.mxu0 %v1348
    %1410 = vmatprep.subr.bf16.mxu0 %v1353
    %1411 = vmatpush1.bf16.msra.mxu0 %v1352
    %1412 = vmatprep.subr.bf16.mxu0 %v1357
    %1413 = vmatpush1.bf16.msra.mxu0 %v1356
    %1414 = vmatprep.subr.bf16.mxu0 %v1361
    %1415 = vmatpush1.bf16.msra.mxu0 %v1360
    %1416 = vmatprep.subr.bf16.mxu0 %v1365
    %1417 = vmatpush1.bf16.msra.mxu0 %v1364
    %1418 = vmatprep.subr.bf16.mxu0 %v1369
    %1419 = vmatpush1.bf16.msra.mxu0 %v1368
    %1420 = vmatprep.subr.bf16.mxu0 0
    %1421 = vmatpush1.bf16.msra.mxu0 0
    %1422 = vmatprep.subr.bf16.mxu0 0
    %1423 = vmatpush1.bf16.msra.mxu0 0
    %1424 = vmatprep.subr.bf16.mxu0 0
    %1425 = vmatpush1.bf16.msra.mxu0 0
    %1426 = vmatprep.subr.bf16.mxu0 0
    %1427 = vmatpush1.bf16.msra.mxu0 0
    %1428 = vmatprep.subr.bf16.mxu0 0
    %1429 = vmatpush1.bf16.msra.mxu0 0
    %1430 = vmatprep.subr.bf16.mxu0 0
    %1431 = vmatpush1.bf16.msra.mxu0 0
    %1432 = vmatprep.subr.bf16.mxu0 0
    %1433 = vmatpush1.bf16.msra.mxu0 0
    %1434 = vmatprep.subr.bf16.mxu0 0
    %1435 = vmatpush1.bf16.msra.mxu0 0
    %1436 = vmatprep.mubr.bf16.mxu0 0
    %1437 = vmatmul.mubr.bf16.gmra.mrb[0].mxu0 %v1074
    %v1438 = vpop.f32.mrb[0].mxu0
    %v1439 = vadd.f32 %v1227, %v1438
    %v1440 = vpop.f32.mrb[0].mxu0
    %v1441 = vadd.f32 %v1231, %v1440
    %v1442 = vpop.f32.mrb[0].mxu0
    %v1443 = vpop.f32.mrb[0].mxu0
    %1444 = vdwg.mxu0
    %1445 = vmatprep.subr.bf16.mxu0 %v1343
    %1446 = vmatpush1.bf16.msra.mxu0 %v1342
    %1447 = vmatprep.subr.bf16.mxu0 %v1347
    %1448 = vmatpush1.bf16.msra.mxu0 %v1346
    %1449 = vmatprep.subr.bf16.mxu0 %v1351
    %1450 = vmatpush1.bf16.msra.mxu0 %v1350
    %1451 = vmatprep.subr.bf16.mxu0 %v1355
    %1452 = vmatpush1.bf16.msra.mxu0 %v1354
    %1453 = vmatprep.subr.bf16.mxu0 %v1359
    %1454 = vmatpush1.bf16.msra.mxu0 %v1358
    %1455 = vmatprep.subr.bf16.mxu0 %v1363
    %1456 = vmatpush1.bf16.msra.mxu0 %v1362
    %1457 = vmatprep.subr.bf16.mxu0 %v1367
    %1458 = vmatpush1.bf16.msra.mxu0 %v1366
    %1459 = vmatprep.subr.bf16.mxu0 %v1371
    %1460 = vmatpush1.bf16.msra.mxu0 %v1370
    %1461 = vmatprep.subr.bf16.mxu0 0
    %1462 = vmatpush1.bf16.msra.mxu0 0
    %1463 = vmatprep.subr.bf16.mxu0 0
    %1464 = vmatpush1.bf16.msra.mxu0 0
    %1465 = vmatprep.subr.bf16.mxu0 0
    %1466 = vmatpush1.bf16.msra.mxu0 0
    %1467 = vmatprep.subr.bf16.mxu0 0
    %1468 = vmatpush1.bf16.msra.mxu0 0
    %1469 = vmatprep.subr.bf16.mxu0 0
    %1470 = vmatpush1.bf16.msra.mxu0 0
    %1471 = vmatprep.subr.bf16.mxu0 0
    %1472 = vmatpush1.bf16.msra.mxu0 0
    %1473 = vmatprep.subr.bf16.mxu0 0
    %1474 = vmatpush1.bf16.msra.mxu0 0
    %1475 = vmatprep.subr.bf16.mxu0 0
    %1476 = vmatpush1.bf16.msra.mxu0 0
    %1477 = vmatprep.mubr.bf16.mxu0 0
    %1478 = vmatmul.mubr.bf16.gmra.mrb[0].mxu0 %v1074
    %v1479 = vpop.f32.mrb[0].mxu0
    %v1480 = vadd.f32 %v1235, %v1479
    %v1481 = vpop.f32.mrb[0].mxu0
    %v1482 = vadd.f32 %v1239, %v1481
    %v1483 = vpop.f32.mrb[0].mxu0
    %v1484 = vpop.f32.mrb[0].mxu0
    %1485 = vdwg.mxu0
    %v1486 = vld [vmem:[#allocation9] sm:$0xff]
    %v1487 = vld [vmem:[#allocation9 + $0x8] sm:$0xff]
    %v1488 = vld [vmem:[#allocation9 + $0x10] sm:$0xff]
    %v1489 = vld [vmem:[#allocation9 + $0x18] sm:$0xff]
    %v1490 = vld [vmem:[#allocation9 + $0x20] sm:$0xff]
    %v1491 = vld [vmem:[#allocation9 + $0x28] sm:$0xff]
    %v1492 = vld [vmem:[#allocation9 + $0x30] sm:$0xff]
    %v1493 = vld [vmem:[#allocation9 + $0x38] sm:$0xff]
    %v1494 = vld [vmem:[#allocation9 + $0x40] sm:$0xff]
    %v1495 = vld [vmem:[#allocation9 + $0x48] sm:$0xff]
    %v1496 = vld [vmem:[#allocation9 + $0x50] sm:$0xff]
    %v1497 = vld [vmem:[#allocation9 + $0x58] sm:$0xff]
    %v1498 = vld [vmem:[#allocation9 + $0x60] sm:$0xff]
    %v1499 = vld [vmem:[#allocation9 + $0x68] sm:$0xff]
    %v1500 = vld [vmem:[#allocation9 + $0x70] sm:$0xff]
    %v1501 = vld [vmem:[#allocation9 + $0x78] sm:$0xff]
    %v1502 = vld [vmem:[#allocation9 + $0x80] sm:$0xff]
    %v1503 = vld [vmem:[#allocation9 + $0x88] sm:$0xff]
    %v1504 = vld [vmem:[#allocation9 + $0x90] sm:$0xff]
    %v1505 = vld [vmem:[#allocation9 + $0x98] sm:$0xff]
    %v1506 = vld [vmem:[#allocation9 + $0xa0] sm:$0xff]
    %v1507 = vld [vmem:[#allocation9 + $0xa8] sm:$0xff]
    %v1508 = vld [vmem:[#allocation9 + $0xb0] sm:$0xff]
    %v1509 = vld [vmem:[#allocation9 + $0xb8] sm:$0xff]
    %v1510 = vld [vmem:[#allocation9 + $0xc0] sm:$0xff]
    %v1511 = vld [vmem:[#allocation9 + $0xc8] sm:$0xff]
    %v1512 = vld [vmem:[#allocation9 + $0xd0] sm:$0xff]
    %v1513 = vld [vmem:[#allocation9 + $0xd8] sm:$0xff]
    %v1514 = vld [vmem:[#allocation9 + $0xe0] sm:$0xff]
    %v1515 = vld [vmem:[#allocation9 + $0xe8] sm:$0xff]
    %v1516 = vld [vmem:[#allocation9 + $0xf0] sm:$0xff]
    %v1517 = vld [vmem:[#allocation9 + $0xf8] sm:$0xff]
    %v1550 = vunpack.c.l.b16 %v1486
    %v1551 = vunpack.c.h.b16 %v1486
    %v1552 = vunpack.c.l.b16 %v1487
    %v1553 = vunpack.c.h.b16 %v1487
    %v1554 = vunpack.c.l.b16 %v1488
    %v1555 = vunpack.c.h.b16 %v1488
    %v1556 = vunpack.c.l.b16 %v1489
    %v1557 = vunpack.c.h.b16 %v1489
    %v1558 = vunpack.c.l.b16 %v1490
    %v1559 = vunpack.c.h.b16 %v1490
    %v1560 = vunpack.c.l.b16 %v1491
    %v1561 = vunpack.c.h.b16 %v1491
    %v1562 = vunpack.c.l.b16 %v1492
    %v1563 = vunpack.c.h.b16 %v1492
    %v1564 = vunpack.c.l.b16 %v1493
    %v1565 = vunpack.c.h.b16 %v1493
    %v1566 = vunpack.c.l.b16 %v1494
    %v1567 = vunpack.c.h.b16 %v1494
    %v1568 = vunpack.c.l.b16 %v1495
    %v1569 = vunpack.c.h.b16 %v1495
    %v1570 = vunpack.c.l.b16 %v1496
    %v1571 = vunpack.c.h.b16 %v1496
    %v1572 = vunpack.c.l.b16 %v1497
    %v1573 = vunpack.c.h.b16 %v1497
    %v1574 = vunpack.c.l.b16 %v1498
    %v1575 = vunpack.c.h.b16 %v1498
    %v1576 = vunpack.c.l.b16 %v1499
    %v1577 = vunpack.c.h.b16 %v1499
    %v1578 = vunpack.c.l.b16 %v1500
    %v1579 = vunpack.c.h.b16 %v1500
    %v1580 = vunpack.c.l.b16 %v1501
    %v1581 = vunpack.c.h.b16 %v1501
    %v1582 = vunpack.c.l.b16 %v1502
    %v1583 = vunpack.c.h.b16 %v1502
    %v1584 = vunpack.c.l.b16 %v1503
    %v1585 = vunpack.c.h.b16 %v1503
    %v1586 = vunpack.c.l.b16 %v1504
    %v1587 = vunpack.c.h.b16 %v1504
    %v1588 = vunpack.c.l.b16 %v1505
    %v1589 = vunpack.c.h.b16 %v1505
    %v1590 = vunpack.c.l.b16 %v1506
    %v1591 = vunpack.c.h.b16 %v1506
    %v1592 = vunpack.c.l.b16 %v1507
    %v1593 = vunpack.c.h.b16 %v1507
    %v1594 = vunpack.c.l.b16 %v1508
    %v1595 = vunpack.c.h.b16 %v1508
    %v1596 = vunpack.c.l.b16 %v1509
    %v1597 = vunpack.c.h.b16 %v1509
    %v1598 = vunpack.c.l.b16 %v1510
    %v1599 = vunpack.c.h.b16 %v1510
    %v1600 = vunpack.c.l.b16 %v1511
    %v1601 = vunpack.c.h.b16 %v1511
    %v1602 = vunpack.c.l.b16 %v1512
    %v1603 = vunpack.c.h.b16 %v1512
    %v1604 = vunpack.c.l.b16 %v1513
    %v1605 = vunpack.c.h.b16 %v1513
    %v1606 = vunpack.c.l.b16 %v1514
    %v1607 = vunpack.c.h.b16 %v1514
    %v1608 = vunpack.c.l.b16 %v1515
    %v1609 = vunpack.c.h.b16 %v1515
    %v1610 = vunpack.c.l.b16 %v1516
    %v1611 = vunpack.c.h.b16 %v1516
    %v1612 = vunpack.c.l.b16 %v1517
    %v1613 = vunpack.c.h.b16 %v1517
    %v1614 = vpack.c.b16 %v1554, %v1550
    %v1615 = vpack.c.b16 %v1555, %v1551
    %v1616 = vpack.c.b16 %v1556, %v1552
    %v1617 = vpack.c.b16 %v1557, %v1553
    %v1618 = vpack.c.b16 %v1562, %v1558
    %v1619 = vpack.c.b16 %v1563, %v1559
    %v1620 = vpack.c.b16 %v1564, %v1560
    %v1621 = vpack.c.b16 %v1565, %v1561
    %v1622 = vpack.c.b16 %v1570, %v1566
    %v1623 = vpack.c.b16 %v1571, %v1567
    %v1624 = vpack.c.b16 %v1572, %v1568
    %v1625 = vpack.c.b16 %v1573, %v1569
    %v1626 = vpack.c.b16 %v1578, %v1574
    %v1627 = vpack.c.b16 %v1579, %v1575
    %v1628 = vpack.c.b16 %v1580, %v1576
    %v1629 = vpack.c.b16 %v1581, %v1577
    %v1630 = vpack.c.b16 %v1586, %v1582
    %v1631 = vpack.c.b16 %v1587, %v1583
    %v1632 = vpack.c.b16 %v1588, %v1584
    %v1633 = vpack.c.b16 %v1589, %v1585
    %v1634 = vpack.c.b16 %v1594, %v1590
    %v1635 = vpack.c.b16 %v1595, %v1591
    %v1636 = vpack.c.b16 %v1596, %v1592
    %v1637 = vpack.c.b16 %v1597, %v1593
    %v1638 = vpack.c.b16 %v1602, %v1598
    %v1639 = vpack.c.b16 %v1603, %v1599
    %v1640 = vpack.c.b16 %v1604, %v1600
    %v1641 = vpack.c.b16 %v1605, %v1601
    %v1642 = vpack.c.b16 %v1610, %v1606
    %v1643 = vpack.c.b16 %v1611, %v1607
    %v1644 = vpack.c.b16 %v1612, %v1608
    %v1645 = vpack.c.b16 %v1613, %v1609
    %1678 = vmatprep.subr.bf16.mxu0 %v1615
    %1679 = vmatpush1.bf16.msra.mxu0 %v1614
    %1680 = vmatprep.subr.bf16.mxu0 %v1619
    %1681 = vmatpush1.bf16.msra.mxu0 %v1618
    %1682 = vmatprep.subr.bf16.mxu0 %v1623
    %1683 = vmatpush1.bf16.msra.mxu0 %v1622
    %1684 = vmatprep.subr.bf16.mxu0 %v1627
    %1685 = vmatpush1.bf16.msra.mxu0 %v1626
    %1686 = vmatprep.subr.bf16.mxu0 %v1631
    %1687 = vmatpush1.bf16.msra.mxu0 %v1630
    %1688 = vmatprep.subr.bf16.mxu0 %v1635
    %1689 = vmatpush1.bf16.msra.mxu0 %v1634
    %1690 = vmatprep.subr.bf16.mxu0 %v1639
    %1691 = vmatpush1.bf16.msra.mxu0 %v1638
    %1692 = vmatprep.subr.bf16.mxu0 %v1643
    %1693 = vmatpush1.bf16.msra.mxu0 %v1642
    %1694 = vmatprep.subr.bf16.mxu0 0
    %1695 = vmatpush1.bf16.msra.mxu0 0
    %1696 = vmatprep.subr.bf16.mxu0 0
    %1697 = vmatpush1.bf16.msra.mxu0 0
    %1698 = vmatprep.subr.bf16.mxu0 0
    %1699 = vmatpush1.bf16.msra.mxu0 0
    %1700 = vmatprep.subr.bf16.mxu0 0
    %1701 = vmatpush1.bf16.msra.mxu0 0
    %1702 = vmatprep.subr.bf16.mxu0 0
    %1703 = vmatpush1.bf16.msra.mxu0 0
    %1704 = vmatprep.subr.bf16.mxu0 0
    %1705 = vmatpush1.bf16.msra.mxu0 0
    %1706 = vmatprep.subr.bf16.mxu0 0
    %1707 = vmatpush1.bf16.msra.mxu0 0
    %1708 = vmatprep.subr.bf16.mxu0 0
    %1709 = vmatpush1.bf16.msra.mxu0 0
    %1710 = vmatprep.mubr.bf16.mxu0 0
    %1711 = vmatmul.mubr.bf16.gmra.mrb[0].mxu0 0
    %v1712 = vpop.f32.mrb[0].mxu0
    %v1713 = vadd.f32 0.0, %v1712
    %v1714 = vpop.f32.mrb[0].mxu0
    %v1715 = vadd.f32 0.0, %v1714
    %v1716 = vpop.f32.mrb[0].mxu0
    %v1717 = vpop.f32.mrb[0].mxu0
    %1718 = vdwg.mxu0
    %1719 = vmatprep.subr.bf16.mxu0 %v1617
    %1720 = vmatpush1.bf16.msra.mxu0 %v1616
    %1721 = vmatprep.subr.bf16.mxu0 %v1621
    %1722 = vmatpush1.bf16.msra.mxu0 %v1620
    %1723 = vmatprep.subr.bf16.mxu0 %v1625
    %1724 = vmatpush1.bf16.msra.mxu0 %v1624
    %1725 = vmatprep.subr.bf16.mxu0 %v1629
    %1726 = vmatpush1.bf16.msra.mxu0 %v1628
    %1727 = vmatprep.subr.bf16.mxu0 %v1633
    %1728 = vmatpush1.bf16.msra.mxu0 %v1632
    %1729 = vmatprep.subr.bf16.mxu0 %v1637
    %1730 = vmatpush1.bf16.msra.mxu0 %v1636
    %1731 = vmatprep.subr.bf16.mxu0 %v1641
    %1732 = vmatpush1.bf16.msra.mxu0 %v1640
    %1733 = vmatprep.subr.bf16.mxu0 %v1645
    %1734 = vmatpush1.bf16.msra.mxu0 %v1644
    %1735 = vmatprep.subr.bf16.mxu0 0
    %1736 = vmatpush1.bf16.msra.mxu0 0
    %1737 = vmatprep.subr.bf16.mxu0 0
    %1738 = vmatpush1.bf16.msra.mxu0 0
    %1739 = vmatprep.subr.bf16.mxu0 0
    %1740 = vmatpush1.bf16.msra.mxu0 0
    %1741 = vmatprep.subr.bf16.mxu0 0
    %1742 = vmatpush1.bf16.msra.mxu0 0
    %1743 = vmatprep.subr.bf16.mxu0 0
    %1744 = vmatpush1.bf16.msra.mxu0 0
    %1745 = vmatprep.subr.bf16.mxu0 0
    %1746 = vmatpush1.bf16.msra.mxu0 0
    %1747 = vmatprep.subr.bf16.mxu0 0
    %1748 = vmatpush1.bf16.msra.mxu0 0
    %1749 = vmatprep.subr.bf16.mxu0 0
    %1750 = vmatpush1.bf16.msra.mxu0 0
    %1751 = vmatprep.mubr.bf16.mxu0 0
    %1752 = vmatmul.mubr.bf16.gmra.mrb[0].mxu0 0
    %v1753 = vpop.f32.mrb[0].mxu0
    %v1754 = vadd.f32 0.0, %v1753
    %v1755 = vpop.f32.mrb[0].mxu0
    %v1756 = vadd.f32 0.0, %v1755
    %v1757 = vpop.f32.mrb[0].mxu0
    %v1758 = vpop.f32.mrb[0].mxu0
    %1759 = vdwg.mxu0
    %v1760 = vadd.f32 %v1439, %v1713
    %v1761 = vadd.f32 %v1441, %v1715
    %v1762 = vadd.f32 %v1480, %v1754
    %v1763 = vadd.f32 %v1482, %v1756
    %v1764 = vxor.u32 %v1760, 2147483648
    %v1765 = vxor.u32 %v1761, 2147483648
    %v1766 = vxor.u32 %v1762, 2147483648
    %v1767 = vmul.f32 %v1764, 1.442695
    %v1768 = vpow.pop %v1767
    %v1769 = vmul.f32 %v1765, 1.442695
    %v1770 = vpow.pop %v1769
    %v1771 = vmul.f32 %v1766, 1.442695
    %v1772 = vpow.pop %v1771
    %v1773 = vadd.f32 %v1768, 1.0
    %v1774 = vadd.f32 %v1770, 1.0
    %v1775 = vadd.f32 %v1772, 1.0
    %v1776 = vrcp.pop %v1773
    %v1777 = vmul.f32 1.0, %v1776
    %v1778 = vrcp.pop %v1774
    %v1779 = vmul.f32 1.0, %v1778
    %v1780 = vrcp.pop %v1775
    %v1781 = vmul.f32 1.0, %v1780
    %v1782 = vtanh.pop %v1763
    %v1783 = vmul.f32 %v1779, 0.0
    %v1784 = vmul.f32 %v1777, %v1782
    %v1785 = vadd.f32 %v1783, %v1784
    %v1786 = vtanh.pop %v1785
    %v1787 = vmul.f32 %v1781, %v1786
    %v1788 = vpack.c.bf16 %v1787, %v1787
    %v1789 = vld [vmem:[#allocation2 + $0x40] sm:$0xff]
    %v1790 = vld [vmem:[#allocation2 + $0x48] sm:$0xff]
    %v1791 = vld [vmem:[#allocation2 + $0x50] sm:$0xff]
    %v1792 = vld [vmem:[#allocation2 + $0x58] sm:$0xff]
    %1793 = vmatprep.subr.bf16.mxu0 %v901
    %1794 = vmatpush1.bf16.msra.mxu0 %v900
    %1795 = vmatprep.subr.bf16.mxu0 %v905
    %1796 = vmatpush1.bf16.msra.mxu0 %v904
    %1797 = vmatprep.subr.bf16.mxu0 %v909
    %1798 = vmatpush1.bf16.msra.mxu0 %v908
    %1799 = vmatprep.subr.bf16.mxu0 %v913
    %1800 = vmatpush1.bf16.msra.mxu0 %v912
    %1801 = vmatprep.subr.bf16.mxu0 %v917
    %1802 = vmatpush1.bf16.msra.mxu0 %v916
    %1803 = vmatprep.subr.bf16.mxu0 %v921
    %1804 = vmatpush1.bf16.msra.mxu0 %v920
    %1805 = vmatprep.subr.bf16.mxu0 %v925
    %1806 = vmatpush1.bf16.msra.mxu0 %v924
    %1807 = vmatprep.subr.bf16.mxu0 %v929
    %1808 = vmatpush1.bf16.msra.mxu0 %v928
    %1809 = vmatprep.subr.bf16.mxu0 0
    %1810 = vmatpush1.bf16.msra.mxu0 0
    %1811 = vmatprep.subr.bf16.mxu0 0
    %1812 = vmatpush1.bf16.msra.mxu0 0
    %1813 = vmatprep.subr.bf16.mxu0 0
    %1814 = vmatpush1.bf16.msra.mxu0 0
    %1815 = vmatprep.subr.bf16.mxu0 0
    %1816 = vmatpush1.bf16.msra.mxu0 0
    %1817 = vmatprep.subr.bf16.mxu0 0
    %1818 = vmatpush1.bf16.msra.mxu0 0
    %1819 = vmatprep.subr.bf16.mxu0 0
    %1820 = vmatpush1.bf16.msra.mxu0 0
    %1821 = vmatprep.subr.bf16.mxu0 0
    %1822 = vmatpush1.bf16.msra.mxu0 0
    %1823 = vmatprep.subr.bf16.mxu0 0
    %1824 = vmatpush1.bf16.msra.mxu0 0
    %1825 = vmatprep.mubr.bf16.mxu0 0
    %1826 = vmatmul.mubr.bf16.gmra.mrb[0].mxu0 %v1189
    %v1827 = vpop.f32.mrb[0].mxu0
    %v1828 = vadd.f32 0.0, %v1827
    %v1829 = vpop.f32.mrb[0].mxu0
    %v1830 = vadd.f32 0.0, %v1829
    %v1831 = vpop.f32.mrb[0].mxu0
    %v1832 = vpop.f32.mrb[0].mxu0
    %1833 = vdwg.mxu0
    %1834 = vmatprep.subr.bf16.mxu0 %v903
    %1835 = vmatpush1.bf16.msra.mxu0 %v902
    %1836 = vmatprep.subr.bf16.mxu0 %v907
    %1837 = vmatpush1.bf16.msra.mxu0 %v906
    %1838 = vmatprep.subr.bf16.mxu0 %v911
    %1839 = vmatpush1.bf16.msra.mxu0 %v910
    %1840 = vmatprep.subr.bf16.mxu0 %v915
    %1841 = vmatpush1.bf16.msra.mxu0 %v914
    %1842 = vmatprep.subr.bf16.mxu0 %v919
    %1843 = vmatpush1.bf16.msra.mxu0 %v918
    %1844 = vmatprep.subr.bf16.mxu0 %v923
    %1845 = vmatpush1.bf16.msra.mxu0 %v922
    %1846 = vmatprep.subr.bf16.mxu0 %v927
    %1847 = vmatpush1.bf16.msra.mxu0 %v926
    %1848 = vmatprep.subr.bf16.mxu0 %v931
    %1849 = vmatpush1.bf16.msra.mxu0 %v930
    %1850 = vmatprep.subr.bf16.mxu0 0
    %1851 = vmatpush1.bf16.msra.mxu0 0
    %1852 = vmatprep.subr.bf16.mxu0 0
    %1853 = vmatpush1.bf16.msra.mxu0 0
    %1854 = vmatprep.subr.bf16.mxu0 0
    %1855 = vmatpush1.bf16.msra.mxu0 0
    %1856 = vmatprep.subr.bf16.mxu0 0
    %1857 = vmatpush1.bf16.msra.mxu0 0
    %1858 = vmatprep.subr.bf16.mxu0 0
    %1859 = vmatpush1.bf16.msra.mxu0 0
    %1860 = vmatprep.subr.bf16.mxu0 0
    %1861 = vmatpush1.bf16.msra.mxu0 0
    %1862 = vmatprep.subr.bf16.mxu0 0
    %1863 = vmatpush1.bf16.msra.mxu0 0
    %1864 = vmatprep.subr.bf16.mxu0 0
    %1865 = vmatpush1.bf16.msra.mxu0 0
    %1866 = vmatprep.mubr.bf16.mxu0 0
    %1867 = vmatmul.mubr.bf16.gmra.mrb[0].mxu0 %v1189
    %v1868 = vpop.f32.mrb[0].mxu0
    %v1869 = vadd.f32 0.0, %v1868
    %v1870 = vpop.f32.mrb[0].mxu0
    %v1871 = vadd.f32 0.0, %v1870
    %v1872 = vpop.f32.mrb[0].mxu0
    %v1873 = vpop.f32.mrb[0].mxu0
    %1874 = vdwg.mxu0
    %v1875 = vadd.f32 %v1789, %v1828
    %v1876 = vadd.f32 %v1790, %v1830
    %v1877 = vadd.f32 %v1791, %v1869
    %v1878 = vadd.f32 %v1792, %v1871
    %v1879 = vxor.u32 %v1875, 2147483648
    %v1880 = vxor.u32 %v1876, 2147483648
    %v1881 = vxor.u32 %v1877, 2147483648
    %v1882 = vmul.f32 %v1879, 1.442695
    %v1883 = vpow.pop %v1882
    %v1884 = vmul.f32 %v1880, 1.442695
    %v1885 = vpow.pop %v1884
    %v1886 = vmul.f32 %v1881, 1.442695
    %v1887 = vpow.pop %v1886
    %v1888 = vadd.f32 %v1883, 1.0
    %v1889 = vadd.f32 %v1885, 1.0
    %v1890 = vadd.f32 %v1887, 1.0
    %v1891 = vrcp.pop %v1888
    %v1892 = vmul.f32 1.0, %v1891
    %v1893 = vrcp.pop %v1889
    %v1894 = vmul.f32 1.0, %v1893
    %v1895 = vrcp.pop %v1890
    %v1896 = vmul.f32 1.0, %v1895
    %v1897 = vtanh.pop %v1878
    %v1898 = vmul.f32 %v1894, %v1186
    %v1899 = vmul.f32 %v1892, %v1897
    %v1900 = vadd.f32 %v1898, %v1899
    %v1901 = vtanh.pop %v1900
    %v1902 = vmul.f32 %v1896, %v1901
    %v1903 = vpack.c.bf16 %v1902, %v1902
    %1904 = vmatprep.subr.bf16.mxu0 %v1341
    %1905 = vmatpush1.bf16.msra.mxu0 %v1340
    %1906 = vmatprep.subr.bf16.mxu0 %v1345
    %1907 = vmatpush1.bf16.msra.mxu0 %v1344
    %1908 = vmatprep.subr.bf16.mxu0 %v1349
    %1909 = vmatpush1.bf16.msra.mxu0 %v1348
    %1910 = vmatprep.subr.bf16.mxu0 %v1353
    %1911 = vmatpush1.bf16.msra.mxu0 %v1352
    %1912 = vmatprep.subr.bf16.mxu0 %v1357
    %1913 = vmatpush1.bf16.msra.mxu0 %v1356
    %1914 = vmatprep.subr.bf16.mxu0 %v1361
    %1915 = vmatpush1.bf16.msra.mxu0 %v1360
    %1916 = vmatprep.subr.bf16.mxu0 %v1365
    %1917 = vmatpush1.bf16.msra.mxu0 %v1364
    %1918 = vmatprep.subr.bf16.mxu0 %v1369
    %1919 = vmatpush1.bf16.msra.mxu0 %v1368
    %1920 = vmatprep.subr.bf16.mxu0 0
    %1921 = vmatpush1.bf16.msra.mxu0 0
    %1922 = vmatprep.subr.bf16.mxu0 0
    %1923 = vmatpush1.bf16.msra.mxu0 0
    %1924 = vmatprep.subr.bf16.mxu0 0
    %1925 = vmatpush1.bf16.msra.mxu0 0
    %1926 = vmatprep.subr.bf16.mxu0 0
    %1927 = vmatpush1.bf16.msra.mxu0 0
    %1928 = vmatprep.subr.bf16.mxu0 0
    %1929 = vmatpush1.bf16.msra.mxu0 0
    %1930 = vmatprep.subr.bf16.mxu0 0
    %1931 = vmatpush1.bf16.msra.mxu0 0
    %1932 = vmatprep.subr.bf16.mxu0 0
    %1933 = vmatpush1.bf16.msra.mxu0 0
    %1934 = vmatprep.subr.bf16.mxu0 0
    %1935 = vmatpush1.bf16.msra.mxu0 0
    %1936 = vmatprep.mubr.bf16.mxu0 0
    %1937 = vmatmul.mubr.bf16.gmra.mrb[0].mxu0 %v1189
    %v1938 = vpop.f32.mrb[0].mxu0
    %v1939 = vadd.f32 %v1227, %v1938
    %v1940 = vpop.f32.mrb[0].mxu0
    %v1941 = vadd.f32 %v1231, %v1940
    %v1942 = vpop.f32.mrb[0].mxu0
    %v1943 = vpop.f32.mrb[0].mxu0
    %1944 = vdwg.mxu0
    %1945 = vmatprep.subr.bf16.mxu0 %v1343
    %1946 = vmatpush1.bf16.msra.mxu0 %v1342
    %1947 = vmatprep.subr.bf16.mxu0 %v1347
    %1948 = vmatpush1.bf16.msra.mxu0 %v1346
    %1949 = vmatprep.subr.bf16.mxu0 %v1351
    %1950 = vmatpush1.bf16.msra.mxu0 %v1350
    %1951 = vmatprep.subr.bf16.mxu0 %v1355
    %1952 = vmatpush1.bf16.msra.mxu0 %v1354
    %1953 = vmatprep.subr.bf16.mxu0 %v1359
    %1954 = vmatpush1.bf16.msra.mxu0 %v1358
    %1955 = vmatprep.subr.bf16.mxu0 %v1363
    %1956 = vmatpush1.bf16.msra.mxu0 %v1362
    %1957 = vmatprep.subr.bf16.mxu0 %v1367
    %1958 = vmatpush1.bf16.msra.mxu0 %v1366
    %1959 = vmatprep.subr.bf16.mxu0 %v1371
    %1960 = vmatpush1.bf16.msra.mxu0 %v1370
    %1961 = vmatprep.subr.bf16.mxu0 0
    %1962 = vmatpush1.bf16.msra.mxu0 0
    %1963 = vmatprep.subr.bf16.mxu0 0
    %1964 = vmatpush1.bf16.msra.mxu0 0
    %1965 = vmatprep.subr.bf16.mxu0 0
    %1966 = vmatpush1.bf16.msra.mxu0 0
    %1967 = vmatprep.subr.bf16.mxu0 0
    %1968 = vmatpush1.bf16.msra.mxu0 0
    %1969 = vmatprep.subr.bf16.mxu0 0
    %1970 = vmatpush1.bf16.msra.mxu0 0
    %1971 = vmatprep.subr.bf16.mxu0 0
    %1972 = vmatpush1.bf16.msra.mxu0 0
    %1973 = vmatprep.subr.bf16.mxu0 0
    %1974 = vmatpush1.bf16.msra.mxu0 0
    %1975 = vmatprep.subr.bf16.mxu0 0
    %1976 = vmatpush1.bf16.msra.mxu0 0
    %1977 = vmatprep.mubr.bf16.mxu0 0
    %1978 = vmatmul.mubr.bf16.gmra.mrb[0].mxu0 %v1189
    %v1979 = vpop.f32.mrb[0].mxu0
    %v1980 = vadd.f32 %v1235, %v1979
    %v1981 = vpop.f32.mrb[0].mxu0
    %v1982 = vadd.f32 %v1239, %v1981
    %v1983 = vpop.f32.mrb[0].mxu0
    %v1984 = vpop.f32.mrb[0].mxu0
    %1985 = vdwg.mxu0
    %1986 = vmatprep.subr.bf16.mxu0 %v1615
    %1987 = vmatpush1.bf16.msra.mxu0 %v1614
    %1988 = vmatprep.subr.bf16.mxu0 %v1619
    %1989 = vmatpush1.bf16.msra.mxu0 %v1618
    %1990 = vmatprep.subr.bf16.mxu0 %v1623
    %1991 = vmatpush1.bf16.msra.mxu0 %v1622
    %1992 = vmatprep.subr.bf16.mxu0 %v1627
    %1993 = vmatpush1.bf16.msra.mxu0 %v1626
    %1994 = vmatprep.subr.bf16.mxu0 %v1631
    %1995 = vmatpush1.bf16.msra.mxu0 %v1630
    %1996 = vmatprep.subr.bf16.mxu0 %v1635
    %1997 = vmatpush1.bf16.msra.mxu0 %v1634
    %1998 = vmatprep.subr.bf16.mxu0 %v1639
    %1999 = vmatpush1.bf16.msra.mxu0 %v1638
    %2000 = vmatprep.subr.bf16.mxu0 %v1643
    %2001 = vmatpush1.bf16.msra.mxu0 %v1642
    %2002 = vmatprep.subr.bf16.mxu0 0
    %2003 = vmatpush1.bf16.msra.mxu0 0
    %2004 = vmatprep.subr.bf16.mxu0 0
    %2005 = vmatpush1.bf16.msra.mxu0 0
    %2006 = vmatprep.subr.bf16.mxu0 0
    %2007 = vmatpush1.bf16.msra.mxu0 0
    %2008 = vmatprep.subr.bf16.mxu0 0
    %2009 = vmatpush1.bf16.msra.mxu0 0
    %2010 = vmatprep.subr.bf16.mxu0 0
    %2011 = vmatpush1.bf16.msra.mxu0 0
    %2012 = vmatprep.subr.bf16.mxu0 0
    %2013 = vmatpush1.bf16.msra.mxu0 0
    %2014 = vmatprep.subr.bf16.mxu0 0
    %2015 = vmatpush1.bf16.msra.mxu0 0
    %2016 = vmatprep.subr.bf16.mxu0 0
    %2017 = vmatpush1.bf16.msra.mxu0 0
    %2018 = vmatprep.mubr.bf16.mxu0 0
    %2019 = vmatmul.mubr.bf16.gmra.mrb[0].mxu0 %v1788
    %v2020 = vpop.f32.mrb[0].mxu0
    %v2021 = vadd.f32 0.0, %v2020
    %v2022 = vpop.f32.mrb[0].mxu0
    %v2023 = vadd.f32 0.0, %v2022
    %v2024 = vpop.f32.mrb[0].mxu0
    %v2025 = vpop.f32.mrb[0].mxu0
    %2026 = vdwg.mxu0
    %2027 = vmatprep.subr.bf16.mxu0 %v1617
    %2028 = vmatpush1.bf16.msra.mxu0 %v1616
    %2029 = vmatprep.subr.bf16.mxu0 %v1621
    %2030 = vmatpush1.bf16.msra.mxu0 %v1620
    %2031 = vmatprep.subr.bf16.mxu0 %v1625
    %2032 = vmatpush1.bf16.msra.mxu0 %v1624
    %2033 = vmatprep.subr.bf16.mxu0 %v1629
    %2034 = vmatpush1.bf16.msra.mxu0 %v1628
    %2035 = vmatprep.subr.bf16.mxu0 %v1633
    %2036 = vmatpush1.bf16.msra.mxu0 %v1632
    %2037 = vmatprep.subr.bf16.mxu0 %v1637
    %2038 = vmatpush1.bf16.msra.mxu0 %v1636
    %2039 = vmatprep.subr.bf16.mxu0 %v1641
    %2040 = vmatpush1.bf16.msra.mxu0 %v1640
    %2041 = vmatprep.subr.bf16.mxu0 %v1645
    %2042 = vmatpush1.bf16.msra.mxu0 %v1644
    %2043 = vmatprep.subr.bf16.mxu0 0
    %2044 = vmatpush1.bf16.msra.mxu0 0
    %2045 = vmatprep.subr.bf16.mxu0 0
    %2046 = vmatpush1.bf16.msra.mxu0 0
    %2047 = vmatprep.subr.bf16.mxu0 0
    %2048 = vmatpush1.bf16.msra.mxu0 0
    %2049 = vmatprep.subr.bf16.mxu0 0
    %2050 = vmatpush1.bf16.msra.mxu0 0
    %2051 = vmatprep.subr.bf16.mxu0 0
    %2052 = vmatpush1.bf16.msra.mxu0 0
    %2053 = vmatprep.subr.bf16.mxu0 0
    %2054 = vmatpush1.bf16.msra.mxu0 0
    %2055 = vmatprep.subr.bf16.mxu0 0
    %2056 = vmatpush1.bf16.msra.mxu0 0
    %2057 = vmatprep.subr.bf16.mxu0 0
    %2058 = vmatpush1.bf16.msra.mxu0 0
    %2059 = vmatprep.mubr.bf16.mxu0 0
    %2060 = vmatmul.mubr.bf16.gmra.mrb[0].mxu0 %v1788
    %v2061 = vpop.f32.mrb[0].mxu0
    %v2062 = vadd.f32 0.0, %v2061
    %v2063 = vpop.f32.mrb[0].mxu0
    %v2064 = vadd.f32 0.0, %v2063
    %v2065 = vpop.f32.mrb[0].mxu0
    %v2066 = vpop.f32.mrb[0].mxu0
    %2067 = vdwg.mxu0
    %v2068 = vadd.f32 %v1939, %v2021
    %v2069 = vadd.f32 %v1941, %v2023
    %v2070 = vadd.f32 %v1980, %v2062
    %v2071 = vadd.f32 %v1982, %v2064
    %v2072 = vxor.u32 %v2068, 2147483648
    %v2073 = vxor.u32 %v2069, 2147483648
    %v2074 = vxor.u32 %v2070, 2147483648
    %v2075 = vmul.f32 %v2072, 1.442695
    %v2076 = vpow.pop %v2075
    %v2077 = vmul.f32 %v2073, 1.442695
    %v2078 = vpow.pop %v2077
    %v2079 = vmul.f32 %v2074, 1.442695
    %v2080 = vpow.pop %v2079
    %v2081 = vadd.f32 %v2076, 1.0
    %v2082 = vadd.f32 %v2078, 1.0
    %v2083 = vadd.f32 %v2080, 1.0
    %v2084 = vrcp.pop %v2081
    %v2085 = vmul.f32 1.0, %v2084
    %v2086 = vrcp.pop %v2082
    %v2087 = vmul.f32 1.0, %v2086
    %v2088 = vrcp.pop %v2083
    %v2089 = vmul.f32 1.0, %v2088
    %v2090 = vtanh.pop %v2071
    %v2091 = vmul.f32 %v2087, %v1785
    %v2092 = vmul.f32 %v2085, %v2090
    %v2093 = vadd.f32 %v2091, %v2092
    %v2094 = vtanh.pop %v2093
    %v2095 = vmul.f32 %v2089, %v2094
    %v2096 = vpack.c.bf16 %v2095, %v2095
    %v2097 = vld [vmem:[#allocation2 + $0x60] sm:$0xff]
    %v2098 = vld [vmem:[#allocation2 + $0x68] sm:$0xff]
    %v2099 = vld [vmem:[#allocation2 + $0x70] sm:$0xff]
    %v2100 = vld [vmem:[#allocation2 + $0x78] sm:$0xff]
    %2101 = vmatprep.subr.bf16.mxu0 %v901
    %2102 = vmatpush1.bf16.msra.mxu0 %v900
    %2103 = vmatprep.subr.bf16.mxu0 %v905
    %2104 = vmatpush1.bf16.msra.mxu0 %v904
    %2105 = vmatprep.subr.bf16.mxu0 %v909
    %2106 = vmatpush1.bf16.msra.mxu0 %v908
    %2107 = vmatprep.subr.bf16.mxu0 %v913
    %2108 = vmatpush1.bf16.msra.mxu0 %v912
    %2109 = vmatprep.subr.bf16.mxu0 %v917
    %2110 = vmatpush1.bf16.msra.mxu0 %v916
    %2111 = vmatprep.subr.bf16.mxu0 %v921
    %2112 = vmatpush1.bf16.msra.mxu0 %v920
    %2113 = vmatprep.subr.bf16.mxu0 %v925
    %2114 = vmatpush1.bf16.msra.mxu0 %v924
    %2115 = vmatprep.subr.bf16.mxu0 %v929
    %2116 = vmatpush1.bf16.msra.mxu0 %v928
    %2117 = vmatprep.subr.bf16.mxu0 0
    %2118 = vmatpush1.bf16.msra.mxu0 0
    %2119 = vmatprep.subr.bf16.mxu0 0
    %2120 = vmatpush1.bf16.msra.mxu0 0
    %2121 = vmatprep.subr.bf16.mxu0 0
    %2122 = vmatpush1.bf16.msra.mxu0 0
    %2123 = vmatprep.subr.bf16.mxu0 0
    %2124 = vmatpush1.bf16.msra.mxu0 0
    %2125 = vmatprep.subr.bf16.mxu0 0
    %2126 = vmatpush1.bf16.msra.mxu0 0
    %2127 = vmatprep.subr.bf16.mxu0 0
    %2128 = vmatpush1.bf16.msra.mxu0 0
    %2129 = vmatprep.subr.bf16.mxu0 0
    %2130 = vmatpush1.bf16.msra.mxu0 0
    %2131 = vmatprep.subr.bf16.mxu0 0
    %2132 = vmatpush1.bf16.msra.mxu0 0
    %2133 = vmatprep.mubr.bf16.mxu0 0
    %2134 = vmatmul.mubr.bf16.gmra.mrb[0].mxu0 %v1903
    %v2135 = vpop.f32.mrb[0].mxu0
    %v2136 = vadd.f32 0.0, %v2135
    %v2137 = vpop.f32.mrb[0].mxu0
    %v2138 = vadd.f32 0.0, %v2137
    %v2139 = vpop.f32.mrb[0].mxu0
    %v2140 = vpop.f32.mrb[0].mxu0
    %2141 = vdwg.mxu0
    %2142 = vmatprep.subr.bf16.mxu0 %v903
    %2143 = vmatpush1.bf16.msra.mxu0 %v902
    %2144 = vmatprep.subr.bf16.mxu0 %v907
    %2145 = vmatpush1.bf16.msra.mxu0 %v906
    %2146 = vmatprep.subr.bf16.mxu0 %v911
    %2147 = vmatpush1.bf16.msra.mxu0 %v910
    %2148 = vmatprep.subr.bf16.mxu0 %v915
    %2149 = vmatpush1.bf16.msra.mxu0 %v914
    %2150 = vmatprep.subr.bf16.mxu0 %v919
    %2151 = vmatpush1.bf16.msra.mxu0 %v918
    %2152 = vmatprep.subr.bf16.mxu0 %v923
    %2153 = vmatpush1.bf16.msra.mxu0 %v922
    %2154 = vmatprep.subr.bf16.mxu0 %v927
    %2155 = vmatpush1.bf16.msra.mxu0 %v926
    %2156 = vmatprep.subr.bf16.mxu0 %v931
    %2157 = vmatpush1.bf16.msra.mxu0 %v930
    %2158 = vmatprep.subr.bf16.mxu0 0
    %2159 = vmatpush1.bf16.msra.mxu0 0
    %2160 = vmatprep.subr.bf16.mxu0 0
    %2161 = vmatpush1.bf16.msra.mxu0 0
    %2162 = vmatprep.subr.bf16.mxu0 0
    %2163 = vmatpush1.bf16.msra.mxu0 0
    %2164 = vmatprep.subr.bf16.mxu0 0
    %2165 = vmatpush1.bf16.msra.mxu0 0
    %2166 = vmatprep.subr.bf16.mxu0 0
    %2167 = vmatpush1.bf16.msra.mxu0 0
    %2168 = vmatprep.subr.bf16.mxu0 0
    %2169 = vmatpush1.bf16.msra.mxu0 0
    %2170 = vmatprep.subr.bf16.mxu0 0
    %2171 = vmatpush1.bf16.msra.mxu0 0
    %2172 = vmatprep.subr.bf16.mxu0 0
    %2173 = vmatpush1.bf16.msra.mxu0 0
    %2174 = vmatprep.mubr.bf16.mxu0 0
    %2175 = vmatmul.mubr.bf16.gmra.mrb[0].mxu0 %v1903
    %v2176 = vpop.f32.mrb[0].mxu0
    %v2177 = vadd.f32 0.0, %v2176
    %v2178 = vpop.f32.mrb[0].mxu0
    %v2179 = vadd.f32 0.0, %v2178
    %v2180 = vpop.f32.mrb[0].mxu0
    %v2181 = vpop.f32.mrb[0].mxu0
    %2182 = vdwg.mxu0
    %v2183 = vadd.f32 %v2097, %v2136
    %v2184 = vadd.f32 %v2098, %v2138
    %v2185 = vadd.f32 %v2099, %v2177
    %v2186 = vadd.f32 %v2100, %v2179
    %v2187 = vxor.u32 %v2183, 2147483648
    %v2188 = vxor.u32 %v2184, 2147483648
    %v2189 = vxor.u32 %v2185, 2147483648
    %v2190 = vmul.f32 %v2187, 1.442695
    %v2191 = vpow.pop %v2190
    %v2192 = vmul.f32 %v2188, 1.442695
    %v2193 = vpow.pop %v2192
    %v2194 = vmul.f32 %v2189, 1.442695
    %v2195 = vpow.pop %v2194
    %v2196 = vadd.f32 %v2191, 1.0
    %v2197 = vadd.f32 %v2193, 1.0
    %v2198 = vadd.f32 %v2195, 1.0
    %v2199 = vrcp.pop %v2196
    %v2200 = vmul.f32 1.0, %v2199
    %v2201 = vrcp.pop %v2197
    %v2202 = vmul.f32 1.0, %v2201
    %v2203 = vrcp.pop %v2198
    %v2204 = vmul.f32 1.0, %v2203
    %v2205 = vtanh.pop %v2186
    %v2206 = vmul.f32 %v2202, %v1900
    %v2207 = vmul.f32 %v2200, %v2205
    %v2208 = vadd.f32 %v2206, %v2207
    %v2209 = vtanh.pop %v2208
    %v2210 = vmul.f32 %v2204, %v2209
    %v2211 = vpack.c.bf16 %v2210, %v2210
    %2212 = vmatprep.subr.bf16.mxu0 %v1341
    %2213 = vmatpush1.bf16.msra.mxu0 %v1340
    %2214 = vmatprep.subr.bf16.mxu0 %v1345
    %2215 = vmatpush1.bf16.msra.mxu0 %v1344
    %2216 = vmatprep.subr.bf16.mxu0 %v1349
    %2217 = vmatpush1.bf16.msra.mxu0 %v1348
    %2218 = vmatprep.subr.bf16.mxu0 %v1353
    %2219 = vmatpush1.bf16.msra.mxu0 %v1352
    %2220 = vmatprep.subr.bf16.mxu0 %v1357
    %2221 = vmatpush1.bf16.msra.mxu0 %v1356
    %2222 = vmatprep.subr.bf16.mxu0 %v1361
    %2223 = vmatpush1.bf16.msra.mxu0 %v1360
    %2224 = vmatprep.subr.bf16.mxu0 %v1365
    %2225 = vmatpush1.bf16.msra.mxu0 %v1364
    %2226 = vmatprep.subr.bf16.mxu0 %v1369
    %2227 = vmatpush1.bf16.msra.mxu0 %v1368
    %2228 = vmatprep.subr.bf16.mxu0 0
    %2229 = vmatpush1.bf16.msra.mxu0 0
    %2230 = vmatprep.subr.bf16.mxu0 0
    %2231 = vmatpush1.bf16.msra.mxu0 0
    %2232 = vmatprep.subr.bf16.mxu0 0
    %2233 = vmatpush1.bf16.msra.mxu0 0
    %2234 = vmatprep.subr.bf16.mxu0 0
    %2235 = vmatpush1.bf16.msra.mxu0 0
    %2236 = vmatprep.subr.bf16.mxu0 0
    %2237 = vmatpush1.bf16.msra.mxu0 0
    %2238 = vmatprep.subr.bf16.mxu0 0
    %2239 = vmatpush1.bf16.msra.mxu0 0
    %2240 = vmatprep.subr.bf16.mxu0 0
    %2241 = vmatpush1.bf16.msra.mxu0 0
    %2242 = vmatprep.subr.bf16.mxu0 0
    %2243 = vmatpush1.bf16.msra.mxu0 0
    %2244 = vmatprep.mubr.bf16.mxu0 0
    %2245 = vmatmul.mubr.bf16.gmra.mrb[0].mxu0 %v1903
    %v2246 = vpop.f32.mrb[0].mxu0
    %v2247 = vadd.f32 %v1227, %v2246
    %v2248 = vpop.f32.mrb[0].mxu0
    %v2249 = vadd.f32 %v1231, %v2248
    %v2250 = vpop.f32.mrb[0].mxu0
    %v2251 = vpop.f32.mrb[0].mxu0
    %2252 = vdwg.mxu0
    %2253 = vmatprep.subr.bf16.mxu0 %v1343
    %2254 = vmatpush1.bf16.msra.mxu0 %v1342
    %2255 = vmatprep.subr.bf16.mxu0 %v1347
    %2256 = vmatpush1.bf16.msra.mxu0 %v1346
    %2257 = vmatprep.subr.bf16.mxu0 %v1351
    %2258 = vmatpush1.bf16.msra.mxu0 %v1350
    %2259 = vmatprep.subr.bf16.mxu0 %v1355
    %2260 = vmatpush1.bf16.msra.mxu0 %v1354
    %2261 = vmatprep.subr.bf16.mxu0 %v1359
    %2262 = vmatpush1.bf16.msra.mxu0 %v1358
    %2263 = vmatprep.subr.bf16.mxu0 %v1363
    %2264 = vmatpush1.bf16.msra.mxu0 %v1362
    %2265 = vmatprep.subr.bf16.mxu0 %v1367
    %2266 = vmatpush1.bf16.msra.mxu0 %v1366
    %2267 = vmatprep.subr.bf16.mxu0 %v1371
    %2268 = vmatpush1.bf16.msra.mxu0 %v1370
    %2269 = vmatprep.subr.bf16.mxu0 0
    %2270 = vmatpush1.bf16.msra.mxu0 0
    %2271 = vmatprep.subr.bf16.mxu0 0
    %2272 = vmatpush1.bf16.msra.mxu0 0
    %2273 = vmatprep.subr.bf16.mxu0 0
    %2274 = vmatpush1.bf16.msra.mxu0 0
    %2275 = vmatprep.subr.bf16.mxu0 0
    %2276 = vmatpush1.bf16.msra.mxu0 0
    %2277 = vmatprep.subr.bf16.mxu0 0
    %2278 = vmatpush1.bf16.msra.mxu0 0
    %2279 = vmatprep.subr.bf16.mxu0 0
    %2280 = vmatpush1.bf16.msra.mxu0 0
    %2281 = vmatprep.subr.bf16.mxu0 0
    %2282 = vmatpush1.bf16.msra.mxu0 0
    %2283 = vmatprep.subr.bf16.mxu0 0
    %2284 = vmatpush1.bf16.msra.mxu0 0
    %2285 = vmatprep.mubr.bf16.mxu0 0
    %2286 = vmatmul.mubr.bf16.gmra.mrb[0].mxu0 %v1903
    %v2287 = vpop.f32.mrb[0].mxu0
    %v2288 = vadd.f32 %v1235, %v2287
    %v2289 = vpop.f32.mrb[0].mxu0
    %v2290 = vadd.f32 %v1239, %v2289
    %v2291 = vpop.f32.mrb[0].mxu0
    %v2292 = vpop.f32.mrb[0].mxu0
    %2293 = vdwg.mxu0
    %2294 = vmatprep.subr.bf16.mxu0 %v1615
    %2295 = vmatpush1.bf16.msra.mxu0 %v1614
    %2296 = vmatprep.subr.bf16.mxu0 %v1619
    %2297 = vmatpush1.bf16.msra.mxu0 %v1618
    %2298 = vmatprep.subr.bf16.mxu0 %v1623
    %2299 = vmatpush1.bf16.msra.mxu0 %v1622
    %2300 = vmatprep.subr.bf16.mxu0 %v1627
    %2301 = vmatpush1.bf16.msra.mxu0 %v1626
    %2302 = vmatprep.subr.bf16.mxu0 %v1631
    %2303 = vmatpush1.bf16.msra.mxu0 %v1630
    %2304 = vmatprep.subr.bf16.mxu0 %v1635
    %2305 = vmatpush1.bf16.msra.mxu0 %v1634
    %2306 = vmatprep.subr.bf16.mxu0 %v1639
    %2307 = vmatpush1.bf16.msra.mxu0 %v1638
    %2308 = vmatprep.subr.bf16.mxu0 %v1643
    %2309 = vmatpush1.bf16.msra.mxu0 %v1642
    %2310 = vmatprep.subr.bf16.mxu0 0
    %2311 = vmatpush1.bf16.msra.mxu0 0
    %2312 = vmatprep.subr.bf16.mxu0 0
    %2313 = vmatpush1.bf16.msra.mxu0 0
    %2314 = vmatprep.subr.bf16.mxu0 0
    %2315 = vmatpush1.bf16.msra.mxu0 0
    %2316 = vmatprep.subr.bf16.mxu0 0
    %2317 = vmatpush1.bf16.msra.mxu0 0
    %2318 = vmatprep.subr.bf16.mxu0 0
    %2319 = vmatpush1.bf16.msra.mxu0 0
    %2320 = vmatprep.subr.bf16.mxu0 0
    %2321 = vmatpush1.bf16.msra.mxu0 0
    %2322 = vmatprep.subr.bf16.mxu0 0
    %2323 = vmatpush1.bf16.msra.mxu0 0
    %2324 = vmatprep.subr.bf16.mxu0 0
    %2325 = vmatpush1.bf16.msra.mxu0 0
    %2326 = vmatprep.mubr.bf16.mxu0 0
    %2327 = vmatmul.mubr.bf16.gmra.mrb[0].mxu0 %v2096
    %v2328 = vpop.f32.mrb[0].mxu0
    %v2329 = vadd.f32 0.0, %v2328
    %v2330 = vpop.f32.mrb[0].mxu0
    %v2331 = vadd.f32 0.0, %v2330
    %v2332 = vpop.f32.mrb[0].mxu0
    %v2333 = vpop.f32.mrb[0].mxu0
    %2334 = vdwg.mxu0
    %2335 = vmatprep.subr.bf16.mxu0 %v1617
    %2336 = vmatpush1.bf16.msra.mxu0 %v1616
    %2337 = vmatprep.subr.bf16.mxu0 %v1621
    %2338 = vmatpush1.bf16.msra.mxu0 %v1620
    %2339 = vmatprep.subr.bf16.mxu0 %v1625
    %2340 = vmatpush1.bf16.msra.mxu0 %v1624
    %2341 = vmatprep.subr.bf16.mxu0 %v1629
    %2342 = vmatpush1.bf16.msra.mxu0 %v1628
    %2343 = vmatprep.subr.bf16.mxu0 %v1633
    %2344 = vmatpush1.bf16.msra.mxu0 %v1632
    %2345 = vmatprep.subr.bf16.mxu0 %v1637
    %2346 = vmatpush1.bf16.msra.mxu0 %v1636
    %2347 = vmatprep.subr.bf16.mxu0 %v1641
    %2348 = vmatpush1.bf16.msra.mxu0 %v1640
    %2349 = vmatprep.subr.bf16.mxu0 %v1645
    %2350 = vmatpush1.bf16.msra.mxu0 %v1644
    %2351 = vmatprep.subr.bf16.mxu0 0
    %2352 = vmatpush1.bf16.msra.mxu0 0
    %2353 = vmatprep.subr.bf16.mxu0 0
    %2354 = vmatpush1.bf16.msra.mxu0 0
    %2355 = vmatprep.subr.bf16.mxu0 0
    %2356 = vmatpush1.bf16.msra.mxu0 0
    %2357 = vmatprep.subr.bf16.mxu0 0
    %2358 = vmatpush1.bf16.msra.mxu0 0
    %2359 = vmatprep.subr.bf16.mxu0 0
    %2360 = vmatpush1.bf16.msra.mxu0 0
    %2361 = vmatprep.subr.bf16.mxu0 0
    %2362 = vmatpush1.bf16.msra.mxu0 0
    %2363 = vmatprep.subr.bf16.mxu0 0
    %2364 = vmatpush1.bf16.msra.mxu0 0
    %2365 = vmatprep.subr.bf16.mxu0 0
    %2366 = vmatpush1.bf16.msra.mxu0 0
    %2367 = vmatprep.mubr.bf16.mxu0 0
    %2368 = vmatmul.mubr.bf16.gmra.mrb[0].mxu0 %v2096
    %v2369 = vpop.f32.mrb[0].mxu0
    %v2370 = vadd.f32 0.0, %v2369
    %v2371 = vpop.f32.mrb[0].mxu0
    %v2372 = vadd.f32 0.0, %v2371
    %v2373 = vpop.f32.mrb[0].mxu0
    %v2374 = vpop.f32.mrb[0].mxu0
    %2375 = vdwg.mxu0
    %v2376 = vadd.f32 %v2247, %v2329
    %v2377 = vadd.f32 %v2249, %v2331
    %v2378 = vadd.f32 %v2288, %v2370
    %v2379 = vadd.f32 %v2290, %v2372
    %v2380 = vxor.u32 %v2376, 2147483648
    %v2381 = vxor.u32 %v2377, 2147483648
    %v2382 = vxor.u32 %v2378, 2147483648
    %v2383 = vmul.f32 %v2380, 1.442695
    %v2384 = vpow.pop %v2383
    %v2385 = vmul.f32 %v2381, 1.442695
    %v2386 = vpow.pop %v2385
    %v2387 = vmul.f32 %v2382, 1.442695
    %v2388 = vpow.pop %v2387
    %v2389 = vadd.f32 %v2384, 1.0
    %v2390 = vadd.f32 %v2386, 1.0
    %v2391 = vadd.f32 %v2388, 1.0
    %v2392 = vrcp.pop %v2389
    %v2393 = vmul.f32 1.0, %v2392
    %v2394 = vrcp.pop %v2390
    %v2395 = vmul.f32 1.0, %v2394
    %v2396 = vrcp.pop %v2391
    %v2397 = vmul.f32 1.0, %v2396
    %v2398 = vtanh.pop %v2379
    %v2399 = vmul.f32 %v2395, %v2093
    %v2400 = vmul.f32 %v2393, %v2398
    %v2401 = vadd.f32 %v2399, %v2400
    %v2402 = vtanh.pop %v2401
    %v2403 = vmul.f32 %v2397, %v2402
    %v2404 = vpack.c.bf16 %v2403, %v2403
    %v2405 = vld [vmem:[#allocation2 + $0x80] sm:$0xff]
    %v2406 = vld [vmem:[#allocation2 + $0x88] sm:$0xff]
    %v2407 = vld [vmem:[#allocation2 + $0x90] sm:$0xff]
    %v2408 = vld [vmem:[#allocation2 + $0x98] sm:$0xff]
    %2409 = vmatprep.subr.bf16.mxu0 %v901
    %2410 = vmatpush1.bf16.msra.mxu0 %v900
    %2411 = vmatprep.subr.bf16.mxu0 %v905
    %2412 = vmatpush1.bf16.msra.mxu0 %v904
    %2413 = vmatprep.subr.bf16.mxu0 %v909
    %2414 = vmatpush1.bf16.msra.mxu0 %v908
    %2415 = vmatprep.subr.bf16.mxu0 %v913
    %2416 = vmatpush1.bf16.msra.mxu0 %v912
    %2417 = vmatprep.subr.bf16.mxu0 %v917
    %2418 = vmatpush1.bf16.msra.mxu0 %v916
    %2419 = vmatprep.subr.bf16.mxu0 %v921
    %2420 = vmatpush1.bf16.msra.mxu0 %v920
    %2421 = vmatprep.subr.bf16.mxu0 %v925
    %2422 = vmatpush1.bf16.msra.mxu0 %v924
    %2423 = vmatprep.subr.bf16.mxu0 %v929
    %2424 = vmatpush1.bf16.msra.mxu0 %v928
    %2425 = vmatprep.subr.bf16.mxu0 0
    %2426 = vmatpush1.bf16.msra.mxu0 0
    %2427 = vmatprep.subr.bf16.mxu0 0
    %2428 = vmatpush1.bf16.msra.mxu0 0
    %2429 = vmatprep.subr.bf16.mxu0 0
    %2430 = vmatpush1.bf16.msra.mxu0 0
    %2431 = vmatprep.subr.bf16.mxu0 0
    %2432 = vmatpush1.bf16.msra.mxu0 0
    %2433 = vmatprep.subr.bf16.mxu0 0
    %2434 = vmatpush1.bf16.msra.mxu0 0
    %2435 = vmatprep.subr.bf16.mxu0 0
    %2436 = vmatpush1.bf16.msra.mxu0 0
    %2437 = vmatprep.subr.bf16.mxu0 0
    %2438 = vmatpush1.bf16.msra.mxu0 0
    %2439 = vmatprep.subr.bf16.mxu0 0
    %2440 = vmatpush1.bf16.msra.mxu0 0
    %2441 = vmatprep.mubr.bf16.mxu0 0
    %2442 = vmatmul.mubr.bf16.gmra.mrb[0].mxu0 %v2211
    %v2443 = vpop.f32.mrb[0].mxu0
    %v2444 = vadd.f32 0.0, %v2443
    %v2445 = vpop.f32.mrb[0].mxu0
    %v2446 = vadd.f32 0.0, %v2445
    %v2447 = vpop.f32.mrb[0].mxu0
    %v2448 = vpop.f32.mrb[0].mxu0
    %2449 = vdwg.mxu0
    %2450 = vmatprep.subr.bf16.mxu0 %v903
    %2451 = vmatpush1.bf16.msra.mxu0 %v902
    %2452 = vmatprep.subr.bf16.mxu0 %v907
    %2453 = vmatpush1.bf16.msra.mxu0 %v906
    %2454 = vmatprep.subr.bf16.mxu0 %v911
    %2455 = vmatpush1.bf16.msra.mxu0 %v910
    %2456 = vmatprep.subr.bf16.mxu0 %v915
    %2457 = vmatpush1.bf16.msra.mxu0 %v914
    %2458 = vmatprep.subr.bf16.mxu0 %v919
    %2459 = vmatpush1.bf16.msra.mxu0 %v918
    %2460 = vmatprep.subr.bf16.mxu0 %v923
    %2461 = vmatpush1.bf16.msra.mxu0 %v922
    %2462 = vmatprep.subr.bf16.mxu0 %v927
    %2463 = vmatpush1.bf16.msra.mxu0 %v926
    %2464 = vmatprep.subr.bf16.mxu0 %v931
    %2465 = vmatpush1.bf16.msra.mxu0 %v930
    %2466 = vmatprep.subr.bf16.mxu0 0
    %2467 = vmatpush1.bf16.msra.mxu0 0
    %2468 = vmatprep.subr.bf16.mxu0 0
    %2469 = vmatpush1.bf16.msra.mxu0 0
    %2470 = vmatprep.subr.bf16.mxu0 0
    %2471 = vmatpush1.bf16.msra.mxu0 0
    %2472 = vmatprep.subr.bf16.mxu0 0
    %2473 = vmatpush1.bf16.msra.mxu0 0
    %2474 = vmatprep.subr.bf16.mxu0 0
    %2475 = vmatpush1.bf16.msra.mxu0 0
    %2476 = vmatprep.subr.bf16.mxu0 0
    %2477 = vmatpush1.bf16.msra.mxu0 0
    %2478 = vmatprep.subr.bf16.mxu0 0
    %2479 = vmatpush1.bf16.msra.mxu0 0
    %2480 = vmatprep.subr.bf16.mxu0 0
    %2481 = vmatpush1.bf16.msra.mxu0 0
    %2482 = vmatprep.mubr.bf16.mxu0 0
    %2483 = vmatmul.mubr.bf16.gmra.mrb[0].mxu0 %v2211
    %v2484 = vpop.f32.mrb[0].mxu0
    %v2485 = vadd.f32 0.0, %v2484
    %v2486 = vpop.f32.mrb[0].mxu0
    %v2487 = vadd.f32 0.0, %v2486
    %v2488 = vpop.f32.mrb[0].mxu0
    %v2489 = vpop.f32.mrb[0].mxu0
    %2490 = vdwg.mxu0
    %v2491 = vadd.f32 %v2405, %v2444
    %v2492 = vadd.f32 %v2406, %v2446
    %v2493 = vadd.f32 %v2407, %v2485
    %v2494 = vadd.f32 %v2408, %v2487
    %v2495 = vxor.u32 %v2491, 2147483648
    %v2496 = vxor.u32 %v2492, 2147483648
    %v2497 = vxor.u32 %v2493, 2147483648
    %v2498 = vmul.f32 %v2495, 1.442695
    %v2499 = vpow.pop %v2498
    %v2500 = vmul.f32 %v2496, 1.442695
    %v2501 = vpow.pop %v2500
    %v2502 = vmul.f32 %v2497, 1.442695
    %v2503 = vpow.pop %v2502
    %v2504 = vadd.f32 %v2499, 1.0
    %v2505 = vadd.f32 %v2501, 1.0
    %v2506 = vadd.f32 %v2503, 1.0
    %v2507 = vrcp.pop %v2504
    %v2508 = vmul.f32 1.0, %v2507
    %v2509 = vrcp.pop %v2505
    %v2510 = vmul.f32 1.0, %v2509
    %v2511 = vrcp.pop %v2506
    %v2512 = vmul.f32 1.0, %v2511
    %v2513 = vtanh.pop %v2494
    %v2514 = vmul.f32 %v2510, %v2208
    %v2515 = vmul.f32 %v2508, %v2513
    %v2516 = vadd.f32 %v2514, %v2515
    %v2517 = vtanh.pop %v2516
    %v2518 = vmul.f32 %v2512, %v2517
    %v2519 = vpack.c.bf16 %v2518, %v2518
    %2520 = vmatprep.subr.bf16.mxu0 %v1341
    %2521 = vmatpush1.bf16.msra.mxu0 %v1340
    %2522 = vmatprep.subr.bf16.mxu0 %v1345
    %2523 = vmatpush1.bf16.msra.mxu0 %v1344
    %2524 = vmatprep.subr.bf16.mxu0 %v1349
    %2525 = vmatpush1.bf16.msra.mxu0 %v1348
    %2526 = vmatprep.subr.bf16.mxu0 %v1353
    %2527 = vmatpush1.bf16.msra.mxu0 %v1352
    %2528 = vmatprep.subr.bf16.mxu0 %v1357
    %2529 = vmatpush1.bf16.msra.mxu0 %v1356
    %2530 = vmatprep.subr.bf16.mxu0 %v1361
    %2531 = vmatpush1.bf16.msra.mxu0 %v1360
    %2532 = vmatprep.subr.bf16.mxu0 %v1365
    %2533 = vmatpush1.bf16.msra.mxu0 %v1364
    %2534 = vmatprep.subr.bf16.mxu0 %v1369
    %2535 = vmatpush1.bf16.msra.mxu0 %v1368
    %2536 = vmatprep.subr.bf16.mxu0 0
    %2537 = vmatpush1.bf16.msra.mxu0 0
    %2538 = vmatprep.subr.bf16.mxu0 0
    %2539 = vmatpush1.bf16.msra.mxu0 0
    %2540 = vmatprep.subr.bf16.mxu0 0
    %2541 = vmatpush1.bf16.msra.mxu0 0
    %2542 = vmatprep.subr.bf16.mxu0 0
    %2543 = vmatpush1.bf16.msra.mxu0 0
    %2544 = vmatprep.subr.bf16.mxu0 0
    %2545 = vmatpush1.bf16.msra.mxu0 0
    %2546 = vmatprep.subr.bf16.mxu0 0
    %2547 = vmatpush1.bf16.msra.mxu0 0
    %2548 = vmatprep.subr.bf16.mxu0 0
    %2549 = vmatpush1.bf16.msra.mxu0 0
    %2550 = vmatprep.subr.bf16.mxu0 0
    %2551 = vmatpush1.bf16.msra.mxu0 0
    %2552 = vmatprep.mubr.bf16.mxu0 0
    %2553 = vmatmul.mubr.bf16.gmra.mrb[0].mxu0 %v2211
    %v2554 = vpop.f32.mrb[0].mxu0
    %v2555 = vadd.f32 %v1227, %v2554
    %v2556 = vpop.f32.mrb[0].mxu0
    %v2557 = vadd.f32 %v1231, %v2556
    %v2558 = vpop.f32.mrb[0].mxu0
    %v2559 = vpop.f32.mrb[0].mxu0
    %2560 = vdwg.mxu0
    %2561 = vmatprep.subr.bf16.mxu0 %v1343
    %2562 = vmatpush1.bf16.msra.mxu0 %v1342
    %2563 = vmatprep.subr.bf16.mxu0 %v1347
    %2564 = vmatpush1.bf16.msra.mxu0 %v1346
    %2565 = vmatprep.subr.bf16.mxu0 %v1351
    %2566 = vmatpush1.bf16.msra.mxu0 %v1350
    %2567 = vmatprep.subr.bf16.mxu0 %v1355
    %2568 = vmatpush1.bf16.msra.mxu0 %v1354
    %2569 = vmatprep.subr.bf16.mxu0 %v1359
    %2570 = vmatpush1.bf16.msra.mxu0 %v1358
    %2571 = vmatprep.subr.bf16.mxu0 %v1363
    %2572 = vmatpush1.bf16.msra.mxu0 %v1362
    %2573 = vmatprep.subr.bf16.mxu0 %v1367
    %2574 = vmatpush1.bf16.msra.mxu0 %v1366
    %2575 = vmatprep.subr.bf16.mxu0 %v1371
    %2576 = vmatpush1.bf16.msra.mxu0 %v1370
    %2577 = vmatprep.subr.bf16.mxu0 0
    %2578 = vmatpush1.bf16.msra.mxu0 0
    %2579 = vmatprep.subr.bf16.mxu0 0
    %2580 = vmatpush1.bf16.msra.mxu0 0
    %2581 = vmatprep.subr.bf16.mxu0 0
    %2582 = vmatpush1.bf16.msra.mxu0 0
    %2583 = vmatprep.subr.bf16.mxu0 0
    %2584 = vmatpush1.bf16.msra.mxu0 0
    %2585 = vmatprep.subr.bf16.mxu0 0
    %2586 = vmatpush1.bf16.msra.mxu0 0
    %2587 = vmatprep.subr.bf16.mxu0 0
    %2588 = vmatpush1.bf16.msra.mxu0 0
    %2589 = vmatprep.subr.bf16.mxu0 0
    %2590 = vmatpush1.bf16.msra.mxu0 0
    %2591 = vmatprep.subr.bf16.mxu0 0
    %2592 = vmatpush1.bf16.msra.mxu0 0
    %2593 = vmatprep.mubr.bf16.mxu0 0
    %2594 = vmatmul.mubr.bf16.gmra.mrb[0].mxu0 %v2211
    %v2595 = vpop.f32.mrb[0].mxu0
    %v2596 = vadd.f32 %v1235, %v2595
    %v2597 = vpop.f32.mrb[0].mxu0
    %v2598 = vadd.f32 %v1239, %v2597
    %v2599 = vpop.f32.mrb[0].mxu0
    %v2600 = vpop.f32.mrb[0].mxu0
    %2601 = vdwg.mxu0
    %2602 = vmatprep.subr.bf16.mxu0 %v1615
    %2603 = vmatpush1.bf16.msra.mxu0 %v1614
    %2604 = vmatprep.subr.bf16.mxu0 %v1619
    %2605 = vmatpush1.bf16.msra.mxu0 %v1618
    %2606 = vmatprep.subr.bf16.mxu0 %v1623
    %2607 = vmatpush1.bf16.msra.mxu0 %v1622
    %2608 = vmatprep.subr.bf16.mxu0 %v1627
    %2609 = vmatpush1.bf16.msra.mxu0 %v1626
    %2610 = vmatprep.subr.bf16.mxu0 %v1631
    %2611 = vmatpush1.bf16.msra.mxu0 %v1630
    %2612 = vmatprep.subr.bf16.mxu0 %v1635
    %2613 = vmatpush1.bf16.msra.mxu0 %v1634
    %2614 = vmatprep.subr.bf16.mxu0 %v1639
    %2615 = vmatpush1.bf16.msra.mxu0 %v1638
    %2616 = vmatprep.subr.bf16.mxu0 %v1643
    %2617 = vmatpush1.bf16.msra.mxu0 %v1642
    %2618 = vmatprep.subr.bf16.mxu0 0
    %2619 = vmatpush1.bf16.msra.mxu0 0
    %2620 = vmatprep.subr.bf16.mxu0 0
    %2621 = vmatpush1.bf16.msra.mxu0 0
    %2622 = vmatprep.subr.bf16.mxu0 0
    %2623 = vmatpush1.bf16.msra.mxu0 0
    %2624 = vmatprep.subr.bf16.mxu0 0
    %2625 = vmatpush1.bf16.msra.mxu0 0
    %2626 = vmatprep.subr.bf16.mxu0 0
    %2627 = vmatpush1.bf16.msra.mxu0 0
    %2628 = vmatprep.subr.bf16.mxu0 0
    %2629 = vmatpush1.bf16.msra.mxu0 0
    %2630 = vmatprep.subr.bf16.mxu0 0
    %2631 = vmatpush1.bf16.msra.mxu0 0
    %2632 = vmatprep.subr.bf16.mxu0 0
    %2633 = vmatpush1.bf16.msra.mxu0 0
    %2634 = vmatprep.mubr.bf16.mxu0 0
    %2635 = vmatmul.mubr.bf16.gmra.mrb[0].mxu0 %v2404
    %v2636 = vpop.f32.mrb[0].mxu0
    %v2637 = vadd.f32 0.0, %v2636
    %v2638 = vpop.f32.mrb[0].mxu0
    %v2639 = vadd.f32 0.0, %v2638
    %v2640 = vpop.f32.mrb[0].mxu0
    %v2641 = vpop.f32.mrb[0].mxu0
    %2642 = vdwg.mxu0
    %2643 = vmatprep.subr.bf16.mxu0 %v1617
    %2644 = vmatpush1.bf16.msra.mxu0 %v1616
    %2645 = vmatprep.subr.bf16.mxu0 %v1621
    %2646 = vmatpush1.bf16.msra.mxu0 %v1620
    %2647 = vmatprep.subr.bf16.mxu0 %v1625
    %2648 = vmatpush1.bf16.msra.mxu0 %v1624
    %2649 = vmatprep.subr.bf16.mxu0 %v1629
    %2650 = vmatpush1.bf16.msra.mxu0 %v1628
    %2651 = vmatprep.subr.bf16.mxu0 %v1633
    %2652 = vmatpush1.bf16.msra.mxu0 %v1632
    %2653 = vmatprep.subr.bf16.mxu0 %v1637
    %2654 = vmatpush1.bf16.msra.mxu0 %v1636
    %2655 = vmatprep.subr.bf16.mxu0 %v1641
    %2656 = vmatpush1.bf16.msra.mxu0 %v1640
    %2657 = vmatprep.subr.bf16.mxu0 %v1645
    %2658 = vmatpush1.bf16.msra.mxu0 %v1644
    %2659 = vmatprep.subr.bf16.mxu0 0
    %2660 = vmatpush1.bf16.msra.mxu0 0
    %2661 = vmatprep.subr.bf16.mxu0 0
    %2662 = vmatpush1.bf16.msra.mxu0 0
    %2663 = vmatprep.subr.bf16.mxu0 0
    %2664 = vmatpush1.bf16.msra.mxu0 0
    %2665 = vmatprep.subr.bf16.mxu0 0
    %2666 = vmatpush1.bf16.msra.mxu0 0
    %2667 = vmatprep.subr.bf16.mxu0 0
    %2668 = vmatpush1.bf16.msra.mxu0 0
    %2669 = vmatprep.subr.bf16.mxu0 0
    %2670 = vmatpush1.bf16.msra.mxu0 0
    %2671 = vmatprep.subr.bf16.mxu0 0
    %2672 = vmatpush1.bf16.msra.mxu0 0
    %2673 = vmatprep.subr.bf16.mxu0 0
    %2674 = vmatpush1.bf16.msra.mxu0 0
    %2675 = vmatprep.mubr.bf16.mxu0 0
    %2676 = vmatmul.mubr.bf16.gmra.mrb[0].mxu0 %v2404
    %v2677 = vpop.f32.mrb[0].mxu0
    %v2678 = vadd.f32 0.0, %v2677
    %v2679 = vpop.f32.mrb[0].mxu0
    %v2680 = vadd.f32 0.0, %v2679
    %v2681 = vpop.f32.mrb[0].mxu0
    %v2682 = vpop.f32.mrb[0].mxu0
    %2683 = vdwg.mxu0
    %v2684 = vadd.f32 %v2555, %v2637
    %v2685 = vadd.f32 %v2557, %v2639
    %v2686 = vadd.f32 %v2596, %v2678
    %v2687 = vadd.f32 %v2598, %v2680
    %v2688 = vxor.u32 %v2684, 2147483648
    %v2689 = vxor.u32 %v2685, 2147483648
    %v2690 = vxor.u32 %v2686, 2147483648
    %v2691 = vmul.f32 %v2688, 1.442695
    %v2692 = vpow.pop %v2691
    %v2693 = vmul.f32 %v2689, 1.442695
    %v2694 = vpow.pop %v2693
    %v2695 = vmul.f32 %v2690, 1.442695
    %v2696 = vpow.pop %v2695
    %v2697 = vadd.f32 %v2692, 1.0
    %v2698 = vadd.f32 %v2694, 1.0
    %v2699 = vadd.f32 %v2696, 1.0
    %v2700 = vrcp.pop %v2697
    %v2701 = vmul.f32 1.0, %v2700
    %v2702 = vrcp.pop %v2698
    %v2703 = vmul.f32 1.0, %v2702
    %v2704 = vrcp.pop %v2699
    %v2705 = vmul.f32 1.0, %v2704
    %v2706 = vtanh.pop %v2687
    %v2707 = vmul.f32 %v2703, %v2401
    %v2708 = vmul.f32 %v2701, %v2706
    %v2709 = vadd.f32 %v2707, %v2708
    %v2710 = vtanh.pop %v2709
    %v2711 = vmul.f32 %v2705, %v2710
    %v2712 = vpack.c.bf16 %v2711, %v2711
    %v2713 = vld [vmem:[#allocation2 + $0xa0] sm:$0xff]
    %v2714 = vld [vmem:[#allocation2 + $0xa8] sm:$0xff]
    %v2715 = vld [vmem:[#allocation2 + $0xb0] sm:$0xff]
    %v2716 = vld [vmem:[#allocation2 + $0xb8] sm:$0xff]
    %2717 = vmatprep.subr.bf16.mxu0 %v901
    %2718 = vmatpush1.bf16.msra.mxu0 %v900
    %2719 = vmatprep.subr.bf16.mxu0 %v905
    %2720 = vmatpush1.bf16.msra.mxu0 %v904
    %2721 = vmatprep.subr.bf16.mxu0 %v909
    %2722 = vmatpush1.bf16.msra.mxu0 %v908
    %2723 = vmatprep.subr.bf16.mxu0 %v913
    %2724 = vmatpush1.bf16.msra.mxu0 %v912
    %2725 = vmatprep.subr.bf16.mxu0 %v917
    %2726 = vmatpush1.bf16.msra.mxu0 %v916
    %2727 = vmatprep.subr.bf16.mxu0 %v921
    %2728 = vmatpush1.bf16.msra.mxu0 %v920
    %2729 = vmatprep.subr.bf16.mxu0 %v925
    %2730 = vmatpush1.bf16.msra.mxu0 %v924
    %2731 = vmatprep.subr.bf16.mxu0 %v929
    %2732 = vmatpush1.bf16.msra.mxu0 %v928
    %2733 = vmatprep.subr.bf16.mxu0 0
    %2734 = vmatpush1.bf16.msra.mxu0 0
    %2735 = vmatprep.subr.bf16.mxu0 0
    %2736 = vmatpush1.bf16.msra.mxu0 0
    %2737 = vmatprep.subr.bf16.mxu0 0
    %2738 = vmatpush1.bf16.msra.mxu0 0
    %2739 = vmatprep.subr.bf16.mxu0 0
    %2740 = vmatpush1.bf16.msra.mxu0 0
    %2741 = vmatprep.subr.bf16.mxu0 0
    %2742 = vmatpush1.bf16.msra.mxu0 0
    %2743 = vmatprep.subr.bf16.mxu0 0
    %2744 = vmatpush1.bf16.msra.mxu0 0
    %2745 = vmatprep.subr.bf16.mxu0 0
    %2746 = vmatpush1.bf16.msra.mxu0 0
    %2747 = vmatprep.subr.bf16.mxu0 0
    %2748 = vmatpush1.bf16.msra.mxu0 0
    %2749 = vmatprep.mubr.bf16.mxu0 0
    %2750 = vmatmul.mubr.bf16.gmra.mrb[0].mxu0 %v2519
    %v2751 = vpop.f32.mrb[0].mxu0
    %v2752 = vadd.f32 0.0, %v2751
    %v2753 = vpop.f32.mrb[0].mxu0
    %v2754 = vadd.f32 0.0, %v2753
    %v2755 = vpop.f32.mrb[0].mxu0
    %v2756 = vpop.f32.mrb[0].mxu0
    %2757 = vdwg.mxu0
    %2758 = vmatprep.subr.bf16.mxu0 %v903
    %2759 = vmatpush1.bf16.msra.mxu0 %v902
    %2760 = vmatprep.subr.bf16.mxu0 %v907
    %2761 = vmatpush1.bf16.msra.mxu0 %v906
    %2762 = vmatprep.subr.bf16.mxu0 %v911
    %2763 = vmatpush1.bf16.msra.mxu0 %v910
    %2764 = vmatprep.subr.bf16.mxu0 %v915
    %2765 = vmatpush1.bf16.msra.mxu0 %v914
    %2766 = vmatprep.subr.bf16.mxu0 %v919
    %2767 = vmatpush1.bf16.msra.mxu0 %v918
    %2768 = vmatprep.subr.bf16.mxu0 %v923
    %2769 = vmatpush1.bf16.msra.mxu0 %v922
    %2770 = vmatprep.subr.bf16.mxu0 %v927
    %2771 = vmatpush1.bf16.msra.mxu0 %v926
    %2772 = vmatprep.subr.bf16.mxu0 %v931
    %2773 = vmatpush1.bf16.msra.mxu0 %v930
    %2774 = vmatprep.subr.bf16.mxu0 0
    %2775 = vmatpush1.bf16.msra.mxu0 0
    %2776 = vmatprep.subr.bf16.mxu0 0
    %2777 = vmatpush1.bf16.msra.mxu0 0
    %2778 = vmatprep.subr.bf16.mxu0 0
    %2779 = vmatpush1.bf16.msra.mxu0 0
    %2780 = vmatprep.subr.bf16.mxu0 0
    %2781 = vmatpush1.bf16.msra.mxu0 0
    %2782 = vmatprep.subr.bf16.mxu0 0
    %2783 = vmatpush1.bf16.msra.mxu0 0
    %2784 = vmatprep.subr.bf16.mxu0 0
    %2785 = vmatpush1.bf16.msra.mxu0 0
    %2786 = vmatprep.subr.bf16.mxu0 0
    %2787 = vmatpush1.bf16.msra.mxu0 0
    %2788 = vmatprep.subr.bf16.mxu0 0
    %2789 = vmatpush1.bf16.msra.mxu0 0
    %2790 = vmatprep.mubr.bf16.mxu0 0
    %2791 = vmatmul.mubr.bf16.gmra.mrb[0].mxu0 %v2519
    %v2792 = vpop.f32.mrb[0].mxu0
    %v2793 = vadd.f32 0.0, %v2792
    %v2794 = vpop.f32.mrb[0].mxu0
    %v2795 = vadd.f32 0.0, %v2794
    %v2796 = vpop.f32.mrb[0].mxu0
    %v2797 = vpop.f32.mrb[0].mxu0
    %2798 = vdwg.mxu0
    %v2799 = vadd.f32 %v2713, %v2752
    %v2800 = vadd.f32 %v2714, %v2754
    %v2801 = vadd.f32 %v2715, %v2793
    %v2802 = vadd.f32 %v2716, %v2795
    %v2803 = vxor.u32 %v2799, 2147483648
    %v2804 = vxor.u32 %v2800, 2147483648
    %v2805 = vxor.u32 %v2801, 2147483648
    %v2806 = vmul.f32 %v2803, 1.442695
    %v2807 = vpow.pop %v2806
    %v2808 = vmul.f32 %v2804, 1.442695
    %v2809 = vpow.pop %v2808
    %v2810 = vmul.f32 %v2805, 1.442695
    %v2811 = vpow.pop %v2810
    %v2812 = vadd.f32 %v2807, 1.0
    %v2813 = vadd.f32 %v2809, 1.0
    %v2814 = vadd.f32 %v2811, 1.0
    %v2815 = vrcp.pop %v2812
    %v2816 = vmul.f32 1.0, %v2815
    %v2817 = vrcp.pop %v2813
    %v2818 = vmul.f32 1.0, %v2817
    %v2819 = vrcp.pop %v2814
    %v2820 = vmul.f32 1.0, %v2819
    %v2821 = vtanh.pop %v2802
    %v2822 = vmul.f32 %v2818, %v2516
    %v2823 = vmul.f32 %v2816, %v2821
    %v2824 = vadd.f32 %v2822, %v2823
    %v2825 = vtanh.pop %v2824
    %v2826 = vmul.f32 %v2820, %v2825
    %v2827 = vpack.c.bf16 %v2826, %v2826
    %2828 = vmatprep.subr.bf16.mxu0 %v1341
    %2829 = vmatpush1.bf16.msra.mxu0 %v1340
    %2830 = vmatprep.subr.bf16.mxu0 %v1345
    %2831 = vmatpush1.bf16.msra.mxu0 %v1344
    %2832 = vmatprep.subr.bf16.mxu0 %v1349
    %2833 = vmatpush1.bf16.msra.mxu0 %v1348
    %2834 = vmatprep.subr.bf16.mxu0 %v1353
    %2835 = vmatpush1.bf16.msra.mxu0 %v1352
    %2836 = vmatprep.subr.bf16.mxu0 %v1357
    %2837 = vmatpush1.bf16.msra.mxu0 %v1356
    %2838 = vmatprep.subr.bf16.mxu0 %v1361
    %2839 = vmatpush1.bf16.msra.mxu0 %v1360
    %2840 = vmatprep.subr.bf16.mxu0 %v1365
    %2841 = vmatpush1.bf16.msra.mxu0 %v1364
    %2842 = vmatprep.subr.bf16.mxu0 %v1369
    %2843 = vmatpush1.bf16.msra.mxu0 %v1368
    %2844 = vmatprep.subr.bf16.mxu0 0
    %2845 = vmatpush1.bf16.msra.mxu0 0
    %2846 = vmatprep.subr.bf16.mxu0 0
    %2847 = vmatpush1.bf16.msra.mxu0 0
    %2848 = vmatprep.subr.bf16.mxu0 0
    %2849 = vmatpush1.bf16.msra.mxu0 0
    %2850 = vmatprep.subr.bf16.mxu0 0
    %2851 = vmatpush1.bf16.msra.mxu0 0
    %2852 = vmatprep.subr.bf16.mxu0 0
    %2853 = vmatpush1.bf16.msra.mxu0 0
    %2854 = vmatprep.subr.bf16.mxu0 0
    %2855 = vmatpush1.bf16.msra.mxu0 0
    %2856 = vmatprep.subr.bf16.mxu0 0
    %2857 = vmatpush1.bf16.msra.mxu0 0
    %2858 = vmatprep.subr.bf16.mxu0 0
    %2859 = vmatpush1.bf16.msra.mxu0 0
    %2860 = vmatprep.mubr.bf16.mxu0 0
    %2861 = vmatmul.mubr.bf16.gmra.mrb[0].mxu0 %v2519
    %v2862 = vpop.f32.mrb[0].mxu0
    %v2863 = vadd.f32 %v1227, %v2862
    %v2864 = vpop.f32.mrb[0].mxu0
    %v2865 = vadd.f32 %v1231, %v2864
    %v2866 = vpop.f32.mrb[0].mxu0
    %v2867 = vpop.f32.mrb[0].mxu0
    %2868 = vdwg.mxu0
    %2869 = vmatprep.subr.bf16.mxu0 %v1343
    %2870 = vmatpush1.bf16.msra.mxu0 %v1342
    %2871 = vmatprep.subr.bf16.mxu0 %v1347
    %2872 = vmatpush1.bf16.msra.mxu0 %v1346
    %2873 = vmatprep.subr.bf16.mxu0 %v1351
    %2874 = vmatpush1.bf16.msra.mxu0 %v1350
    %2875 = vmatprep.subr.bf16.mxu0 %v1355
    %2876 = vmatpush1.bf16.msra.mxu0 %v1354
    %2877 = vmatprep.subr.bf16.mxu0 %v1359
    %2878 = vmatpush1.bf16.msra.mxu0 %v1358
    %2879 = vmatprep.subr.bf16.mxu0 %v1363
    %2880 = vmatpush1.bf16.msra.mxu0 %v1362
    %2881 = vmatprep.subr.bf16.mxu0 %v1367
    %2882 = vmatpush1.bf16.msra.mxu0 %v1366
    %2883 = vmatprep.subr.bf16.mxu0 %v1371
    %2884 = vmatpush1.bf16.msra.mxu0 %v1370
    %2885 = vmatprep.subr.bf16.mxu0 0
    %2886 = vmatpush1.bf16.msra.mxu0 0
    %2887 = vmatprep.subr.bf16.mxu0 0
    %2888 = vmatpush1.bf16.msra.mxu0 0
    %2889 = vmatprep.subr.bf16.mxu0 0
    %2890 = vmatpush1.bf16.msra.mxu0 0
    %2891 = vmatprep.subr.bf16.mxu0 0
    %2892 = vmatpush1.bf16.msra.mxu0 0
    %2893 = vmatprep.subr.bf16.mxu0 0
    %2894 = vmatpush1.bf16.msra.mxu0 0
    %2895 = vmatprep.subr.bf16.mxu0 0
    %2896 = vmatpush1.bf16.msra.mxu0 0
    %2897 = vmatprep.subr.bf16.mxu0 0
    %2898 = vmatpush1.bf16.msra.mxu0 0
    %2899 = vmatprep.subr.bf16.mxu0 0
    %2900 = vmatpush1.bf16.msra.mxu0 0
    %2901 = vmatprep.mubr.bf16.mxu0 0
    %2902 = vmatmul.mubr.bf16.gmra.mrb[0].mxu0 %v2519
    %v2903 = vpop.f32.mrb[0].mxu0
    %v2904 = vadd.f32 %v1235, %v2903
    %v2905 = vpop.f32.mrb[0].mxu0
    %v2906 = vadd.f32 %v1239, %v2905
    %v2907 = vpop.f32.mrb[0].mxu0
    %v2908 = vpop.f32.mrb[0].mxu0
    %2909 = vdwg.mxu0
    %2910 = vmatprep.subr.bf16.mxu0 %v1615
    %2911 = vmatpush1.bf16.msra.mxu0 %v1614
    %2912 = vmatprep.subr.bf16.mxu0 %v1619
    %2913 = vmatpush1.bf16.msra.mxu0 %v1618
    %2914 = vmatprep.subr.bf16.mxu0 %v1623
    %2915 = vmatpush1.bf16.msra.mxu0 %v1622
    %2916 = vmatprep.subr.bf16.mxu0 %v1627
    %2917 = vmatpush1.bf16.msra.mxu0 %v1626
    %2918 = vmatprep.subr.bf16.mxu0 %v1631
    %2919 = vmatpush1.bf16.msra.mxu0 %v1630
    %2920 = vmatprep.subr.bf16.mxu0 %v1635
    %2921 = vmatpush1.bf16.msra.mxu0 %v1634
    %2922 = vmatprep.subr.bf16.mxu0 %v1639
    %2923 = vmatpush1.bf16.msra.mxu0 %v1638
    %2924 = vmatprep.subr.bf16.mxu0 %v1643
    %2925 = vmatpush1.bf16.msra.mxu0 %v1642
    %2926 = vmatprep.subr.bf16.mxu0 0
    %2927 = vmatpush1.bf16.msra.mxu0 0
    %2928 = vmatprep.subr.bf16.mxu0 0
    %2929 = vmatpush1.bf16.msra.mxu0 0
    %2930 = vmatprep.subr.bf16.mxu0 0
    %2931 = vmatpush1.bf16.msra.mxu0 0
    %2932 = vmatprep.subr.bf16.mxu0 0
    %2933 = vmatpush1.bf16.msra.mxu0 0
    %2934 = vmatprep.subr.bf16.mxu0 0
    %2935 = vmatpush1.bf16.msra.mxu0 0
    %2936 = vmatprep.subr.bf16.mxu0 0
    %2937 = vmatpush1.bf16.msra.mxu0 0
    %2938 = vmatprep.subr.bf16.mxu0 0
    %2939 = vmatpush1.bf16.msra.mxu0 0
    %2940 = vmatprep.subr.bf16.mxu0 0
    %2941 = vmatpush1.bf16.msra.mxu0 0
    %2942 = vmatprep.mubr.bf16.mxu0 0
    %2943 = vmatmul.mubr.bf16.gmra.mrb[0].mxu0 %v2712
    %v2944 = vpop.f32.mrb[0].mxu0
    %v2945 = vadd.f32 0.0, %v2944
    %v2946 = vpop.f32.mrb[0].mxu0
    %v2947 = vadd.f32 0.0, %v2946
    %v2948 = vpop.f32.mrb[0].mxu0
    %v2949 = vpop.f32.mrb[0].mxu0
    %2950 = vdwg.mxu0
    %2951 = vmatprep.subr.bf16.mxu0 %v1617
    %2952 = vmatpush1.bf16.msra.mxu0 %v1616
    %2953 = vmatprep.subr.bf16.mxu0 %v1621
    %2954 = vmatpush1.bf16.msra.mxu0 %v1620
    %2955 = vmatprep.subr.bf16.mxu0 %v1625
    %2956 = vmatpush1.bf16.msra.mxu0 %v1624
    %2957 = vmatprep.subr.bf16.mxu0 %v1629
    %2958 = vmatpush1.bf16.msra.mxu0 %v1628
    %2959 = vmatprep.subr.bf16.mxu0 %v1633
    %2960 = vmatpush1.bf16.msra.mxu0 %v1632
    %2961 = vmatprep.subr.bf16.mxu0 %v1637
    %2962 = vmatpush1.bf16.msra.mxu0 %v1636
    %2963 = vmatprep.subr.bf16.mxu0 %v1641
    %2964 = vmatpush1.bf16.msra.mxu0 %v1640
    %2965 = vmatprep.subr.bf16.mxu0 %v1645
    %2966 = vmatpush1.bf16.msra.mxu0 %v1644
    %2967 = vmatprep.subr.bf16.mxu0 0
    %2968 = vmatpush1.bf16.msra.mxu0 0
    %2969 = vmatprep.subr.bf16.mxu0 0
    %2970 = vmatpush1.bf16.msra.mxu0 0
    %2971 = vmatprep.subr.bf16.mxu0 0
    %2972 = vmatpush1.bf16.msra.mxu0 0
    %2973 = vmatprep.subr.bf16.mxu0 0
    %2974 = vmatpush1.bf16.msra.mxu0 0
    %2975 = vmatprep.subr.bf16.mxu0 0
    %2976 = vmatpush1.bf16.msra.mxu0 0
    %2977 = vmatprep.subr.bf16.mxu0 0
    %2978 = vmatpush1.bf16.msra.mxu0 0
    %2979 = vmatprep.subr.bf16.mxu0 0
    %2980 = vmatpush1.bf16.msra.mxu0 0
    %2981 = vmatprep.subr.bf16.mxu0 0
    %2982 = vmatpush1.bf16.msra.mxu0 0
    %2983 = vmatprep.mubr.bf16.mxu0 0
    %2984 = vmatmul.mubr.bf16.gmra.mrb[0].mxu0 %v2712
    %v2985 = vpop.f32.mrb[0].mxu0
    %v2986 = vadd.f32 0.0, %v2985
    %v2987 = vpop.f32.mrb[0].mxu0
    %v2988 = vadd.f32 0.0, %v2987
    %v2989 = vpop.f32.mrb[0].mxu0
    %v2990 = vpop.f32.mrb[0].mxu0
    %2991 = vdwg.mxu0
    %v2992 = vadd.f32 %v2863, %v2945
    %v2993 = vadd.f32 %v2865, %v2947
    %v2994 = vadd.f32 %v2904, %v2986
    %v2995 = vadd.f32 %v2906, %v2988
    %v2996 = vxor.u32 %v2992, 2147483648
    %v2997 = vxor.u32 %v2993, 2147483648
    %v2998 = vxor.u32 %v2994, 2147483648
    %v2999 = vmul.f32 %v2996, 1.442695
    %v3000 = vpow.pop %v2999
    %v3001 = vmul.f32 %v2997, 1.442695
    %v3002 = vpow.pop %v3001
    %v3003 = vmul.f32 %v2998, 1.442695
    %v3004 = vpow.pop %v3003
    %v3005 = vadd.f32 %v3000, 1.0
    %v3006 = vadd.f32 %v3002, 1.0
    %v3007 = vadd.f32 %v3004, 1.0
    %v3008 = vrcp.pop %v3005
    %v3009 = vmul.f32 1.0, %v3008
    %v3010 = vrcp.pop %v3006
    %v3011 = vmul.f32 1.0, %v3010
    %v3012 = vrcp.pop %v3007
    %v3013 = vmul.f32 1.0, %v3012
    %v3014 = vtanh.pop %v2995
    %v3015 = vmul.f32 %v3011, %v2709
    %v3016 = vmul.f32 %v3009, %v3014
    %v3017 = vadd.f32 %v3015, %v3016
    %v3018 = vtanh.pop %v3017
    %v3019 = vmul.f32 %v3013, %v3018
    %v3020 = vpack.c.bf16 %v3019, %v3019
    %v3021 = vld [vmem:[#allocation2 + $0xc0] sm:$0xff]
    %v3022 = vld [vmem:[#allocation2 + $0xc8] sm:$0xff]
    %v3023 = vld [vmem:[#allocation2 + $0xd0] sm:$0xff]
    %v3024 = vld [vmem:[#allocation2 + $0xd8] sm:$0xff]
    %3025 = vmatprep.subr.bf16.mxu0 %v901
    %3026 = vmatpush1.bf16.msra.mxu0 %v900
    %3027 = vmatprep.subr.bf16.mxu0 %v905
    %3028 = vmatpush1.bf16.msra.mxu0 %v904
    %3029 = vmatprep.subr.bf16.mxu0 %v909
    %3030 = vmatpush1.bf16.msra.mxu0 %v908
    %3031 = vmatprep.subr.bf16.mxu0 %v913
    %3032 = vmatpush1.bf16.msra.mxu0 %v912
    %3033 = vmatprep.subr.bf16.mxu0 %v917
    %3034 = vmatpush1.bf16.msra.mxu0 %v916
    %3035 = vmatprep.subr.bf16.mxu0 %v921
    %3036 = vmatpush1.bf16.msra.mxu0 %v920
    %3037 = vmatprep.subr.bf16.mxu0 %v925
    %3038 = vmatpush1.bf16.msra.mxu0 %v924
    %3039 = vmatprep.subr.bf16.mxu0 %v929
    %3040 = vmatpush1.bf16.msra.mxu0 %v928
    %3041 = vmatprep.subr.bf16.mxu0 0
    %3042 = vmatpush1.bf16.msra.mxu0 0
    %3043 = vmatprep.subr.bf16.mxu0 0
    %3044 = vmatpush1.bf16.msra.mxu0 0
    %3045 = vmatprep.subr.bf16.mxu0 0
    %3046 = vmatpush1.bf16.msra.mxu0 0
    %3047 = vmatprep.subr.bf16.mxu0 0
    %3048 = vmatpush1.bf16.msra.mxu0 0
    %3049 = vmatprep.subr.bf16.mxu0 0
    %3050 = vmatpush1.bf16.msra.mxu0 0
    %3051 = vmatprep.subr.bf16.mxu0 0
    %3052 = vmatpush1.bf16.msra.mxu0 0
    %3053 = vmatprep.subr.bf16.mxu0 0
    %3054 = vmatpush1.bf16.msra.mxu0 0
    %3055 = vmatprep.subr.bf16.mxu0 0
    %3056 = vmatpush1.bf16.msra.mxu0 0
    %3057 = vmatprep.mubr.bf16.mxu0 0
    %3058 = vmatmul.mubr.bf16.gmra.mrb[0].mxu0 %v2827
    %v3059 = vpop.f32.mrb[0].mxu0
    %v3060 = vadd.f32 0.0, %v3059
    %v3061 = vpop.f32.mrb[0].mxu0
    %v3062 = vadd.f32 0.0, %v3061
    %v3063 = vpop.f32.mrb[0].mxu0
    %v3064 = vpop.f32.mrb[0].mxu0
    %3065 = vdwg.mxu0
    %3066 = vmatprep.subr.bf16.mxu0 %v903
    %3067 = vmatpush1.bf16.msra.mxu0 %v902
    %3068 = vmatprep.subr.bf16.mxu0 %v907
    %3069 = vmatpush1.bf16.msra.mxu0 %v906
    %3070 = vmatprep.subr.bf16.mxu0 %v911
    %3071 = vmatpush1.bf16.msra.mxu0 %v910
    %3072 = vmatprep.subr.bf16.mxu0 %v915
    %3073 = vmatpush1.bf16.msra.mxu0 %v914
    %3074 = vmatprep.subr.bf16.mxu0 %v919
    %3075 = vmatpush1.bf16.msra.mxu0 %v918
    %3076 = vmatprep.subr.bf16.mxu0 %v923
    %3077 = vmatpush1.bf16.msra.mxu0 %v922
    %3078 = vmatprep.subr.bf16.mxu0 %v927
    %3079 = vmatpush1.bf16.msra.mxu0 %v926
    %3080 = vmatprep.subr.bf16.mxu0 %v931
    %3081 = vmatpush1.bf16.msra.mxu0 %v930
    %3082 = vmatprep.subr.bf16.mxu0 0
    %3083 = vmatpush1.bf16.msra.mxu0 0
    %3084 = vmatprep.subr.bf16.mxu0 0
    %3085 = vmatpush1.bf16.msra.mxu0 0
    %3086 = vmatprep.subr.bf16.mxu0 0
    %3087 = vmatpush1.bf16.msra.mxu0 0
    %3088 = vmatprep.subr.bf16.mxu0 0
    %3089 = vmatpush1.bf16.msra.mxu0 0
    %3090 = vmatprep.subr.bf16.mxu0 0
    %3091 = vmatpush1.bf16.msra.mxu0 0
    %3092 = vmatprep.subr.bf16.mxu0 0
    %3093 = vmatpush1.bf16.msra.mxu0 0
    %3094 = vmatprep.subr.bf16.mxu0 0
    %3095 = vmatpush1.bf16.msra.mxu0 0
    %3096 = vmatprep.subr.bf16.mxu0 0
    %3097 = vmatpush1.bf16.msra.mxu0 0
    %3098 = vmatprep.mubr.bf16.mxu0 0
    %3099 = vmatmul.mubr.bf16.gmra.mrb[0].mxu0 %v2827
    %v3100 = vpop.f32.mrb[0].mxu0
    %v3101 = vadd.f32 0.0, %v3100
    %v3102 = vpop.f32.mrb[0].mxu0
    %v3103 = vadd.f32 0.0, %v3102
    %v3104 = vpop.f32.mrb[0].mxu0
    %v3105 = vpop.f32.mrb[0].mxu0
    %3106 = vdwg.mxu0
    %v3107 = vadd.f32 %v3021, %v3060
    %v3108 = vadd.f32 %v3022, %v3062
    %v3109 = vadd.f32 %v3023, %v3101
    %v3110 = vadd.f32 %v3024, %v3103
    %v3111 = vxor.u32 %v3107, 2147483648
    %v3112 = vxor.u32 %v3108, 2147483648
    %v3113 = vxor.u32 %v3109, 2147483648
    %v3114 = vmul.f32 %v3111, 1.442695
    %v3115 = vpow.pop %v3114
    %v3116 = vmul.f32 %v3112, 1.442695
    %v3117 = vpow.pop %v3116
    %v3118 = vmul.f32 %v3113, 1.442695
    %v3119 = vpow.pop %v3118
    %v3120 = vadd.f32 %v3115, 1.0
    %v3121 = vadd.f32 %v3117, 1.0
    %v3122 = vadd.f32 %v3119, 1.0
    %v3123 = vrcp.pop %v3120
    %v3124 = vmul.f32 1.0, %v3123
    %v3125 = vrcp.pop %v3121
    %v3126 = vmul.f32 1.0, %v3125
    %v3127 = vrcp.pop %v3122
    %v3128 = vmul.f32 1.0, %v3127
    %v3129 = vtanh.pop %v3110
    %v3130 = vmul.f32 %v3126, %v2824
    %v3131 = vmul.f32 %v3124, %v3129
    %v3132 = vadd.f32 %v3130, %v3131
    %v3133 = vtanh.pop %v3132
    %v3134 = vmul.f32 %v3128, %v3133
    %v3135 = vpack.c.bf16 %v3134, %v3134
    %3136 = vmatprep.subr.bf16.mxu0 %v1341
    %3137 = vmatpush1.bf16.msra.mxu0 %v1340
    %3138 = vmatprep.subr.bf16.mxu0 %v1345
    %3139 = vmatpush1.bf16.msra.mxu0 %v1344
    %3140 = vmatprep.subr.bf16.mxu0 %v1349
    %3141 = vmatpush1.bf16.msra.mxu0 %v1348
    %3142 = vmatprep.subr.bf16.mxu0 %v1353
    %3143 = vmatpush1.bf16.msra.mxu0 %v1352
    %3144 = vmatprep.subr.bf16.mxu0 %v1357
    %3145 = vmatpush1.bf16.msra.mxu0 %v1356
    %3146 = vmatprep.subr.bf16.mxu0 %v1361
    %3147 = vmatpush1.bf16.msra.mxu0 %v1360
    %3148 = vmatprep.subr.bf16.mxu0 %v1365
    %3149 = vmatpush1.bf16.msra.mxu0 %v1364
    %3150 = vmatprep.subr.bf16.mxu0 %v1369
    %3151 = vmatpush1.bf16.msra.mxu0 %v1368
    %3152 = vmatprep.subr.bf16.mxu0 0
    %3153 = vmatpush1.bf16.msra.mxu0 0
    %3154 = vmatprep.subr.bf16.mxu0 0
    %3155 = vmatpush1.bf16.msra.mxu0 0
    %3156 = vmatprep.subr.bf16.mxu0 0
    %3157 = vmatpush1.bf16.msra.mxu0 0
    %3158 = vmatprep.subr.bf16.mxu0 0
    %3159 = vmatpush1.bf16.msra.mxu0 0
    %3160 = vmatprep.subr.bf16.mxu0 0
    %3161 = vmatpush1.bf16.msra.mxu0 0
    %3162 = vmatprep.subr.bf16.mxu0 0
    %3163 = vmatpush1.bf16.msra.mxu0 0
    %3164 = vmatprep.subr.bf16.mxu0 0
    %3165 = vmatpush1.bf16.msra.mxu0 0
    %3166 = vmatprep.subr.bf16.mxu0 0
    %3167 = vmatpush1.bf16.msra.mxu0 0
    %3168 = vmatprep.mubr.bf16.mxu0 0
    %3169 = vmatmul.mubr.bf16.gmra.mrb[0].mxu0 %v2827
    %v3170 = vpop.f32.mrb[0].mxu0
    %v3171 = vadd.f32 %v1227, %v3170
    %v3172 = vpop.f32.mrb[0].mxu0
    %v3173 = vadd.f32 %v1231, %v3172
    %v3174 = vpop.f32.mrb[0].mxu0
    %v3175 = vpop.f32.mrb[0].mxu0
    %3176 = vdwg.mxu0
    %3177 = vmatprep.subr.bf16.mxu0 %v1343
    %3178 = vmatpush1.bf16.msra.mxu0 %v1342
    %3179 = vmatprep.subr.bf16.mxu0 %v1347
    %3180 = vmatpush1.bf16.msra.mxu0 %v1346
    %3181 = vmatprep.subr.bf16.mxu0 %v1351
    %3182 = vmatpush1.bf16.msra.mxu0 %v1350
    %3183 = vmatprep.subr.bf16.mxu0 %v1355
    %3184 = vmatpush1.bf16.msra.mxu0 %v1354
    %3185 = vmatprep.subr.bf16.mxu0 %v1359
    %3186 = vmatpush1.bf16.msra.mxu0 %v1358
    %3187 = vmatprep.subr.bf16.mxu0 %v1363
    %3188 = vmatpush1.bf16.msra.mxu0 %v1362
    %3189 = vmatprep.subr.bf16.mxu0 %v1367
    %3190 = vmatpush1.bf16.msra.mxu0 %v1366
    %3191 = vmatprep.subr.bf16.mxu0 %v1371
    %3192 = vmatpush1.bf16.msra.mxu0 %v1370
    %3193 = vmatprep.subr.bf16.mxu0 0
    %3194 = vmatpush1.bf16.msra.mxu0 0
    %3195 = vmatprep.subr.bf16.mxu0 0
    %3196 = vmatpush1.bf16.msra.mxu0 0
    %3197 = vmatprep.subr.bf16.mxu0 0
    %3198 = vmatpush1.bf16.msra.mxu0 0
    %3199 = vmatprep.subr.bf16.mxu0 0
    %3200 = vmatpush1.bf16.msra.mxu0 0
    %3201 = vmatprep.subr.bf16.mxu0 0
    %3202 = vmatpush1.bf16.msra.mxu0 0
    %3203 = vmatprep.subr.bf16.mxu0 0
    %3204 = vmatpush1.bf16.msra.mxu0 0
    %3205 = vmatprep.subr.bf16.mxu0 0
    %3206 = vmatpush1.bf16.msra.mxu0 0
    %3207 = vmatprep.subr.bf16.mxu0 0
    %3208 = vmatpush1.bf16.msra.mxu0 0
    %3209 = vmatprep.mubr.bf16.mxu0 0
    %3210 = vmatmul.mubr.bf16.gmra.mrb[0].mxu0 %v2827
    %v3211 = vpop.f32.mrb[0].mxu0
    %v3212 = vadd.f32 %v1235, %v3211
    %v3213 = vpop.f32.mrb[0].mxu0
    %v3214 = vadd.f32 %v1239, %v3213
    %v3215 = vpop.f32.mrb[0].mxu0
    %v3216 = vpop.f32.mrb[0].mxu0
    %3217 = vdwg.mxu0
    %3218 = vmatprep.subr.bf16.mxu0 %v1615
    %3219 = vmatpush1.bf16.msra.mxu0 %v1614
    %3220 = vmatprep.subr.bf16.mxu0 %v1619
    %3221 = vmatpush1.bf16.msra.mxu0 %v1618
    %3222 = vmatprep.subr.bf16.mxu0 %v1623
    %3223 = vmatpush1.bf16.msra.mxu0 %v1622
    %3224 = vmatprep.subr.bf16.mxu0 %v1627
    %3225 = vmatpush1.bf16.msra.mxu0 %v1626
    %3226 = vmatprep.subr.bf16.mxu0 %v1631
    %3227 = vmatpush1.bf16.msra.mxu0 %v1630
    %3228 = vmatprep.subr.bf16.mxu0 %v1635
    %3229 = vmatpush1.bf16.msra.mxu0 %v1634
    %3230 = vmatprep.subr.bf16.mxu0 %v1639
    %3231 = vmatpush1.bf16.msra.mxu0 %v1638
    %3232 = vmatprep.subr.bf16.mxu0 %v1643
    %3233 = vmatpush1.bf16.msra.mxu0 %v1642
    %3234 = vmatprep.subr.bf16.mxu0 0
    %3235 = vmatpush1.bf16.msra.mxu0 0
    %3236 = vmatprep.subr.bf16.mxu0 0
    %3237 = vmatpush1.bf16.msra.mxu0 0
    %3238 = vmatprep.subr.bf16.mxu0 0
    %3239 = vmatpush1.bf16.msra.mxu0 0
    %3240 = vmatprep.subr.bf16.mxu0 0
    %3241 = vmatpush1.bf16.msra.mxu0 0
    %3242 = vmatprep.subr.bf16.mxu0 0
    %3243 = vmatpush1.bf16.msra.mxu0 0
    %3244 = vmatprep.subr.bf16.mxu0 0
    %3245 = vmatpush1.bf16.msra.mxu0 0
    %3246 = vmatprep.subr.bf16.mxu0 0
    %3247 = vmatpush1.bf16.msra.mxu0 0
    %3248 = vmatprep.subr.bf16.mxu0 0
    %3249 = vmatpush1.bf16.msra.mxu0 0
    %3250 = vmatprep.mubr.bf16.mxu0 0
    %3251 = vmatmul.mubr.bf16.gmra.mrb[0].mxu0 %v3020
    %v3252 = vpop.f32.mrb[0].mxu0
    %v3253 = vadd.f32 0.0, %v3252
    %v3254 = vpop.f32.mrb[0].mxu0
    %v3255 = vadd.f32 0.0, %v3254
    %v3256 = vpop.f32.mrb[0].mxu0
    %v3257 = vpop.f32.mrb[0].mxu0
    %3258 = vdwg.mxu0
    %3259 = vmatprep.subr.bf16.mxu0 %v1617
    %3260 = vmatpush1.bf16.msra.mxu0 %v1616
    %3261 = vmatprep.subr.bf16.mxu0 %v1621
    %3262 = vmatpush1.bf16.msra.mxu0 %v1620
    %3263 = vmatprep.subr.bf16.mxu0 %v1625
    %3264 = vmatpush1.bf16.msra.mxu0 %v1624
    %3265 = vmatprep.subr.bf16.mxu0 %v1629
    %3266 = vmatpush1.bf16.msra.mxu0 %v1628
    %3267 = vmatprep.subr.bf16.mxu0 %v1633
    %3268 = vmatpush1.bf16.msra.mxu0 %v1632
    %3269 = vmatprep.subr.bf16.mxu0 %v1637
    %3270 = vmatpush1.bf16.msra.mxu0 %v1636
    %3271 = vmatprep.subr.bf16.mxu0 %v1641
    %3272 = vmatpush1.bf16.msra.mxu0 %v1640
    %3273 = vmatprep.subr.bf16.mxu0 %v1645
    %3274 = vmatpush1.bf16.msra.mxu0 %v1644
    %3275 = vmatprep.subr.bf16.mxu0 0
    %3276 = vmatpush1.bf16.msra.mxu0 0
    %3277 = vmatprep.subr.bf16.mxu0 0
    %3278 = vmatpush1.bf16.msra.mxu0 0
    %3279 = vmatprep.subr.bf16.mxu0 0
    %3280 = vmatpush1.bf16.msra.mxu0 0
    %3281 = vmatprep.subr.bf16.mxu0 0
    %3282 = vmatpush1.bf16.msra.mxu0 0
    %3283 = vmatprep.subr.bf16.mxu0 0
    %3284 = vmatpush1.bf16.msra.mxu0 0
    %3285 = vmatprep.subr.bf16.mxu0 0
    %3286 = vmatpush1.bf16.msra.mxu0 0
    %3287 = vmatprep.subr.bf16.mxu0 0
    %3288 = vmatpush1.bf16.msra.mxu0 0
    %3289 = vmatprep.subr.bf16.mxu0 0
    %3290 = vmatpush1.bf16.msra.mxu0 0
    %3291 = vmatprep.mubr.bf16.mxu0 0
    %3292 = vmatmul.mubr.bf16.gmra.mrb[0].mxu0 %v3020
    %v3293 = vpop.f32.mrb[0].mxu0
    %v3294 = vadd.f32 0.0, %v3293
    %v3295 = vpop.f32.mrb[0].mxu0
    %v3296 = vadd.f32 0.0, %v3295
    %v3297 = vpop.f32.mrb[0].mxu0
    %v3298 = vpop.f32.mrb[0].mxu0
    %3299 = vdwg.mxu0
    %v3300 = vadd.f32 %v3171, %v3253
    %v3301 = vadd.f32 %v3173, %v3255
    %v3302 = vadd.f32 %v3212, %v3294
    %v3303 = vadd.f32 %v3214, %v3296
    %v3304 = vxor.u32 %v3300, 2147483648
    %v3305 = vxor.u32 %v3301, 2147483648
    %v3306 = vxor.u32 %v3302, 2147483648
    %v3307 = vmul.f32 %v3304, 1.442695
    %v3308 = vpow.pop %v3307
    %v3309 = vmul.f32 %v3305, 1.442695
    %v3310 = vpow.pop %v3309
    %v3311 = vmul.f32 %v3306, 1.442695
    %v3312 = vpow.pop %v3311
    %v3313 = vadd.f32 %v3308, 1.0
    %v3314 = vadd.f32 %v3310, 1.0
    %v3315 = vadd.f32 %v3312, 1.0
    %v3316 = vrcp.pop %v3313
    %v3317 = vmul.f32 1.0, %v3316
    %v3318 = vrcp.pop %v3314
    %v3319 = vmul.f32 1.0, %v3318
    %v3320 = vrcp.pop %v3315
    %v3321 = vmul.f32 1.0, %v3320
    %v3322 = vtanh.pop %v3303
    %v3323 = vmul.f32 %v3319, %v3017
    %v3324 = vmul.f32 %v3317, %v3322
    %v3325 = vadd.f32 %v3323, %v3324
    %v3326 = vtanh.pop %v3325
    %v3327 = vmul.f32 %v3321, %v3326
    %v3328 = vpack.c.bf16 %v3327, %v3327
    %v3329 = vld [vmem:[#allocation2 + $0xe0] sm:$0xff]
    %v3330 = vld [vmem:[#allocation2 + $0xe8] sm:$0xff]
    %v3331 = vld [vmem:[#allocation2 + $0xf0] sm:$0xff]
    %v3332 = vld [vmem:[#allocation2 + $0xf8] sm:$0xff]
    %3333 = vmatprep.subr.bf16.mxu0 %v901
    %3334 = vmatpush1.bf16.msra.mxu0 %v900
    %3335 = vmatprep.subr.bf16.mxu0 %v905
    %3336 = vmatpush1.bf16.msra.mxu0 %v904
    %3337 = vmatprep.subr.bf16.mxu0 %v909
    %3338 = vmatpush1.bf16.msra.mxu0 %v908
    %3339 = vmatprep.subr.bf16.mxu0 %v913
    %3340 = vmatpush1.bf16.msra.mxu0 %v912
    %3341 = vmatprep.subr.bf16.mxu0 %v917
    %3342 = vmatpush1.bf16.msra.mxu0 %v916
    %3343 = vmatprep.subr.bf16.mxu0 %v921
    %3344 = vmatpush1.bf16.msra.mxu0 %v920
    %3345 = vmatprep.subr.bf16.mxu0 %v925
    %3346 = vmatpush1.bf16.msra.mxu0 %v924
    %3347 = vmatprep.subr.bf16.mxu0 %v929
    %3348 = vmatpush1.bf16.msra.mxu0 %v928
    %3349 = vmatprep.subr.bf16.mxu0 0
    %3350 = vmatpush1.bf16.msra.mxu0 0
    %3351 = vmatprep.subr.bf16.mxu0 0
    %3352 = vmatpush1.bf16.msra.mxu0 0
    %3353 = vmatprep.subr.bf16.mxu0 0
    %3354 = vmatpush1.bf16.msra.mxu0 0
    %3355 = vmatprep.subr.bf16.mxu0 0
    %3356 = vmatpush1.bf16.msra.mxu0 0
    %3357 = vmatprep.subr.bf16.mxu0 0
    %3358 = vmatpush1.bf16.msra.mxu0 0
    %3359 = vmatprep.subr.bf16.mxu0 0
    %3360 = vmatpush1.bf16.msra.mxu0 0
    %3361 = vmatprep.subr.bf16.mxu0 0
    %3362 = vmatpush1.bf16.msra.mxu0 0
    %3363 = vmatprep.subr.bf16.mxu0 0
    %3364 = vmatpush1.bf16.msra.mxu0 0
    %3365 = vmatprep.mubr.bf16.mxu0 0
    %3366 = vmatmul.mubr.bf16.gmra.mrb[0].mxu0 %v3135
    %v3367 = vpop.f32.mrb[0].mxu0
    %v3368 = vadd.f32 0.0, %v3367
    %v3369 = vpop.f32.mrb[0].mxu0
    %v3370 = vadd.f32 0.0, %v3369
    %v3371 = vpop.f32.mrb[0].mxu0
    %v3372 = vpop.f32.mrb[0].mxu0
    %3373 = vdwg.mxu0
    %3374 = vmatprep.subr.bf16.mxu0 %v903
    %3375 = vmatpush1.bf16.msra.mxu0 %v902
    %3376 = vmatprep.subr.bf16.mxu0 %v907
    %3377 = vmatpush1.bf16.msra.mxu0 %v906
    %3378 = vmatprep.subr.bf16.mxu0 %v911
    %3379 = vmatpush1.bf16.msra.mxu0 %v910
    %3380 = vmatprep.subr.bf16.mxu0 %v915
    %3381 = vmatpush1.bf16.msra.mxu0 %v914
    %3382 = vmatprep.subr.bf16.mxu0 %v919
    %3383 = vmatpush1.bf16.msra.mxu0 %v918
    %3384 = vmatprep.subr.bf16.mxu0 %v923
    %3385 = vmatpush1.bf16.msra.mxu0 %v922
    %3386 = vmatprep.subr.bf16.mxu0 %v927
    %3387 = vmatpush1.bf16.msra.mxu0 %v926
    %3388 = vmatprep.subr.bf16.mxu0 %v931
    %3389 = vmatpush1.bf16.msra.mxu0 %v930
    %3390 = vmatprep.subr.bf16.mxu0 0
    %3391 = vmatpush1.bf16.msra.mxu0 0
    %3392 = vmatprep.subr.bf16.mxu0 0
    %3393 = vmatpush1.bf16.msra.mxu0 0
    %3394 = vmatprep.subr.bf16.mxu0 0
    %3395 = vmatpush1.bf16.msra.mxu0 0
    %3396 = vmatprep.subr.bf16.mxu0 0
    %3397 = vmatpush1.bf16.msra.mxu0 0
    %3398 = vmatprep.subr.bf16.mxu0 0
    %3399 = vmatpush1.bf16.msra.mxu0 0
    %3400 = vmatprep.subr.bf16.mxu0 0
    %3401 = vmatpush1.bf16.msra.mxu0 0
    %3402 = vmatprep.subr.bf16.mxu0 0
    %3403 = vmatpush1.bf16.msra.mxu0 0
    %3404 = vmatprep.subr.bf16.mxu0 0
    %3405 = vmatpush1.bf16.msra.mxu0 0
    %3406 = vmatprep.mubr.bf16.mxu0 0
    %3407 = vmatmul.mubr.bf16.gmra.mrb[0].mxu0 %v3135
    %v3408 = vpop.f32.mrb[0].mxu0
    %v3409 = vadd.f32 0.0, %v3408
    %v3410 = vpop.f32.mrb[0].mxu0
    %v3411 = vadd.f32 0.0, %v3410
    %v3412 = vpop.f32.mrb[0].mxu0
    %v3413 = vpop.f32.mrb[0].mxu0
    %3414 = vdwg.mxu0
    %v3415 = vadd.f32 %v3329, %v3368
    %v3416 = vadd.f32 %v3330, %v3370
    %v3417 = vadd.f32 %v3331, %v3409
    %v3418 = vadd.f32 %v3332, %v3411
    %v3419 = vxor.u32 %v3415, 2147483648
    %v3420 = vxor.u32 %v3416, 2147483648
    %v3421 = vxor.u32 %v3417, 2147483648
    %v3422 = vmul.f32 %v3419, 1.442695
    %v3423 = vpow.pop %v3422
    %v3424 = vmul.f32 %v3420, 1.442695
    %v3425 = vpow.pop %v3424
    %v3426 = vmul.f32 %v3421, 1.442695
    %v3427 = vpow.pop %v3426
    %v3428 = vadd.f32 %v3423, 1.0
    %v3429 = vadd.f32 %v3425, 1.0
    %v3430 = vadd.f32 %v3427, 1.0
    %v3431 = vrcp.pop %v3428
    %v3432 = vmul.f32 1.0, %v3431
    %v3433 = vrcp.pop %v3429
    %v3434 = vmul.f32 1.0, %v3433
    %v3435 = vrcp.pop %v3430
    %v3436 = vmul.f32 1.0, %v3435
    %v3437 = vtanh.pop %v3418
    %v3438 = vmul.f32 %v3434, %v3132
    %v3439 = vmul.f32 %v3432, %v3437
    %v3440 = vadd.f32 %v3438, %v3439
    %v3441 = vtanh.pop %v3440
    %v3442 = vmul.f32 %v3436, %v3441
    %v3443 = vpack.c.bf16 %v3442, %v3442
    %3444 = vmatprep.subr.bf16.mxu0 %v1341
    %3445 = vmatpush1.bf16.msra.mxu0 %v1340
    %3446 = vmatprep.subr.bf16.mxu0 %v1345
    %3447 = vmatpush1.bf16.msra.mxu0 %v1344
    %3448 = vmatprep.subr.bf16.mxu0 %v1349
    %3449 = vmatpush1.bf16.msra.mxu0 %v1348
    %3450 = vmatprep.subr.bf16.mxu0 %v1353
    %3451 = vmatpush1.bf16.msra.mxu0 %v1352
    %3452 = vmatprep.subr.bf16.mxu0 %v1357
    %3453 = vmatpush1.bf16.msra.mxu0 %v1356
    %3454 = vmatprep.subr.bf16.mxu0 %v1361
    %3455 = vmatpush1.bf16.msra.mxu0 %v1360
    %3456 = vmatprep.subr.bf16.mxu0 %v1365
    %3457 = vmatpush1.bf16.msra.mxu0 %v1364
    %3458 = vmatprep.subr.bf16.mxu0 %v1369
    %3459 = vmatpush1.bf16.msra.mxu0 %v1368
    %3460 = vmatprep.subr.bf16.mxu0 0
    %3461 = vmatpush1.bf16.msra.mxu0 0
    %3462 = vmatprep.subr.bf16.mxu0 0
    %3463 = vmatpush1.bf16.msra.mxu0 0
    %3464 = vmatprep.subr.bf16.mxu0 0
    %3465 = vmatpush1.bf16.msra.mxu0 0
    %3466 = vmatprep.subr.bf16.mxu0 0
    %3467 = vmatpush1.bf16.msra.mxu0 0
    %3468 = vmatprep.subr.bf16.mxu0 0
    %3469 = vmatpush1.bf16.msra.mxu0 0
    %3470 = vmatprep.subr.bf16.mxu0 0
    %3471 = vmatpush1.bf16.msra.mxu0 0
    %3472 = vmatprep.subr.bf16.mxu0 0
    %3473 = vmatpush1.bf16.msra.mxu0 0
    %3474 = vmatprep.subr.bf16.mxu0 0
    %3475 = vmatpush1.bf16.msra.mxu0 0
    %3476 = vmatprep.mubr.bf16.mxu0 0
    %3477 = vmatmul.mubr.bf16.gmra.mrb[0].mxu0 %v3135
    %v3478 = vpop.f32.mrb[0].mxu0
    %v3479 = vadd.f32 %v1227, %v3478
    %v3480 = vpop.f32.mrb[0].mxu0
    %v3481 = vadd.f32 %v1231, %v3480
    %v3482 = vpop.f32.mrb[0].mxu0
    %v3483 = vpop.f32.mrb[0].mxu0
    %3484 = vdwg.mxu0
    %3485 = vmatprep.subr.bf16.mxu0 %v1343
    %3486 = vmatpush1.bf16.msra.mxu0 %v1342
    %3487 = vmatprep.subr.bf16.mxu0 %v1347
    %3488 = vmatpush1.bf16.msra.mxu0 %v1346
    %3489 = vmatprep.subr.bf16.mxu0 %v1351
    %3490 = vmatpush1.bf16.msra.mxu0 %v1350
    %3491 = vmatprep.subr.bf16.mxu0 %v1355
    %3492 = vmatpush1.bf16.msra.mxu0 %v1354
    %3493 = vmatprep.subr.bf16.mxu0 %v1359
    %3494 = vmatpush1.bf16.msra.mxu0 %v1358
    %3495 = vmatprep.subr.bf16.mxu0 %v1363
    %3496 = vmatpush1.bf16.msra.mxu0 %v1362
    %3497 = vmatprep.subr.bf16.mxu0 %v1367
    %3498 = vmatpush1.bf16.msra.mxu0 %v1366
    %3499 = vmatprep.subr.bf16.mxu0 %v1371
    %3500 = vmatpush1.bf16.msra.mxu0 %v1370
    %3501 = vmatprep.subr.bf16.mxu0 0
    %3502 = vmatpush1.bf16.msra.mxu0 0
    %3503 = vmatprep.subr.bf16.mxu0 0
    %3504 = vmatpush1.bf16.msra.mxu0 0
    %3505 = vmatprep.subr.bf16.mxu0 0
    %3506 = vmatpush1.bf16.msra.mxu0 0
    %3507 = vmatprep.subr.bf16.mxu0 0
    %3508 = vmatpush1.bf16.msra.mxu0 0
    %3509 = vmatprep.subr.bf16.mxu0 0
    %3510 = vmatpush1.bf16.msra.mxu0 0
    %3511 = vmatprep.subr.bf16.mxu0 0
    %3512 = vmatpush1.bf16.msra.mxu0 0
    %3513 = vmatprep.subr.bf16.mxu0 0
    %3514 = vmatpush1.bf16.msra.mxu0 0
    %3515 = vmatprep.subr.bf16.mxu0 0
    %3516 = vmatpush1.bf16.msra.mxu0 0
    %3517 = vmatprep.mubr.bf16.mxu0 0
    %3518 = vmatmul.mubr.bf16.gmra.mrb[0].mxu0 %v3135
    %v3519 = vpop.f32.mrb[0].mxu0
    %v3520 = vadd.f32 %v1235, %v3519
    %v3521 = vpop.f32.mrb[0].mxu0
    %v3522 = vadd.f32 %v1239, %v3521
    %v3523 = vpop.f32.mrb[0].mxu0
    %v3524 = vpop.f32.mrb[0].mxu0
    %3525 = vdwg.mxu0
    %3526 = vmatprep.subr.bf16.mxu0 %v1615
    %3527 = vmatpush1.bf16.msra.mxu0 %v1614
    %3528 = vmatprep.subr.bf16.mxu0 %v1619
    %3529 = vmatpush1.bf16.msra.mxu0 %v1618
    %3530 = vmatprep.subr.bf16.mxu0 %v1623
    %3531 = vmatpush1.bf16.msra.mxu0 %v1622
    %3532 = vmatprep.subr.bf16.mxu0 %v1627
    %3533 = vmatpush1.bf16.msra.mxu0 %v1626
    %3534 = vmatprep.subr.bf16.mxu0 %v1631
    %3535 = vmatpush1.bf16.msra.mxu0 %v1630
    %3536 = vmatprep.subr.bf16.mxu0 %v1635
    %3537 = vmatpush1.bf16.msra.mxu0 %v1634
    %3538 = vmatprep.subr.bf16.mxu0 %v1639
    %3539 = vmatpush1.bf16.msra.mxu0 %v1638
    %3540 = vmatprep.subr.bf16.mxu0 %v1643
    %3541 = vmatpush1.bf16.msra.mxu0 %v1642
    %3542 = vmatprep.subr.bf16.mxu0 0
    %3543 = vmatpush1.bf16.msra.mxu0 0
    %3544 = vmatprep.subr.bf16.mxu0 0
    %3545 = vmatpush1.bf16.msra.mxu0 0
    %3546 = vmatprep.subr.bf16.mxu0 0
    %3547 = vmatpush1.bf16.msra.mxu0 0
    %3548 = vmatprep.subr.bf16.mxu0 0
    %3549 = vmatpush1.bf16.msra.mxu0 0
    %3550 = vmatprep.subr.bf16.mxu0 0
    %3551 = vmatpush1.bf16.msra.mxu0 0
    %3552 = vmatprep.subr.bf16.mxu0 0
    %3553 = vmatpush1.bf16.msra.mxu0 0
    %3554 = vmatprep.subr.bf16.mxu0 0
    %3555 = vmatpush1.bf16.msra.mxu0 0
    %3556 = vmatprep.subr.bf16.mxu0 0
    %3557 = vmatpush1.bf16.msra.mxu0 0
    %3558 = vmatprep.mubr.bf16.mxu0 0
    %3559 = vmatmul.mubr.bf16.gmra.mrb[0].mxu0 %v3328
    %v3560 = vpop.f32.mrb[0].mxu0
    %v3561 = vadd.f32 0.0, %v3560
    %v3562 = vpop.f32.mrb[0].mxu0
    %v3563 = vadd.f32 0.0, %v3562
    %v3564 = vpop.f32.mrb[0].mxu0
    %v3565 = vpop.f32.mrb[0].mxu0
    %3566 = vdwg.mxu0
    %3567 = vmatprep.subr.bf16.mxu0 %v1617
    %3568 = vmatpush1.bf16.msra.mxu0 %v1616
    %3569 = vmatprep.subr.bf16.mxu0 %v1621
    %3570 = vmatpush1.bf16.msra.mxu0 %v1620
    %3571 = vmatprep.subr.bf16.mxu0 %v1625
    %3572 = vmatpush1.bf16.msra.mxu0 %v1624
    %3573 = vmatprep.subr.bf16.mxu0 %v1629
    %3574 = vmatpush1.bf16.msra.mxu0 %v1628
    %3575 = vmatprep.subr.bf16.mxu0 %v1633
    %3576 = vmatpush1.bf16.msra.mxu0 %v1632
    %3577 = vmatprep.subr.bf16.mxu0 %v1637
    %3578 = vmatpush1.bf16.msra.mxu0 %v1636
    %3579 = vmatprep.subr.bf16.mxu0 %v1641
    %3580 = vmatpush1.bf16.msra.mxu0 %v1640
    %3581 = vmatprep.subr.bf16.mxu0 %v1645
    %3582 = vmatpush1.bf16.msra.mxu0 %v1644
    %3583 = vmatprep.subr.bf16.mxu0 0
    %3584 = vmatpush1.bf16.msra.mxu0 0
    %3585 = vmatprep.subr.bf16.mxu0 0
    %3586 = vmatpush1.bf16.msra.mxu0 0
    %3587 = vmatprep.subr.bf16.mxu0 0
    %3588 = vmatpush1.bf16.msra.mxu0 0
    %3589 = vmatprep.subr.bf16.mxu0 0
    %3590 = vmatpush1.bf16.msra.mxu0 0
    %3591 = vmatprep.subr.bf16.mxu0 0
    %3592 = vmatpush1.bf16.msra.mxu0 0
    %3593 = vmatprep.subr.bf16.mxu0 0
    %3594 = vmatpush1.bf16.msra.mxu0 0
    %3595 = vmatprep.subr.bf16.mxu0 0
    %3596 = vmatpush1.bf16.msra.mxu0 0
    %3597 = vmatprep.subr.bf16.mxu0 0
    %3598 = vmatpush1.bf16.msra.mxu0 0
    %3599 = vmatprep.mubr.bf16.mxu0 0
    %3600 = vmatmul.mubr.bf16.gmra.mrb[0].mxu0 %v3328
    %v3601 = vpop.f32.mrb[0].mxu0
    %v3602 = vadd.f32 0.0, %v3601
    %v3603 = vpop.f32.mrb[0].mxu0
    %v3604 = vadd.f32 0.0, %v3603
    %v3605 = vpop.f32.mrb[0].mxu0
    %v3606 = vpop.f32.mrb[0].mxu0
    %3607 = vdwg.mxu0
    %v3608 = vadd.f32 %v3479, %v3561
    %v3609 = vadd.f32 %v3481, %v3563
    %v3610 = vadd.f32 %v3520, %v3602
    %v3611 = vadd.f32 %v3522, %v3604
    %v3612 = vxor.u32 %v3608, 2147483648
    %v3613 = vxor.u32 %v3609, 2147483648
    %v3614 = vxor.u32 %v3610, 2147483648
    %v3615 = vmul.f32 %v3612, 1.442695
    %v3616 = vpow.pop %v3615
    %v3617 = vmul.f32 %v3613, 1.442695
    %v3618 = vpow.pop %v3617
    %v3619 = vmul.f32 %v3614, 1.442695
    %v3620 = vpow.pop %v3619
    %v3621 = vadd.f32 %v3616, 1.0
    %v3622 = vadd.f32 %v3618, 1.0
    %v3623 = vadd.f32 %v3620, 1.0
    %v3624 = vrcp.pop %v3621
    %v3625 = vmul.f32 1.0, %v3624
    %v3626 = vrcp.pop %v3622
    %v3627 = vmul.f32 1.0, %v3626
    %v3628 = vrcp.pop %v3623
    %v3629 = vmul.f32 1.0, %v3628
    %v3630 = vtanh.pop %v3611
    %v3631 = vmul.f32 %v3627, %v3325
    %v3632 = vmul.f32 %v3625, %v3630
    %v3633 = vadd.f32 %v3631, %v3632
    %v3634 = vtanh.pop %v3633
    %v3635 = vmul.f32 %v3629, %v3634
    %v3636 = vpack.c.bf16 %v3635, %v3635
    %v3637 = vld [vmem:[#allocation2 + $0x100] sm:$0xff]
    %v3638 = vld [vmem:[#allocation2 + $0x108] sm:$0xff]
    %v3639 = vld [vmem:[#allocation2 + $0x110] sm:$0xff]
    %v3640 = vld [vmem:[#allocation2 + $0x118] sm:$0xff]
    %3641 = vmatprep.subr.bf16.mxu0 %v901
    %3642 = vmatpush1.bf16.msra.mxu0 %v900
    %3643 = vmatprep.subr.bf16.mxu0 %v905
    %3644 = vmatpush1.bf16.msra.mxu0 %v904
    %3645 = vmatprep.subr.bf16.mxu0 %v909
    %3646 = vmatpush1.bf16.msra.mxu0 %v908
    %3647 = vmatprep.subr.bf16.mxu0 %v913
    %3648 = vmatpush1.bf16.msra.mxu0 %v912
    %3649 = vmatprep.subr.bf16.mxu0 %v917
    %3650 = vmatpush1.bf16.msra.mxu0 %v916
    %3651 = vmatprep.subr.bf16.mxu0 %v921
    %3652 = vmatpush1.bf16.msra.mxu0 %v920
    %3653 = vmatprep.subr.bf16.mxu0 %v925
    %3654 = vmatpush1.bf16.msra.mxu0 %v924
    %3655 = vmatprep.subr.bf16.mxu0 %v929
    %3656 = vmatpush1.bf16.msra.mxu0 %v928
    %3657 = vmatprep.subr.bf16.mxu0 0
    %3658 = vmatpush1.bf16.msra.mxu0 0
    %3659 = vmatprep.subr.bf16.mxu0 0
    %3660 = vmatpush1.bf16.msra.mxu0 0
    %3661 = vmatprep.subr.bf16.mxu0 0
    %3662 = vmatpush1.bf16.msra.mxu0 0
    %3663 = vmatprep.subr.bf16.mxu0 0
    %3664 = vmatpush1.bf16.msra.mxu0 0
    %3665 = vmatprep.subr.bf16.mxu0 0
    %3666 = vmatpush1.bf16.msra.mxu0 0
    %3667 = vmatprep.subr.bf16.mxu0 0
    %3668 = vmatpush1.bf16.msra.mxu0 0
    %3669 = vmatprep.subr.bf16.mxu0 0
    %3670 = vmatpush1.bf16.msra.mxu0 0
    %3671 = vmatprep.subr.bf16.mxu0 0
    %3672 = vmatpush1.bf16.msra.mxu0 0
    %3673 = vmatprep.mubr.bf16.mxu0 0
    %3674 = vmatmul.mubr.bf16.gmra.mrb[0].mxu0 %v3443
    %v3675 = vpop.f32.mrb[0].mxu0
    %v3676 = vadd.f32 0.0, %v3675
    %v3677 = vpop.f32.mrb[0].mxu0
    %v3678 = vadd.f32 0.0, %v3677
    %v3679 = vpop.f32.mrb[0].mxu0
    %v3680 = vpop.f32.mrb[0].mxu0
    %3681 = vdwg.mxu0
    %3682 = vmatprep.subr.bf16.mxu0 %v903
    %3683 = vmatpush1.bf16.msra.mxu0 %v902
    %3684 = vmatprep.subr.bf16.mxu0 %v907
    %3685 = vmatpush1.bf16.msra.mxu0 %v906
    %3686 = vmatprep.subr.bf16.mxu0 %v911
    %3687 = vmatpush1.bf16.msra.mxu0 %v910
    %3688 = vmatprep.subr.bf16.mxu0 %v915
    %3689 = vmatpush1.bf16.msra.mxu0 %v914
    %3690 = vmatprep.subr.bf16.mxu0 %v919
    %3691 = vmatpush1.bf16.msra.mxu0 %v918
    %3692 = vmatprep.subr.bf16.mxu0 %v923
    %3693 = vmatpush1.bf16.msra.mxu0 %v922
    %3694 = vmatprep.subr.bf16.mxu0 %v927
    %3695 = vmatpush1.bf16.msra.mxu0 %v926
    %3696 = vmatprep.subr.bf16.mxu0 %v931
    %3697 = vmatpush1.bf16.msra.mxu0 %v930
    %3698 = vmatprep.subr.bf16.mxu0 0
    %3699 = vmatpush1.bf16.msra.mxu0 0
    %3700 = vmatprep.subr.bf16.mxu0 0
    %3701 = vmatpush1.bf16.msra.mxu0 0
    %3702 = vmatprep.subr.bf16.mxu0 0
    %3703 = vmatpush1.bf16.msra.mxu0 0
    %3704 = vmatprep.subr.bf16.mxu0 0
    %3705 = vmatpush1.bf16.msra.mxu0 0
    %3706 = vmatprep.subr.bf16.mxu0 0
    %3707 = vmatpush1.bf16.msra.mxu0 0
    %3708 = vmatprep.subr.bf16.mxu0 0
    %3709 = vmatpush1.bf16.msra.mxu0 0
    %3710 = vmatprep.subr.bf16.mxu0 0
    %3711 = vmatpush1.bf16.msra.mxu0 0
    %3712 = vmatprep.subr.bf16.mxu0 0
    %3713 = vmatpush1.bf16.msra.mxu0 0
    %3714 = vmatprep.mubr.bf16.mxu0 0
    %3715 = vmatmul.mubr.bf16.gmra.mrb[0].mxu0 %v3443
    %v3716 = vpop.f32.mrb[0].mxu0
    %v3717 = vadd.f32 0.0, %v3716
    %v3718 = vpop.f32.mrb[0].mxu0
    %v3719 = vadd.f32 0.0, %v3718
    %v3720 = vpop.f32.mrb[0].mxu0
    %v3721 = vpop.f32.mrb[0].mxu0
    %3722 = vdwg.mxu0
    %v3723 = vadd.f32 %v3637, %v3676
    %v3724 = vadd.f32 %v3638, %v3678
    %v3725 = vadd.f32 %v3639, %v3717
    %v3726 = vadd.f32 %v3640, %v3719
    %v3727 = vxor.u32 %v3723, 2147483648
    %v3728 = vxor.u32 %v3724, 2147483648
    %v3729 = vxor.u32 %v3725, 2147483648
    %v3730 = vmul.f32 %v3727, 1.442695
    %v3731 = vpow.pop %v3730
    %v3732 = vmul.f32 %v3728, 1.442695
    %v3733 = vpow.pop %v3732
    %v3734 = vmul.f32 %v3729, 1.442695
    %v3735 = vpow.pop %v3734
    %v3736 = vadd.f32 %v3731, 1.0
    %v3737 = vadd.f32 %v3733, 1.0
    %v3738 = vadd.f32 %v3735, 1.0
    %v3739 = vrcp.pop %v3736
    %v3740 = vmul.f32 1.0, %v3739
    %v3741 = vrcp.pop %v3737
    %v3742 = vmul.f32 1.0, %v3741
    %v3743 = vrcp.pop %v3738
    %v3744 = vmul.f32 1.0, %v3743
    %v3745 = vtanh.pop %v3726
    %v3746 = vmul.f32 %v3742, %v3440
    %v3747 = vmul.f32 %v3740, %v3745
    %v3748 = vadd.f32 %v3746, %v3747
    %v3749 = vtanh.pop %v3748
    %v3750 = vmul.f32 %v3744, %v3749
    %v3751 = vpack.c.bf16 %v3750, %v3750
    %3752 = vmatprep.subr.bf16.mxu0 %v1341
    %3753 = vmatpush1.bf16.msra.mxu0 %v1340
    %3754 = vmatprep.subr.bf16.mxu0 %v1345
    %3755 = vmatpush1.bf16.msra.mxu0 %v1344
    %3756 = vmatprep.subr.bf16.mxu0 %v1349
    %3757 = vmatpush1.bf16.msra.mxu0 %v1348
    %3758 = vmatprep.subr.bf16.mxu0 %v1353
    %3759 = vmatpush1.bf16.msra.mxu0 %v1352
    %3760 = vmatprep.subr.bf16.mxu0 %v1357
    %3761 = vmatpush1.bf16.msra.mxu0 %v1356
    %3762 = vmatprep.subr.bf16.mxu0 %v1361
    %3763 = vmatpush1.bf16.msra.mxu0 %v1360
    %3764 = vmatprep.subr.bf16.mxu0 %v1365
    %3765 = vmatpush1.bf16.msra.mxu0 %v1364
    %3766 = vmatprep.subr.bf16.mxu0 %v1369
    %3767 = vmatpush1.bf16.msra.mxu0 %v1368
    %3768 = vmatprep.subr.bf16.mxu0 0
    %3769 = vmatpush1.bf16.msra.mxu0 0
    %3770 = vmatprep.subr.bf16.mxu0 0
    %3771 = vmatpush1.bf16.msra.mxu0 0
    %3772 = vmatprep.subr.bf16.mxu0 0
    %3773 = vmatpush1.bf16.msra.mxu0 0
    %3774 = vmatprep.subr.bf16.mxu0 0
    %3775 = vmatpush1.bf16.msra.mxu0 0
    %3776 = vmatprep.subr.bf16.mxu0 0
    %3777 = vmatpush1.bf16.msra.mxu0 0
    %3778 = vmatprep.subr.bf16.mxu0 0
    %3779 = vmatpush1.bf16.msra.mxu0 0
    %3780 = vmatprep.subr.bf16.mxu0 0
    %3781 = vmatpush1.bf16.msra.mxu0 0
    %3782 = vmatprep.subr.bf16.mxu0 0
    %3783 = vmatpush1.bf16.msra.mxu0 0
    %3784 = vmatprep.mubr.bf16.mxu0 0
    %3785 = vmatmul.mubr.bf16.gmra.mrb[0].mxu0 %v3443
    %v3786 = vpop.f32.mrb[0].mxu0
    %v3787 = vadd.f32 %v1227, %v3786
    %v3788 = vpop.f32.mrb[0].mxu0
    %v3789 = vadd.f32 %v1231, %v3788
    %v3790 = vpop.f32.mrb[0].mxu0
    %v3791 = vpop.f32.mrb[0].mxu0
    %3792 = vdwg.mxu0
    %3793 = vmatprep.subr.bf16.mxu0 %v1343
    %3794 = vmatpush1.bf16.msra.mxu0 %v1342
    %3795 = vmatprep.subr.bf16.mxu0 %v1347
    %3796 = vmatpush1.bf16.msra.mxu0 %v1346
    %3797 = vmatprep.subr.bf16.mxu0 %v1351
    %3798 = vmatpush1.bf16.msra.mxu0 %v1350
    %3799 = vmatprep.subr.bf16.mxu0 %v1355
    %3800 = vmatpush1.bf16.msra.mxu0 %v1354
    %3801 = vmatprep.subr.bf16.mxu0 %v1359
    %3802 = vmatpush1.bf16.msra.mxu0 %v1358
    %3803 = vmatprep.subr.bf16.mxu0 %v1363
    %3804 = vmatpush1.bf16.msra.mxu0 %v1362
    %3805 = vmatprep.subr.bf16.mxu0 %v1367
    %3806 = vmatpush1.bf16.msra.mxu0 %v1366
    %3807 = vmatprep.subr.bf16.mxu0 %v1371
    %3808 = vmatpush1.bf16.msra.mxu0 %v1370
    %3809 = vmatprep.subr.bf16.mxu0 0
    %3810 = vmatpush1.bf16.msra.mxu0 0
    %3811 = vmatprep.subr.bf16.mxu0 0
    %3812 = vmatpush1.bf16.msra.mxu0 0
    %3813 = vmatprep.subr.bf16.mxu0 0
    %3814 = vmatpush1.bf16.msra.mxu0 0
    %3815 = vmatprep.subr.bf16.mxu0 0
    %3816 = vmatpush1.bf16.msra.mxu0 0
    %3817 = vmatprep.subr.bf16.mxu0 0
    %3818 = vmatpush1.bf16.msra.mxu0 0
    %3819 = vmatprep.subr.bf16.mxu0 0
    %3820 = vmatpush1.bf16.msra.mxu0 0
    %3821 = vmatprep.subr.bf16.mxu0 0
    %3822 = vmatpush1.bf16.msra.mxu0 0
    %3823 = vmatprep.subr.bf16.mxu0 0
    %3824 = vmatpush1.bf16.msra.mxu0 0
    %3825 = vmatprep.mubr.bf16.mxu0 0
    %3826 = vmatmul.mubr.bf16.gmra.mrb[0].mxu0 %v3443
    %v3827 = vpop.f32.mrb[0].mxu0
    %v3828 = vadd.f32 %v1235, %v3827
    %v3829 = vpop.f32.mrb[0].mxu0
    %v3830 = vadd.f32 %v1239, %v3829
    %v3831 = vpop.f32.mrb[0].mxu0
    %v3832 = vpop.f32.mrb[0].mxu0
    %3833 = vdwg.mxu0
    %3834 = vmatprep.subr.bf16.mxu0 %v1615
    %3835 = vmatpush1.bf16.msra.mxu0 %v1614
    %3836 = vmatprep.subr.bf16.mxu0 %v1619
    %3837 = vmatpush1.bf16.msra.mxu0 %v1618
    %3838 = vmatprep.subr.bf16.mxu0 %v1623
    %3839 = vmatpush1.bf16.msra.mxu0 %v1622
    %3840 = vmatprep.subr.bf16.mxu0 %v1627
    %3841 = vmatpush1.bf16.msra.mxu0 %v1626
    %3842 = vmatprep.subr.bf16.mxu0 %v1631
    %3843 = vmatpush1.bf16.msra.mxu0 %v1630
    %3844 = vmatprep.subr.bf16.mxu0 %v1635
    %3845 = vmatpush1.bf16.msra.mxu0 %v1634
    %3846 = vmatprep.subr.bf16.mxu0 %v1639
    %3847 = vmatpush1.bf16.msra.mxu0 %v1638
    %3848 = vmatprep.subr.bf16.mxu0 %v1643
    %3849 = vmatpush1.bf16.msra.mxu0 %v1642
    %3850 = vmatprep.subr.bf16.mxu0 0
    %3851 = vmatpush1.bf16.msra.mxu0 0
    %3852 = vmatprep.subr.bf16.mxu0 0
    %3853 = vmatpush1.bf16.msra.mxu0 0
    %3854 = vmatprep.subr.bf16.mxu0 0
    %3855 = vmatpush1.bf16.msra.mxu0 0
    %3856 = vmatprep.subr.bf16.mxu0 0
    %3857 = vmatpush1.bf16.msra.mxu0 0
    %3858 = vmatprep.subr.bf16.mxu0 0
    %3859 = vmatpush1.bf16.msra.mxu0 0
    %3860 = vmatprep.subr.bf16.mxu0 0
    %3861 = vmatpush1.bf16.msra.mxu0 0
    %3862 = vmatprep.subr.bf16.mxu0 0
    %3863 = vmatpush1.bf16.msra.mxu0 0
    %3864 = vmatprep.subr.bf16.mxu0 0
    %3865 = vmatpush1.bf16.msra.mxu0 0
    %3866 = vmatprep.mubr.bf16.mxu0 0
    %3867 = vmatmul.mubr.bf16.gmra.mrb[0].mxu0 %v3636
    %v3868 = vpop.f32.mrb[0].mxu0
    %v3869 = vadd.f32 0.0, %v3868
    %v3870 = vpop.f32.mrb[0].mxu0
    %v3871 = vadd.f32 0.0, %v3870
    %v3872 = vpop.f32.mrb[0].mxu0
    %v3873 = vpop.f32.mrb[0].mxu0
    %3874 = vdwg.mxu0
    %3875 = vmatprep.subr.bf16.mxu0 %v1617
    %3876 = vmatpush1.bf16.msra.mxu0 %v1616
    %3877 = vmatprep.subr.bf16.mxu0 %v1621
    %3878 = vmatpush1.bf16.msra.mxu0 %v1620
    %3879 = vmatprep.subr.bf16.mxu0 %v1625
    %3880 = vmatpush1.bf16.msra.mxu0 %v1624
    %3881 = vmatprep.subr.bf16.mxu0 %v1629
    %3882 = vmatpush1.bf16.msra.mxu0 %v1628
    %3883 = vmatprep.subr.bf16.mxu0 %v1633
    %3884 = vmatpush1.bf16.msra.mxu0 %v1632
    %3885 = vmatprep.subr.bf16.mxu0 %v1637
    %3886 = vmatpush1.bf16.msra.mxu0 %v1636
    %3887 = vmatprep.subr.bf16.mxu0 %v1641
    %3888 = vmatpush1.bf16.msra.mxu0 %v1640
    %3889 = vmatprep.subr.bf16.mxu0 %v1645
    %3890 = vmatpush1.bf16.msra.mxu0 %v1644
    %3891 = vmatprep.subr.bf16.mxu0 0
    %3892 = vmatpush1.bf16.msra.mxu0 0
    %3893 = vmatprep.subr.bf16.mxu0 0
    %3894 = vmatpush1.bf16.msra.mxu0 0
    %3895 = vmatprep.subr.bf16.mxu0 0
    %3896 = vmatpush1.bf16.msra.mxu0 0
    %3897 = vmatprep.subr.bf16.mxu0 0
    %3898 = vmatpush1.bf16.msra.mxu0 0
    %3899 = vmatprep.subr.bf16.mxu0 0
    %3900 = vmatpush1.bf16.msra.mxu0 0
    %3901 = vmatprep.subr.bf16.mxu0 0
    %3902 = vmatpush1.bf16.msra.mxu0 0
    %3903 = vmatprep.subr.bf16.mxu0 0
    %3904 = vmatpush1.bf16.msra.mxu0 0
    %3905 = vmatprep.subr.bf16.mxu0 0
    %3906 = vmatpush1.bf16.msra.mxu0 0
    %3907 = vmatprep.mubr.bf16.mxu0 0
    %3908 = vmatmul.mubr.bf16.gmra.mrb[0].mxu0 %v3636
    %v3909 = vpop.f32.mrb[0].mxu0
    %v3910 = vadd.f32 0.0, %v3909
    %v3911 = vpop.f32.mrb[0].mxu0
    %v3912 = vadd.f32 0.0, %v3911
    %v3913 = vpop.f32.mrb[0].mxu0
    %v3914 = vpop.f32.mrb[0].mxu0
    %3915 = vdwg.mxu0
    %v3916 = vadd.f32 %v3787, %v3869
    %v3917 = vadd.f32 %v3789, %v3871
    %v3918 = vadd.f32 %v3828, %v3910
    %v3919 = vadd.f32 %v3830, %v3912
    %v3920 = vxor.u32 %v3916, 2147483648
    %v3921 = vxor.u32 %v3917, 2147483648
    %v3922 = vxor.u32 %v3918, 2147483648
    %v3923 = vmul.f32 %v3920, 1.442695
    %v3924 = vpow.pop %v3923
    %v3925 = vmul.f32 %v3921, 1.442695
    %v3926 = vpow.pop %v3925
    %v3927 = vmul.f32 %v3922, 1.442695
    %v3928 = vpow.pop %v3927
    %v3929 = vadd.f32 %v3924, 1.0
    %v3930 = vadd.f32 %v3926, 1.0
    %v3931 = vadd.f32 %v3928, 1.0
    %v3932 = vrcp.pop %v3929
    %v3933 = vmul.f32 1.0, %v3932
    %v3934 = vrcp.pop %v3930
    %v3935 = vmul.f32 1.0, %v3934
    %v3936 = vrcp.pop %v3931
    %v3937 = vmul.f32 1.0, %v3936
    %v3938 = vtanh.pop %v3919
    %v3939 = vmul.f32 %v3935, %v3633
    %v3940 = vmul.f32 %v3933, %v3938
    %v3941 = vadd.f32 %v3939, %v3940
    %v3942 = vtanh.pop %v3941
    %v3943 = vmul.f32 %v3937, %v3942
    %v3944 = vpack.c.bf16 %v3943, %v3943
    %v3945 = vld [vmem:[#allocation2 + $0x120] sm:$0xff]
    %v3946 = vld [vmem:[#allocation2 + $0x128] sm:$0xff]
    %v3947 = vld [vmem:[#allocation2 + $0x130] sm:$0xff]
    %v3948 = vld [vmem:[#allocation2 + $0x138] sm:$0xff]
    %3949 = vmatprep.subr.bf16.mxu0 %v901
    %3950 = vmatpush1.bf16.msra.mxu0 %v900
    %3951 = vmatprep.subr.bf16.mxu0 %v905
    %3952 = vmatpush1.bf16.msra.mxu0 %v904
    %3953 = vmatprep.subr.bf16.mxu0 %v909
    %3954 = vmatpush1.bf16.msra.mxu0 %v908
    %3955 = vmatprep.subr.bf16.mxu0 %v913
    %3956 = vmatpush1.bf16.msra.mxu0 %v912
    %3957 = vmatprep.subr.bf16.mxu0 %v917
    %3958 = vmatpush1.bf16.msra.mxu0 %v916
    %3959 = vmatprep.subr.bf16.mxu0 %v921
    %3960 = vmatpush1.bf16.msra.mxu0 %v920
    %3961 = vmatprep.subr.bf16.mxu0 %v925
    %3962 = vmatpush1.bf16.msra.mxu0 %v924
    %3963 = vmatprep.subr.bf16.mxu0 %v929
    %3964 = vmatpush1.bf16.msra.mxu0 %v928
    %3965 = vmatprep.subr.bf16.mxu0 0
    %3966 = vmatpush1.bf16.msra.mxu0 0
    %3967 = vmatprep.subr.bf16.mxu0 0
    %3968 = vmatpush1.bf16.msra.mxu0 0
    %3969 = vmatprep.subr.bf16.mxu0 0
    %3970 = vmatpush1.bf16.msra.mxu0 0
    %3971 = vmatprep.subr.bf16.mxu0 0
    %3972 = vmatpush1.bf16.msra.mxu0 0
    %3973 = vmatprep.subr.bf16.mxu0 0
    %3974 = vmatpush1.bf16.msra.mxu0 0
    %3975 = vmatprep.subr.bf16.mxu0 0
    %3976 = vmatpush1.bf16.msra.mxu0 0
    %3977 = vmatprep.subr.bf16.mxu0 0
    %3978 = vmatpush1.bf16.msra.mxu0 0
    %3979 = vmatprep.subr.bf16.mxu0 0
    %3980 = vmatpush1.bf16.msra.mxu0 0
    %3981 = vmatprep.mubr.bf16.mxu0 0
    %3982 = vmatmul.mubr.bf16.gmra.mrb[0].mxu0 %v3751
    %v3983 = vpop.f32.mrb[0].mxu0
    %v3984 = vadd.f32 0.0, %v3983
    %v3985 = vpop.f32.mrb[0].mxu0
    %v3986 = vadd.f32 0.0, %v3985
    %v3987 = vpop.f32.mrb[0].mxu0
    %v3988 = vpop.f32.mrb[0].mxu0
    %3989 = vdwg.mxu0
    %3990 = vmatprep.subr.bf16.mxu0 %v903
    %3991 = vmatpush1.bf16.msra.mxu0 %v902
    %3992 = vmatprep.subr.bf16.mxu0 %v907
    %3993 = vmatpush1.bf16.msra.mxu0 %v906
    %3994 = vmatprep.subr.bf16.mxu0 %v911
    %3995 = vmatpush1.bf16.msra.mxu0 %v910
    %3996 = vmatprep.subr.bf16.mxu0 %v915
    %3997 = vmatpush1.bf16.msra.mxu0 %v914
    %3998 = vmatprep.subr.bf16.mxu0 %v919
    %3999 = vmatpush1.bf16.msra.mxu0 %v918
    %4000 = vmatprep.subr.bf16.mxu0 %v923
    %4001 = vmatpush1.bf16.msra.mxu0 %v922
    %4002 = vmatprep.subr.bf16.mxu0 %v927
    %4003 = vmatpush1.bf16.msra.mxu0 %v926
    %4004 = vmatprep.subr.bf16.mxu0 %v931
    %4005 = vmatpush1.bf16.msra.mxu0 %v930
    %4006 = vmatprep.subr.bf16.mxu0 0
    %4007 = vmatpush1.bf16.msra.mxu0 0
    %4008 = vmatprep.subr.bf16.mxu0 0
    %4009 = vmatpush1.bf16.msra.mxu0 0
    %4010 = vmatprep.subr.bf16.mxu0 0
    %4011 = vmatpush1.bf16.msra.mxu0 0
    %4012 = vmatprep.subr.bf16.mxu0 0
    %4013 = vmatpush1.bf16.msra.mxu0 0
    %4014 = vmatprep.subr.bf16.mxu0 0
    %4015 = vmatpush1.bf16.msra.mxu0 0
    %4016 = vmatprep.subr.bf16.mxu0 0
    %4017 = vmatpush1.bf16.msra.mxu0 0
    %4018 = vmatprep.subr.bf16.mxu0 0
    %4019 = vmatpush1.bf16.msra.mxu0 0
    %4020 = vmatprep.subr.bf16.mxu0 0
    %4021 = vmatpush1.bf16.msra.mxu0 0
    %4022 = vmatprep.mubr.bf16.mxu0 0
    %4023 = vmatmul.mubr.bf16.gmra.mrb[0].mxu0 %v3751
    %v4024 = vpop.f32.mrb[0].mxu0
    %v4025 = vadd.f32 0.0, %v4024
    %v4026 = vpop.f32.mrb[0].mxu0
    %v4027 = vadd.f32 0.0, %v4026
    %v4028 = vpop.f32.mrb[0].mxu0
    %v4029 = vpop.f32.mrb[0].mxu0
    %4030 = vdwg.mxu0
    %v4031 = vadd.f32 %v3945, %v3984
    %v4032 = vadd.f32 %v3946, %v3986
    %v4033 = vadd.f32 %v3947, %v4025
    %v4034 = vadd.f32 %v3948, %v4027
    %v4035 = vxor.u32 %v4031, 2147483648
    %v4036 = vxor.u32 %v4032, 2147483648
    %v4037 = vxor.u32 %v4033, 2147483648
    %v4038 = vmul.f32 %v4035, 1.442695
    %v4039 = vpow.pop %v4038
    %v4040 = vmul.f32 %v4036, 1.442695
    %v4041 = vpow.pop %v4040
    %v4042 = vmul.f32 %v4037, 1.442695
    %v4043 = vpow.pop %v4042
    %v4044 = vadd.f32 %v4039, 1.0
    %v4045 = vadd.f32 %v4041, 1.0
    %v4046 = vadd.f32 %v4043, 1.0
    %v4047 = vrcp.pop %v4044
    %v4048 = vmul.f32 1.0, %v4047
    %v4049 = vrcp.pop %v4045
    %v4050 = vmul.f32 1.0, %v4049
    %v4051 = vrcp.pop %v4046
    %v4052 = vmul.f32 1.0, %v4051
    %v4053 = vtanh.pop %v4034
    %v4054 = vmul.f32 %v4050, %v3748
    %v4055 = vmul.f32 %v4048, %v4053
    %v4056 = vadd.f32 %v4054, %v4055
    %v4057 = vtanh.pop %v4056
    %v4058 = vmul.f32 %v4052, %v4057
    %v4059 = vpack.c.bf16 %v4058, %v4058
    %4060 = vmatprep.subr.bf16.mxu0 %v1341
    %4061 = vmatpush1.bf16.msra.mxu0 %v1340
    %4062 = vmatprep.subr.bf16.mxu0 %v1345
    %4063 = vmatpush1.bf16.msra.mxu0 %v1344
    %4064 = vmatprep.subr.bf16.mxu0 %v1349
    %4065 = vmatpush1.bf16.msra.mxu0 %v1348
    %4066 = vmatprep.subr.bf16.mxu0 %v1353
    %4067 = vmatpush1.bf16.msra.mxu0 %v1352
    %4068 = vmatprep.subr.bf16.mxu0 %v1357
    %4069 = vmatpush1.bf16.msra.mxu0 %v1356
    %4070 = vmatprep.subr.bf16.mxu0 %v1361
    %4071 = vmatpush1.bf16.msra.mxu0 %v1360
    %4072 = vmatprep.subr.bf16.mxu0 %v1365
    %4073 = vmatpush1.bf16.msra.mxu0 %v1364
    %4074 = vmatprep.subr.bf16.mxu0 %v1369
    %4075 = vmatpush1.bf16.msra.mxu0 %v1368
    %4076 = vmatprep.subr.bf16.mxu0 0
    %4077 = vmatpush1.bf16.msra.mxu0 0
    %4078 = vmatprep.subr.bf16.mxu0 0
    %4079 = vmatpush1.bf16.msra.mxu0 0
    %4080 = vmatprep.subr.bf16.mxu0 0
    %4081 = vmatpush1.bf16.msra.mxu0 0
    %4082 = vmatprep.subr.bf16.mxu0 0
    %4083 = vmatpush1.bf16.msra.mxu0 0
    %4084 = vmatprep.subr.bf16.mxu0 0
    %4085 = vmatpush1.bf16.msra.mxu0 0
    %4086 = vmatprep.subr.bf16.mxu0 0
    %4087 = vmatpush1.bf16.msra.mxu0 0
    %4088 = vmatprep.subr.bf16.mxu0 0
    %4089 = vmatpush1.bf16.msra.mxu0 0
    %4090 = vmatprep.subr.bf16.mxu0 0
    %4091 = vmatpush1.bf16.msra.mxu0 0
    %4092 = vmatprep.mubr.bf16.mxu0 0
    %4093 = vmatmul.mubr.bf16.gmra.mrb[0].mxu0 %v3751
    %v4094 = vpop.f32.mrb[0].mxu0
    %v4095 = vadd.f32 %v1227, %v4094
    %v4096 = vpop.f32.mrb[0].mxu0
    %v4097 = vadd.f32 %v1231, %v4096
    %v4098 = vpop.f32.mrb[0].mxu0
    %v4099 = vpop.f32.mrb[0].mxu0
    %4100 = vdwg.mxu0
    %4101 = vmatprep.subr.bf16.mxu0 %v1343
    %4102 = vmatpush1.bf16.msra.mxu0 %v1342
    %4103 = vmatprep.subr.bf16.mxu0 %v1347
    %4104 = vmatpush1.bf16.msra.mxu0 %v1346
    %4105 = vmatprep.subr.bf16.mxu0 %v1351
    %4106 = vmatpush1.bf16.msra.mxu0 %v1350
    %4107 = vmatprep.subr.bf16.mxu0 %v1355
    %4108 = vmatpush1.bf16.msra.mxu0 %v1354
    %4109 = vmatprep.subr.bf16.mxu0 %v1359
    %4110 = vmatpush1.bf16.msra.mxu0 %v1358
    %4111 = vmatprep.subr.bf16.mxu0 %v1363
    %4112 = vmatpush1.bf16.msra.mxu0 %v1362
    %4113 = vmatprep.subr.bf16.mxu0 %v1367
    %4114 = vmatpush1.bf16.msra.mxu0 %v1366
    %4115 = vmatprep.subr.bf16.mxu0 %v1371
    %4116 = vmatpush1.bf16.msra.mxu0 %v1370
    %4117 = vmatprep.subr.bf16.mxu0 0
    %4118 = vmatpush1.bf16.msra.mxu0 0
    %4119 = vmatprep.subr.bf16.mxu0 0
    %4120 = vmatpush1.bf16.msra.mxu0 0
    %4121 = vmatprep.subr.bf16.mxu0 0
    %4122 = vmatpush1.bf16.msra.mxu0 0
    %4123 = vmatprep.subr.bf16.mxu0 0
    %4124 = vmatpush1.bf16.msra.mxu0 0
    %4125 = vmatprep.subr.bf16.mxu0 0
    %4126 = vmatpush1.bf16.msra.mxu0 0
    %4127 = vmatprep.subr.bf16.mxu0 0
    %4128 = vmatpush1.bf16.msra.mxu0 0
    %4129 = vmatprep.subr.bf16.mxu0 0
    %4130 = vmatpush1.bf16.msra.mxu0 0
    %4131 = vmatprep.subr.bf16.mxu0 0
    %4132 = vmatpush1.bf16.msra.mxu0 0
    %4133 = vmatprep.mubr.bf16.mxu0 0
    %4134 = vmatmul.mubr.bf16.gmra.mrb[0].mxu0 %v3751
    %v4135 = vpop.f32.mrb[0].mxu0
    %v4136 = vadd.f32 %v1235, %v4135
    %v4137 = vpop.f32.mrb[0].mxu0
    %v4138 = vadd.f32 %v1239, %v4137
    %v4139 = vpop.f32.mrb[0].mxu0
    %v4140 = vpop.f32.mrb[0].mxu0
    %4141 = vdwg.mxu0
    %4142 = vmatprep.subr.bf16.mxu0 %v1615
    %4143 = vmatpush1.bf16.msra.mxu0 %v1614
    %4144 = vmatprep.subr.bf16.mxu0 %v1619
    %4145 = vmatpush1.bf16.msra.mxu0 %v1618
    %4146 = vmatprep.subr.bf16.mxu0 %v1623
    %4147 = vmatpush1.bf16.msra.mxu0 %v1622
    %4148 = vmatprep.subr.bf16.mxu0 %v1627
    %4149 = vmatpush1.bf16.msra.mxu0 %v1626
    %4150 = vmatprep.subr.bf16.mxu0 %v1631
    %4151 = vmatpush1.bf16.msra.mxu0 %v1630
    %4152 = vmatprep.subr.bf16.mxu0 %v1635
    %4153 = vmatpush1.bf16.msra.mxu0 %v1634
    %4154 = vmatprep.subr.bf16.mxu0 %v1639
    %4155 = vmatpush1.bf16.msra.mxu0 %v1638
    %4156 = vmatprep.subr.bf16.mxu0 %v1643
    %4157 = vmatpush1.bf16.msra.mxu0 %v1642
    %4158 = vmatprep.subr.bf16.mxu0 0
    %4159 = vmatpush1.bf16.msra.mxu0 0
    %4160 = vmatprep.subr.bf16.mxu0 0
    %4161 = vmatpush1.bf16.msra.mxu0 0
    %4162 = vmatprep.subr.bf16.mxu0 0
    %4163 = vmatpush1.bf16.msra.mxu0 0
    %4164 = vmatprep.subr.bf16.mxu0 0
    %4165 = vmatpush1.bf16.msra.mxu0 0
    %4166 = vmatprep.subr.bf16.mxu0 0
    %4167 = vmatpush1.bf16.msra.mxu0 0
    %4168 = vmatprep.subr.bf16.mxu0 0
    %4169 = vmatpush1.bf16.msra.mxu0 0
    %4170 = vmatprep.subr.bf16.mxu0 0
    %4171 = vmatpush1.bf16.msra.mxu0 0
    %4172 = vmatprep.subr.bf16.mxu0 0
    %4173 = vmatpush1.bf16.msra.mxu0 0
    %4174 = vmatprep.mubr.bf16.mxu0 0
    %4175 = vmatmul.mubr.bf16.gmra.mrb[0].mxu0 %v3944
    %v4176 = vpop.f32.mrb[0].mxu0
    %v4177 = vadd.f32 0.0, %v4176
    %v4178 = vpop.f32.mrb[0].mxu0
    %v4179 = vadd.f32 0.0, %v4178
    %v4180 = vpop.f32.mrb[0].mxu0
    %v4181 = vpop.f32.mrb[0].mxu0
    %4182 = vdwg.mxu0
    %4183 = vmatprep.subr.bf16.mxu0 %v1617
    %4184 = vmatpush1.bf16.msra.mxu0 %v1616
    %4185 = vmatprep.subr.bf16.mxu0 %v1621
    %4186 = vmatpush1.bf16.msra.mxu0 %v1620
    %4187 = vmatprep.subr.bf16.mxu0 %v1625
    %4188 = vmatpush1.bf16.msra.mxu0 %v1624
    %4189 = vmatprep.subr.bf16.mxu0 %v1629
    %4190 = vmatpush1.bf16.msra.mxu0 %v1628
    %4191 = vmatprep.subr.bf16.mxu0 %v1633
    %4192 = vmatpush1.bf16.msra.mxu0 %v1632
    %4193 = vmatprep.subr.bf16.mxu0 %v1637
    %4194 = vmatpush1.bf16.msra.mxu0 %v1636
    %4195 = vmatprep.subr.bf16.mxu0 %v1641
    %4196 = vmatpush1.bf16.msra.mxu0 %v1640
    %4197 = vmatprep.subr.bf16.mxu0 %v1645
    %4198 = vmatpush1.bf16.msra.mxu0 %v1644
    %4199 = vmatprep.subr.bf16.mxu0 0
    %4200 = vmatpush1.bf16.msra.mxu0 0
    %4201 = vmatprep.subr.bf16.mxu0 0
    %4202 = vmatpush1.bf16.msra.mxu0 0
    %4203 = vmatprep.subr.bf16.mxu0 0
    %4204 = vmatpush1.bf16.msra.mxu0 0
    %4205 = vmatprep.subr.bf16.mxu0 0
    %4206 = vmatpush1.bf16.msra.mxu0 0
    %4207 = vmatprep.subr.bf16.mxu0 0
    %4208 = vmatpush1.bf16.msra.mxu0 0
    %4209 = vmatprep.subr.bf16.mxu0 0
    %4210 = vmatpush1.bf16.msra.mxu0 0
    %4211 = vmatprep.subr.bf16.mxu0 0
    %4212 = vmatpush1.bf16.msra.mxu0 0
    %4213 = vmatprep.subr.bf16.mxu0 0
    %4214 = vmatpush1.bf16.msra.mxu0 0
    %4215 = vmatprep.mubr.bf16.mxu0 0
    %4216 = vmatmul.mubr.bf16.gmra.mrb[0].mxu0 %v3944
    %v4217 = vpop.f32.mrb[0].mxu0
    %v4218 = vadd.f32 0.0, %v4217
    %v4219 = vpop.f32.mrb[0].mxu0
    %v4220 = vadd.f32 0.0, %v4219
    %v4221 = vpop.f32.mrb[0].mxu0
    %v4222 = vpop.f32.mrb[0].mxu0
    %4223 = vdwg.mxu0
    %v4224 = vadd.f32 %v4095, %v4177
    %v4225 = vadd.f32 %v4097, %v4179
    %v4226 = vadd.f32 %v4136, %v4218
    %v4227 = vadd.f32 %v4138, %v4220
    %v4228 = vxor.u32 %v4224, 2147483648
    %v4229 = vxor.u32 %v4225, 2147483648
    %v4230 = vxor.u32 %v4226, 2147483648
    %v4231 = vmul.f32 %v4228, 1.442695
    %v4232 = vpow.pop %v4231
    %v4233 = vmul.f32 %v4229, 1.442695
    %v4234 = vpow.pop %v4233
    %v4235 = vmul.f32 %v4230, 1.442695
    %v4236 = vpow.pop %v4235
    %v4237 = vadd.f32 %v4232, 1.0
    %v4238 = vadd.f32 %v4234, 1.0
    %v4239 = vadd.f32 %v4236, 1.0
    %v4240 = vrcp.pop %v4237
    %v4241 = vmul.f32 1.0, %v4240
    %v4242 = vrcp.pop %v4238
    %v4243 = vmul.f32 1.0, %v4242
    %v4244 = vrcp.pop %v4239
    %v4245 = vmul.f32 1.0, %v4244
    %v4246 = vtanh.pop %v4227
    %v4247 = vmul.f32 %v4243, %v3941
    %v4248 = vmul.f32 %v4241, %v4246
    %v4249 = vadd.f32 %v4247, %v4248
    %v4250 = vtanh.pop %v4249
    %v4251 = vmul.f32 %v4245, %v4250
    %v4252 = vpack.c.bf16 %v4251, %v4251
    %v4253 = vld [vmem:[#allocation2 + $0x140] sm:$0xff]
    %v4254 = vld [vmem:[#allocation2 + $0x148] sm:$0xff]
    %v4255 = vld [vmem:[#allocation2 + $0x150] sm:$0xff]
    %v4256 = vld [vmem:[#allocation2 + $0x158] sm:$0xff]
    %4257 = vmatprep.subr.bf16.mxu0 %v901
    %4258 = vmatpush1.bf16.msra.mxu0 %v900
    %4259 = vmatprep.subr.bf16.mxu0 %v905
    %4260 = vmatpush1.bf16.msra.mxu0 %v904
    %4261 = vmatprep.subr.bf16.mxu0 %v909
    %4262 = vmatpush1.bf16.msra.mxu0 %v908
    %4263 = vmatprep.subr.bf16.mxu0 %v913
    %4264 = vmatpush1.bf16.msra.mxu0 %v912
    %4265 = vmatprep.subr.bf16.mxu0 %v917
    %4266 = vmatpush1.bf16.msra.mxu0 %v916
    %4267 = vmatprep.subr.bf16.mxu0 %v921
    %4268 = vmatpush1.bf16.msra.mxu0 %v920
    %4269 = vmatprep.subr.bf16.mxu0 %v925
    %4270 = vmatpush1.bf16.msra.mxu0 %v924
    %4271 = vmatprep.subr.bf16.mxu0 %v929
    %4272 = vmatpush1.bf16.msra.mxu0 %v928
    %4273 = vmatprep.subr.bf16.mxu0 0
    %4274 = vmatpush1.bf16.msra.mxu0 0
    %4275 = vmatprep.subr.bf16.mxu0 0
    %4276 = vmatpush1.bf16.msra.mxu0 0
    %4277 = vmatprep.subr.bf16.mxu0 0
    %4278 = vmatpush1.bf16.msra.mxu0 0
    %4279 = vmatprep.subr.bf16.mxu0 0
    %4280 = vmatpush1.bf16.msra.mxu0 0
    %4281 = vmatprep.subr.bf16.mxu0 0
    %4282 = vmatpush1.bf16.msra.mxu0 0
    %4283 = vmatprep.subr.bf16.mxu0 0
    %4284 = vmatpush1.bf16.msra.mxu0 0
    %4285 = vmatprep.subr.bf16.mxu0 0
    %4286 = vmatpush1.bf16.msra.mxu0 0
    %4287 = vmatprep.subr.bf16.mxu0 0
    %4288 = vmatpush1.bf16.msra.mxu0 0
    %4289 = vmatprep.mubr.bf16.mxu0 0
    %4290 = vmatmul.mubr.bf16.gmra.mrb[0].mxu0 %v4059
    %v4291 = vpop.f32.mrb[0].mxu0
    %v4292 = vadd.f32 0.0, %v4291
    %v4293 = vpop.f32.mrb[0].mxu0
    %v4294 = vadd.f32 0.0, %v4293
    %v4295 = vpop.f32.mrb[0].mxu0
    %v4296 = vpop.f32.mrb[0].mxu0
    %4297 = vdwg.mxu0
    %4298 = vmatprep.subr.bf16.mxu0 %v903
    %4299 = vmatpush1.bf16.msra.mxu0 %v902
    %4300 = vmatprep.subr.bf16.mxu0 %v907
    %4301 = vmatpush1.bf16.msra.mxu0 %v906
    %4302 = vmatprep.subr.bf16.mxu0 %v911
    %4303 = vmatpush1.bf16.msra.mxu0 %v910
    %4304 = vmatprep.subr.bf16.mxu0 %v915
    %4305 = vmatpush1.bf16.msra.mxu0 %v914
    %4306 = vmatprep.subr.bf16.mxu0 %v919
    %4307 = vmatpush1.bf16.msra.mxu0 %v918
    %4308 = vmatprep.subr.bf16.mxu0 %v923
    %4309 = vmatpush1.bf16.msra.mxu0 %v922
    %4310 = vmatprep.subr.bf16.mxu0 %v927
    %4311 = vmatpush1.bf16.msra.mxu0 %v926
    %4312 = vmatprep.subr.bf16.mxu0 %v931
    %4313 = vmatpush1.bf16.msra.mxu0 %v930
    %4314 = vmatprep.subr.bf16.mxu0 0
    %4315 = vmatpush1.bf16.msra.mxu0 0
    %4316 = vmatprep.subr.bf16.mxu0 0
    %4317 = vmatpush1.bf16.msra.mxu0 0
    %4318 = vmatprep.subr.bf16.mxu0 0
    %4319 = vmatpush1.bf16.msra.mxu0 0
    %4320 = vmatprep.subr.bf16.mxu0 0
    %4321 = vmatpush1.bf16.msra.mxu0 0
    %4322 = vmatprep.subr.bf16.mxu0 0
    %4323 = vmatpush1.bf16.msra.mxu0 0
    %4324 = vmatprep.subr.bf16.mxu0 0
    %4325 = vmatpush1.bf16.msra.mxu0 0
    %4326 = vmatprep.subr.bf16.mxu0 0
    %4327 = vmatpush1.bf16.msra.mxu0 0
    %4328 = vmatprep.subr.bf16.mxu0 0
    %4329 = vmatpush1.bf16.msra.mxu0 0
    %4330 = vmatprep.mubr.bf16.mxu0 0
    %4331 = vmatmul.mubr.bf16.gmra.mrb[0].mxu0 %v4059
    %v4332 = vpop.f32.mrb[0].mxu0
    %v4333 = vadd.f32 0.0, %v4332
    %v4334 = vpop.f32.mrb[0].mxu0
    %v4335 = vadd.f32 0.0, %v4334
    %v4336 = vpop.f32.mrb[0].mxu0
    %v4337 = vpop.f32.mrb[0].mxu0
    %4338 = vdwg.mxu0
    %v4339 = vadd.f32 %v4253, %v4292
    %v4340 = vadd.f32 %v4254, %v4294
    %v4341 = vadd.f32 %v4255, %v4333
    %v4342 = vadd.f32 %v4256, %v4335
    %v4343 = vxor.u32 %v4339, 2147483648
    %v4344 = vxor.u32 %v4340, 2147483648
    %v4345 = vxor.u32 %v4341, 2147483648
    %v4346 = vmul.f32 %v4343, 1.442695
    %v4347 = vpow.pop %v4346
    %v4348 = vmul.f32 %v4344, 1.442695
    %v4349 = vpow.pop %v4348
    %v4350 = vmul.f32 %v4345, 1.442695
    %v4351 = vpow.pop %v4350
    %v4352 = vadd.f32 %v4347, 1.0
    %v4353 = vadd.f32 %v4349, 1.0
    %v4354 = vadd.f32 %v4351, 1.0
    %v4355 = vrcp.pop %v4352
    %v4356 = vmul.f32 1.0, %v4355
    %v4357 = vrcp.pop %v4353
    %v4358 = vmul.f32 1.0, %v4357
    %v4359 = vrcp.pop %v4354
    %v4360 = vmul.f32 1.0, %v4359
    %v4361 = vtanh.pop %v4342
    %v4362 = vmul.f32 %v4358, %v4056
    %v4363 = vmul.f32 %v4356, %v4361
    %v4364 = vadd.f32 %v4362, %v4363
    %v4365 = vtanh.pop %v4364
    %v4366 = vmul.f32 %v4360, %v4365
    %v4367 = vpack.c.bf16 %v4366, %v4366
    %4368 = vmatprep.subr.bf16.mxu0 %v1341
    %4369 = vmatpush1.bf16.msra.mxu0 %v1340
    %4370 = vmatprep.subr.bf16.mxu0 %v1345
    %4371 = vmatpush1.bf16.msra.mxu0 %v1344
    %4372 = vmatprep.subr.bf16.mxu0 %v1349
    %4373 = vmatpush1.bf16.msra.mxu0 %v1348
    %4374 = vmatprep.subr.bf16.mxu0 %v1353
    %4375 = vmatpush1.bf16.msra.mxu0 %v1352
    %4376 = vmatprep.subr.bf16.mxu0 %v1357
    %4377 = vmatpush1.bf16.msra.mxu0 %v1356
    %4378 = vmatprep.subr.bf16.mxu0 %v1361
    %4379 = vmatpush1.bf16.msra.mxu0 %v1360
    %4380 = vmatprep.subr.bf16.mxu0 %v1365
    %4381 = vmatpush1.bf16.msra.mxu0 %v1364
    %4382 = vmatprep.subr.bf16.mxu0 %v1369
    %4383 = vmatpush1.bf16.msra.mxu0 %v1368
    %4384 = vmatprep.subr.bf16.mxu0 0
    %4385 = vmatpush1.bf16.msra.mxu0 0
    %4386 = vmatprep.subr.bf16.mxu0 0
    %4387 = vmatpush1.bf16.msra.mxu0 0
    %4388 = vmatprep.subr.bf16.mxu0 0
    %4389 = vmatpush1.bf16.msra.mxu0 0
    %4390 = vmatprep.subr.bf16.mxu0 0
    %4391 = vmatpush1.bf16.msra.mxu0 0
    %4392 = vmatprep.subr.bf16.mxu0 0
    %4393 = vmatpush1.bf16.msra.mxu0 0
    %4394 = vmatprep.subr.bf16.mxu0 0
    %4395 = vmatpush1.bf16.msra.mxu0 0
    %4396 = vmatprep.subr.bf16.mxu0 0
    %4397 = vmatpush1.bf16.msra.mxu0 0
    %4398 = vmatprep.subr.bf16.mxu0 0
    %4399 = vmatpush1.bf16.msra.mxu0 0
    %4400 = vmatprep.mubr.bf16.mxu0 0
    %4401 = vmatmul.mubr.bf16.gmra.mrb[0].mxu0 %v4059
    %v4402 = vpop.f32.mrb[0].mxu0
    %v4403 = vadd.f32 %v1227, %v4402
    %v4404 = vpop.f32.mrb[0].mxu0
    %v4405 = vadd.f32 %v1231, %v4404
    %v4406 = vpop.f32.mrb[0].mxu0
    %v4407 = vpop.f32.mrb[0].mxu0
    %4408 = vdwg.mxu0
    %4409 = vmatprep.subr.bf16.mxu0 %v1343
    %4410 = vmatpush1.bf16.msra.mxu0 %v1342
    %4411 = vmatprep.subr.bf16.mxu0 %v1347
    %4412 = vmatpush1.bf16.msra.mxu0 %v1346
    %4413 = vmatprep.subr.bf16.mxu0 %v1351
    %4414 = vmatpush1.bf16.msra.mxu0 %v1350
    %4415 = vmatprep.subr.bf16.mxu0 %v1355
    %4416 = vmatpush1.bf16.msra.mxu0 %v1354
    %4417 = vmatprep.subr.bf16.mxu0 %v1359
    %4418 = vmatpush1.bf16.msra.mxu0 %v1358
    %4419 = vmatprep.subr.bf16.mxu0 %v1363
    %4420 = vmatpush1.bf16.msra.mxu0 %v1362
    %4421 = vmatprep.subr.bf16.mxu0 %v1367
    %4422 = vmatpush1.bf16.msra.mxu0 %v1366
    %4423 = vmatprep.subr.bf16.mxu0 %v1371
    %4424 = vmatpush1.bf16.msra.mxu0 %v1370
    %4425 = vmatprep.subr.bf16.mxu0 0
    %4426 = vmatpush1.bf16.msra.mxu0 0
    %4427 = vmatprep.subr.bf16.mxu0 0
    %4428 = vmatpush1.bf16.msra.mxu0 0
    %4429 = vmatprep.subr.bf16.mxu0 0
    %4430 = vmatpush1.bf16.msra.mxu0 0
    %4431 = vmatprep.subr.bf16.mxu0 0
    %4432 = vmatpush1.bf16.msra.mxu0 0
    %4433 = vmatprep.subr.bf16.mxu0 0
    %4434 = vmatpush1.bf16.msra.mxu0 0
    %4435 = vmatprep.subr.bf16.mxu0 0
    %4436 = vmatpush1.bf16.msra.mxu0 0
    %4437 = vmatprep.subr.bf16.mxu0 0
    %4438 = vmatpush1.bf16.msra.mxu0 0
    %4439 = vmatprep.subr.bf16.mxu0 0
    %4440 = vmatpush1.bf16.msra.mxu0 0
    %4441 = vmatprep.mubr.bf16.mxu0 0
    %4442 = vmatmul.mubr.bf16.gmra.mrb[0].mxu0 %v4059
    %v4443 = vpop.f32.mrb[0].mxu0
    %v4444 = vadd.f32 %v1235, %v4443
    %v4445 = vpop.f32.mrb[0].mxu0
    %v4446 = vadd.f32 %v1239, %v4445
    %v4447 = vpop.f32.mrb[0].mxu0
    %v4448 = vpop.f32.mrb[0].mxu0
    %4449 = vdwg.mxu0
    %4450 = vmatprep.subr.bf16.mxu0 %v1615
    %4451 = vmatpush1.bf16.msra.mxu0 %v1614
    %4452 = vmatprep.subr.bf16.mxu0 %v1619
    %4453 = vmatpush1.bf16.msra.mxu0 %v1618
    %4454 = vmatprep.subr.bf16.mxu0 %v1623
    %4455 = vmatpush1.bf16.msra.mxu0 %v1622
    %4456 = vmatprep.subr.bf16.mxu0 %v1627
    %4457 = vmatpush1.bf16.msra.mxu0 %v1626
    %4458 = vmatprep.subr.bf16.mxu0 %v1631
    %4459 = vmatpush1.bf16.msra.mxu0 %v1630
    %4460 = vmatprep.subr.bf16.mxu0 %v1635
    %4461 = vmatpush1.bf16.msra.mxu0 %v1634
    %4462 = vmatprep.subr.bf16.mxu0 %v1639
    %4463 = vmatpush1.bf16.msra.mxu0 %v1638
    %4464 = vmatprep.subr.bf16.mxu0 %v1643
    %4465 = vmatpush1.bf16.msra.mxu0 %v1642
    %4466 = vmatprep.subr.bf16.mxu0 0
    %4467 = vmatpush1.bf16.msra.mxu0 0
    %4468 = vmatprep.subr.bf16.mxu0 0
    %4469 = vmatpush1.bf16.msra.mxu0 0
    %4470 = vmatprep.subr.bf16.mxu0 0
    %4471 = vmatpush1.bf16.msra.mxu0 0
    %4472 = vmatprep.subr.bf16.mxu0 0
    %4473 = vmatpush1.bf16.msra.mxu0 0
    %4474 = vmatprep.subr.bf16.mxu0 0
    %4475 = vmatpush1.bf16.msra.mxu0 0
    %4476 = vmatprep.subr.bf16.mxu0 0
    %4477 = vmatpush1.bf16.msra.mxu0 0
    %4478 = vmatprep.subr.bf16.mxu0 0
    %4479 = vmatpush1.bf16.msra.mxu0 0
    %4480 = vmatprep.subr.bf16.mxu0 0
    %4481 = vmatpush1.bf16.msra.mxu0 0
    %4482 = vmatprep.mubr.bf16.mxu0 0
    %4483 = vmatmul.mubr.bf16.gmra.mrb[0].mxu0 %v4252
    %v4484 = vpop.f32.mrb[0].mxu0
    %v4485 = vadd.f32 0.0, %v4484
    %v4486 = vpop.f32.mrb[0].mxu0
    %v4487 = vadd.f32 0.0, %v4486
    %v4488 = vpop.f32.mrb[0].mxu0
    %v4489 = vpop.f32.mrb[0].mxu0
    %4490 = vdwg.mxu0
    %4491 = vmatprep.subr.bf16.mxu0 %v1617
    %4492 = vmatpush1.bf16.msra.mxu0 %v1616
    %4493 = vmatprep.subr.bf16.mxu0 %v1621
    %4494 = vmatpush1.bf16.msra.mxu0 %v1620
    %4495 = vmatprep.subr.bf16.mxu0 %v1625
    %4496 = vmatpush1.bf16.msra.mxu0 %v1624
    %4497 = vmatprep.subr.bf16.mxu0 %v1629
    %4498 = vmatpush1.bf16.msra.mxu0 %v1628
    %4499 = vmatprep.subr.bf16.mxu0 %v1633
    %4500 = vmatpush1.bf16.msra.mxu0 %v1632
    %4501 = vmatprep.subr.bf16.mxu0 %v1637
    %4502 = vmatpush1.bf16.msra.mxu0 %v1636
    %4503 = vmatprep.subr.bf16.mxu0 %v1641
    %4504 = vmatpush1.bf16.msra.mxu0 %v1640
    %4505 = vmatprep.subr.bf16.mxu0 %v1645
    %4506 = vmatpush1.bf16.msra.mxu0 %v1644
    %4507 = vmatprep.subr.bf16.mxu0 0
    %4508 = vmatpush1.bf16.msra.mxu0 0
    %4509 = vmatprep.subr.bf16.mxu0 0
    %4510 = vmatpush1.bf16.msra.mxu0 0
    %4511 = vmatprep.subr.bf16.mxu0 0
    %4512 = vmatpush1.bf16.msra.mxu0 0
    %4513 = vmatprep.subr.bf16.mxu0 0
    %4514 = vmatpush1.bf16.msra.mxu0 0
    %4515 = vmatprep.subr.bf16.mxu0 0
    %4516 = vmatpush1.bf16.msra.mxu0 0
    %4517 = vmatprep.subr.bf16.mxu0 0
    %4518 = vmatpush1.bf16.msra.mxu0 0
    %4519 = vmatprep.subr.bf16.mxu0 0
    %4520 = vmatpush1.bf16.msra.mxu0 0
    %4521 = vmatprep.subr.bf16.mxu0 0
    %4522 = vmatpush1.bf16.msra.mxu0 0
    %4523 = vmatprep.mubr.bf16.mxu0 0
    %4524 = vmatmul.mubr.bf16.gmra.mrb[0].mxu0 %v4252
    %v4525 = vpop.f32.mrb[0].mxu0
    %v4526 = vadd.f32 0.0, %v4525
    %v4527 = vpop.f32.mrb[0].mxu0
    %v4528 = vadd.f32 0.0, %v4527
    %v4529 = vpop.f32.mrb[0].mxu0
    %v4530 = vpop.f32.mrb[0].mxu0
    %4531 = vdwg.mxu0
    %v4532 = vadd.f32 %v4403, %v4485
    %v4533 = vadd.f32 %v4405, %v4487
    %v4534 = vadd.f32 %v4444, %v4526
    %v4535 = vadd.f32 %v4446, %v4528
    %v4536 = vxor.u32 %v4532, 2147483648
    %v4537 = vxor.u32 %v4533, 2147483648
    %v4538 = vxor.u32 %v4534, 2147483648
    %v4539 = vmul.f32 %v4536, 1.442695
    %v4540 = vpow.pop %v4539
    %v4541 = vmul.f32 %v4537, 1.442695
    %v4542 = vpow.pop %v4541
    %v4543 = vmul.f32 %v4538, 1.442695
    %v4544 = vpow.pop %v4543
    %v4545 = vadd.f32 %v4540, 1.0
    %v4546 = vadd.f32 %v4542, 1.0
    %v4547 = vadd.f32 %v4544, 1.0
    %v4548 = vrcp.pop %v4545
    %v4549 = vmul.f32 1.0, %v4548
    %v4550 = vrcp.pop %v4546
    %v4551 = vmul.f32 1.0, %v4550
    %v4552 = vrcp.pop %v4547
    %v4553 = vmul.f32 1.0, %v4552
    %v4554 = vtanh.pop %v4535
    %v4555 = vmul.f32 %v4551, %v4249
    %v4556 = vmul.f32 %v4549, %v4554
    %v4557 = vadd.f32 %v4555, %v4556
    %v4558 = vtanh.pop %v4557
    %v4559 = vmul.f32 %v4553, %v4558
    %v4560 = vpack.c.bf16 %v4559, %v4559
    %v4561 = vld [vmem:[#allocation2 + $0x160] sm:$0xff]
    %v4562 = vld [vmem:[#allocation2 + $0x168] sm:$0xff]
    %v4563 = vld [vmem:[#allocation2 + $0x170] sm:$0xff]
    %v4564 = vld [vmem:[#allocation2 + $0x178] sm:$0xff]
    %4565 = vmatprep.subr.bf16.mxu0 %v901
    %4566 = vmatpush1.bf16.msra.mxu0 %v900
    %4567 = vmatprep.subr.bf16.mxu0 %v905
    %4568 = vmatpush1.bf16.msra.mxu0 %v904
    %4569 = vmatprep.subr.bf16.mxu0 %v909
    %4570 = vmatpush1.bf16.msra.mxu0 %v908
    %4571 = vmatprep.subr.bf16.mxu0 %v913
    %4572 = vmatpush1.bf16.msra.mxu0 %v912
    %4573 = vmatprep.subr.bf16.mxu0 %v917
    %4574 = vmatpush1.bf16.msra.mxu0 %v916
    %4575 = vmatprep.subr.bf16.mxu0 %v921
    %4576 = vmatpush1.bf16.msra.mxu0 %v920
    %4577 = vmatprep.subr.bf16.mxu0 %v925
    %4578 = vmatpush1.bf16.msra.mxu0 %v924
    %4579 = vmatprep.subr.bf16.mxu0 %v929
    %4580 = vmatpush1.bf16.msra.mxu0 %v928
    %4581 = vmatprep.subr.bf16.mxu0 0
    %4582 = vmatpush1.bf16.msra.mxu0 0
    %4583 = vmatprep.subr.bf16.mxu0 0
    %4584 = vmatpush1.bf16.msra.mxu0 0
    %4585 = vmatprep.subr.bf16.mxu0 0
    %4586 = vmatpush1.bf16.msra.mxu0 0
    %4587 = vmatprep.subr.bf16.mxu0 0
    %4588 = vmatpush1.bf16.msra.mxu0 0
    %4589 = vmatprep.subr.bf16.mxu0 0
    %4590 = vmatpush1.bf16.msra.mxu0 0
    %4591 = vmatprep.subr.bf16.mxu0 0
    %4592 = vmatpush1.bf16.msra.mxu0 0
    %4593 = vmatprep.subr.bf16.mxu0 0
    %4594 = vmatpush1.bf16.msra.mxu0 0
    %4595 = vmatprep.subr.bf16.mxu0 0
    %4596 = vmatpush1.bf16.msra.mxu0 0
    %4597 = vmatprep.mubr.bf16.mxu0 0
    %4598 = vmatmul.mubr.bf16.gmra.mrb[0].mxu0 %v4367
    %v4599 = vpop.f32.mrb[0].mxu0
    %v4600 = vadd.f32 0.0, %v4599
    %v4601 = vpop.f32.mrb[0].mxu0
    %v4602 = vadd.f32 0.0, %v4601
    %v4603 = vpop.f32.mrb[0].mxu0
    %v4604 = vpop.f32.mrb[0].mxu0
    %4605 = vdwg.mxu0
    %4606 = vmatprep.subr.bf16.mxu0 %v903
    %4607 = vmatpush1.bf16.msra.mxu0 %v902
    %4608 = vmatprep.subr.bf16.mxu0 %v907
    %4609 = vmatpush1.bf16.msra.mxu0 %v906
    %4610 = vmatprep.subr.bf16.mxu0 %v911
    %4611 = vmatpush1.bf16.msra.mxu0 %v910
    %4612 = vmatprep.subr.bf16.mxu0 %v915
    %4613 = vmatpush1.bf16.msra.mxu0 %v914
    %4614 = vmatprep.subr.bf16.mxu0 %v919
    %4615 = vmatpush1.bf16.msra.mxu0 %v918
    %4616 = vmatprep.subr.bf16.mxu0 %v923
    %4617 = vmatpush1.bf16.msra.mxu0 %v922
    %4618 = vmatprep.subr.bf16.mxu0 %v927
    %4619 = vmatpush1.bf16.msra.mxu0 %v926
    %4620 = vmatprep.subr.bf16.mxu0 %v931
    %4621 = vmatpush1.bf16.msra.mxu0 %v930
    %4622 = vmatprep.subr.bf16.mxu0 0
    %4623 = vmatpush1.bf16.msra.mxu0 0
    %4624 = vmatprep.subr.bf16.mxu0 0
    %4625 = vmatpush1.bf16.msra.mxu0 0
    %4626 = vmatprep.subr.bf16.mxu0 0
    %4627 = vmatpush1.bf16.msra.mxu0 0
    %4628 = vmatprep.subr.bf16.mxu0 0
    %4629 = vmatpush1.bf16.msra.mxu0 0
    %4630 = vmatprep.subr.bf16.mxu0 0
    %4631 = vmatpush1.bf16.msra.mxu0 0
    %4632 = vmatprep.subr.bf16.mxu0 0
    %4633 = vmatpush1.bf16.msra.mxu0 0
    %4634 = vmatprep.subr.bf16.mxu0 0
    %4635 = vmatpush1.bf16.msra.mxu0 0
    %4636 = vmatprep.subr.bf16.mxu0 0
    %4637 = vmatpush1.bf16.msra.mxu0 0
    %4638 = vmatprep.mubr.bf16.mxu0 0
    %4639 = vmatmul.mubr.bf16.gmra.mrb[0].mxu0 %v4367
    %v4640 = vpop.f32.mrb[0].mxu0
    %v4641 = vadd.f32 0.0, %v4640
    %v4642 = vpop.f32.mrb[0].mxu0
    %v4643 = vadd.f32 0.0, %v4642
    %v4644 = vpop.f32.mrb[0].mxu0
    %v4645 = vpop.f32.mrb[0].mxu0
    %4646 = vdwg.mxu0
    %v4647 = vadd.f32 %v4561, %v4600
    %v4648 = vadd.f32 %v4562, %v4602
    %v4649 = vadd.f32 %v4563, %v4641
    %v4650 = vadd.f32 %v4564, %v4643
    %v4651 = vxor.u32 %v4647, 2147483648
    %v4652 = vxor.u32 %v4648, 2147483648
    %v4653 = vxor.u32 %v4649, 2147483648
    %v4654 = vmul.f32 %v4651, 1.442695
    %v4655 = vpow.pop %v4654
    %v4656 = vmul.f32 %v4652, 1.442695
    %v4657 = vpow.pop %v4656
    %v4658 = vmul.f32 %v4653, 1.442695
    %v4659 = vpow.pop %v4658
    %v4660 = vadd.f32 %v4655, 1.0
    %v4661 = vadd.f32 %v4657, 1.0
    %v4662 = vadd.f32 %v4659, 1.0
    %v4663 = vrcp.pop %v4660
    %v4664 = vmul.f32 1.0, %v4663
    %v4665 = vrcp.pop %v4661
    %v4666 = vmul.f32 1.0, %v4665
    %v4667 = vrcp.pop %v4662
    %v4668 = vmul.f32 1.0, %v4667
    %v4669 = vtanh.pop %v4650
    %v4670 = vmul.f32 %v4666, %v4364
    %v4671 = vmul.f32 %v4664, %v4669
    %v4672 = vadd.f32 %v4670, %v4671
    %v4673 = vtanh.pop %v4672
    %v4674 = vmul.f32 %v4668, %v4673
    %v4675 = vpack.c.bf16 %v4674, %v4674
    %4676 = vmatprep.subr.bf16.mxu0 %v1341
    %4677 = vmatpush1.bf16.msra.mxu0 %v1340
    %4678 = vmatprep.subr.bf16.mxu0 %v1345
    %4679 = vmatpush1.bf16.msra.mxu0 %v1344
    %4680 = vmatprep.subr.bf16.mxu0 %v1349
    %4681 = vmatpush1.bf16.msra.mxu0 %v1348
    %4682 = vmatprep.subr.bf16.mxu0 %v1353
    %4683 = vmatpush1.bf16.msra.mxu0 %v1352
    %4684 = vmatprep.subr.bf16.mxu0 %v1357
    %4685 = vmatpush1.bf16.msra.mxu0 %v1356
    %4686 = vmatprep.subr.bf16.mxu0 %v1361
    %4687 = vmatpush1.bf16.msra.mxu0 %v1360
    %4688 = vmatprep.subr.bf16.mxu0 %v1365
    %4689 = vmatpush1.bf16.msra.mxu0 %v1364
    %4690 = vmatprep.subr.bf16.mxu0 %v1369
    %4691 = vmatpush1.bf16.msra.mxu0 %v1368
    %4692 = vmatprep.subr.bf16.mxu0 0
    %4693 = vmatpush1.bf16.msra.mxu0 0
    %4694 = vmatprep.subr.bf16.mxu0 0
    %4695 = vmatpush1.bf16.msra.mxu0 0
    %4696 = vmatprep.subr.bf16.mxu0 0
    %4697 = vmatpush1.bf16.msra.mxu0 0
    %4698 = vmatprep.subr.bf16.mxu0 0
    %4699 = vmatpush1.bf16.msra.mxu0 0
    %4700 = vmatprep.subr.bf16.mxu0 0
    %4701 = vmatpush1.bf16.msra.mxu0 0
    %4702 = vmatprep.subr.bf16.mxu0 0
    %4703 = vmatpush1.bf16.msra.mxu0 0
    %4704 = vmatprep.subr.bf16.mxu0 0
    %4705 = vmatpush1.bf16.msra.mxu0 0
    %4706 = vmatprep.subr.bf16.mxu0 0
    %4707 = vmatpush1.bf16.msra.mxu0 0
    %4708 = vmatprep.mubr.bf16.mxu0 0
    %4709 = vmatmul.mubr.bf16.gmra.mrb[0].mxu0 %v4367
    %v4710 = vpop.f32.mrb[0].mxu0
    %v4711 = vadd.f32 %v1227, %v4710
    %v4712 = vpop.f32.mrb[0].mxu0
    %v4713 = vadd.f32 %v1231, %v4712
    %v4714 = vpop.f32.mrb[0].mxu0
    %v4715 = vpop.f32.mrb[0].mxu0
    %4716 = vdwg.mxu0
    %4717 = vmatprep.subr.bf16.mxu0 %v1343
    %4718 = vmatpush1.bf16.msra.mxu0 %v1342
    %4719 = vmatprep.subr.bf16.mxu0 %v1347
    %4720 = vmatpush1.bf16.msra.mxu0 %v1346
    %4721 = vmatprep.subr.bf16.mxu0 %v1351
    %4722 = vmatpush1.bf16.msra.mxu0 %v1350
    %4723 = vmatprep.subr.bf16.mxu0 %v1355
    %4724 = vmatpush1.bf16.msra.mxu0 %v1354
    %4725 = vmatprep.subr.bf16.mxu0 %v1359
    %4726 = vmatpush1.bf16.msra.mxu0 %v1358
    %4727 = vmatprep.subr.bf16.mxu0 %v1363
    %4728 = vmatpush1.bf16.msra.mxu0 %v1362
    %4729 = vmatprep.subr.bf16.mxu0 %v1367
    %4730 = vmatpush1.bf16.msra.mxu0 %v1366
    %4731 = vmatprep.subr.bf16.mxu0 %v1371
    %4732 = vmatpush1.bf16.msra.mxu0 %v1370
    %4733 = vmatprep.subr.bf16.mxu0 0
    %4734 = vmatpush1.bf16.msra.mxu0 0
    %4735 = vmatprep.subr.bf16.mxu0 0
    %4736 = vmatpush1.bf16.msra.mxu0 0
    %4737 = vmatprep.subr.bf16.mxu0 0
    %4738 = vmatpush1.bf16.msra.mxu0 0
    %4739 = vmatprep.subr.bf16.mxu0 0
    %4740 = vmatpush1.bf16.msra.mxu0 0
    %4741 = vmatprep.subr.bf16.mxu0 0
    %4742 = vmatpush1.bf16.msra.mxu0 0
    %4743 = vmatprep.subr.bf16.mxu0 0
    %4744 = vmatpush1.bf16.msra.mxu0 0
    %4745 = vmatprep.subr.bf16.mxu0 0
    %4746 = vmatpush1.bf16.msra.mxu0 0
    %4747 = vmatprep.subr.bf16.mxu0 0
    %4748 = vmatpush1.bf16.msra.mxu0 0
    %4749 = vmatprep.mubr.bf16.mxu0 0
    %4750 = vmatmul.mubr.bf16.gmra.mrb[0].mxu0 %v4367
    %v4751 = vpop.f32.mrb[0].mxu0
    %v4752 = vadd.f32 %v1235, %v4751
    %v4753 = vpop.f32.mrb[0].mxu0
    %v4754 = vadd.f32 %v1239, %v4753
    %v4755 = vpop.f32.mrb[0].mxu0
    %v4756 = vpop.f32.mrb[0].mxu0
    %4757 = vdwg.mxu0
    %4758 = vmatprep.subr.bf16.mxu0 %v1615
    %4759 = vmatpush1.bf16.msra.mxu0 %v1614
    %4760 = vmatprep.subr.bf16.mxu0 %v1619
    %4761 = vmatpush1.bf16.msra.mxu0 %v1618
    %4762 = vmatprep.subr.bf16.mxu0 %v1623
    %4763 = vmatpush1.bf16.msra.mxu0 %v1622
    %4764 = vmatprep.subr.bf16.mxu0 %v1627
    %4765 = vmatpush1.bf16.msra.mxu0 %v1626
    %4766 = vmatprep.subr.bf16.mxu0 %v1631
    %4767 = vmatpush1.bf16.msra.mxu0 %v1630
    %4768 = vmatprep.subr.bf16.mxu0 %v1635
    %4769 = vmatpush1.bf16.msra.mxu0 %v1634
    %4770 = vmatprep.subr.bf16.mxu0 %v1639
    %4771 = vmatpush1.bf16.msra.mxu0 %v1638
    %4772 = vmatprep.subr.bf16.mxu0 %v1643
    %4773 = vmatpush1.bf16.msra.mxu0 %v1642
    %4774 = vmatprep.subr.bf16.mxu0 0
    %4775 = vmatpush1.bf16.msra.mxu0 0
    %4776 = vmatprep.subr.bf16.mxu0 0
    %4777 = vmatpush1.bf16.msra.mxu0 0
    %4778 = vmatprep.subr.bf16.mxu0 0
    %4779 = vmatpush1.bf16.msra.mxu0 0
    %4780 = vmatprep.subr.bf16.mxu0 0
    %4781 = vmatpush1.bf16.msra.mxu0 0
    %4782 = vmatprep.subr.bf16.mxu0 0
    %4783 = vmatpush1.bf16.msra.mxu0 0
    %4784 = vmatprep.subr.bf16.mxu0 0
    %4785 = vmatpush1.bf16.msra.mxu0 0
    %4786 = vmatprep.subr.bf16.mxu0 0
    %4787 = vmatpush1.bf16.msra.mxu0 0
    %4788 = vmatprep.subr.bf16.mxu0 0
    %4789 = vmatpush1.bf16.msra.mxu0 0
    %4790 = vmatprep.mubr.bf16.mxu0 0
    %4791 = vmatmul.mubr.bf16.gmra.mrb[0].mxu0 %v4560
    %v4792 = vpop.f32.mrb[0].mxu0
    %v4793 = vadd.f32 0.0, %v4792
    %v4794 = vpop.f32.mrb[0].mxu0
    %v4795 = vadd.f32 0.0, %v4794
    %v4796 = vpop.f32.mrb[0].mxu0
    %v4797 = vpop.f32.mrb[0].mxu0
    %4798 = vdwg.mxu0
    %4799 = vmatprep.subr.bf16.mxu0 %v1617
    %4800 = vmatpush1.bf16.msra.mxu0 %v1616
    %4801 = vmatprep.subr.bf16.mxu0 %v1621
    %4802 = vmatpush1.bf16.msra.mxu0 %v1620
    %4803 = vmatprep.subr.bf16.mxu0 %v1625
    %4804 = vmatpush1.bf16.msra.mxu0 %v1624
    %4805 = vmatprep.subr.bf16.mxu0 %v1629
    %4806 = vmatpush1.bf16.msra.mxu0 %v1628
    %4807 = vmatprep.subr.bf16.mxu0 %v1633
    %4808 = vmatpush1.bf16.msra.mxu0 %v1632
    %4809 = vmatprep.subr.bf16.mxu0 %v1637
    %4810 = vmatpush1.bf16.msra.mxu0 %v1636
    %4811 = vmatprep.subr.bf16.mxu0 %v1641
    %4812 = vmatpush1.bf16.msra.mxu0 %v1640
    %4813 = vmatprep.subr.bf16.mxu0 %v1645
    %4814 = vmatpush1.bf16.msra.mxu0 %v1644
    %4815 = vmatprep.subr.bf16.mxu0 0
    %4816 = vmatpush1.bf16.msra.mxu0 0
    %4817 = vmatprep.subr.bf16.mxu0 0
    %4818 = vmatpush1.bf16.msra.mxu0 0
    %4819 = vmatprep.subr.bf16.mxu0 0
    %4820 = vmatpush1.bf16.msra.mxu0 0
    %4821 = vmatprep.subr.bf16.mxu0 0
    %4822 = vmatpush1.bf16.msra.mxu0 0
    %4823 = vmatprep.subr.bf16.mxu0 0
    %4824 = vmatpush1.bf16.msra.mxu0 0
    %4825 = vmatprep.subr.bf16.mxu0 0
    %4826 = vmatpush1.bf16.msra.mxu0 0
    %4827 = vmatprep.subr.bf16.mxu0 0
    %4828 = vmatpush1.bf16.msra.mxu0 0
    %4829 = vmatprep.subr.bf16.mxu0 0
    %4830 = vmatpush1.bf16.msra.mxu0 0
    %4831 = vmatprep.mubr.bf16.mxu0 0
    %4832 = vmatmul.mubr.bf16.gmra.mrb[0].mxu0 %v4560
    %v4833 = vpop.f32.mrb[0].mxu0
    %v4834 = vadd.f32 0.0, %v4833
    %v4835 = vpop.f32.mrb[0].mxu0
    %v4836 = vadd.f32 0.0, %v4835
    %v4837 = vpop.f32.mrb[0].mxu0
    %v4838 = vpop.f32.mrb[0].mxu0
    %4839 = vdwg.mxu0
    %v4840 = vadd.f32 %v4711, %v4793
    %v4841 = vadd.f32 %v4713, %v4795
    %v4842 = vadd.f32 %v4752, %v4834
    %v4843 = vadd.f32 %v4754, %v4836
    %v4844 = vxor.u32 %v4840, 2147483648
    %v4845 = vxor.u32 %v4841, 2147483648
    %v4846 = vxor.u32 %v4842, 2147483648
    %v4847 = vmul.f32 %v4844, 1.442695
    %v4848 = vpow.pop %v4847
    %v4849 = vmul.f32 %v4845, 1.442695
    %v4850 = vpow.pop %v4849
    %v4851 = vmul.f32 %v4846, 1.442695
    %v4852 = vpow.pop %v4851
    %v4853 = vadd.f32 %v4848, 1.0
    %v4854 = vadd.f32 %v4850, 1.0
    %v4855 = vadd.f32 %v4852, 1.0
    %v4856 = vrcp.pop %v4853
    %v4857 = vmul.f32 1.0, %v4856
    %v4858 = vrcp.pop %v4854
    %v4859 = vmul.f32 1.0, %v4858
    %v4860 = vrcp.pop %v4855
    %v4861 = vmul.f32 1.0, %v4860
    %v4862 = vtanh.pop %v4843
    %v4863 = vmul.f32 %v4859, %v4557
    %v4864 = vmul.f32 %v4857, %v4862
    %v4865 = vadd.f32 %v4863, %v4864
    %v4866 = vtanh.pop %v4865
    %v4867 = vmul.f32 %v4861, %v4866
    %v4868 = vpack.c.bf16 %v4867, %v4867
    %4869 = vmatprep.subr.bf16.mxu0 %v1341
    %4870 = vmatpush1.bf16.msra.mxu0 %v1340
    %4871 = vmatprep.subr.bf16.mxu0 %v1345
    %4872 = vmatpush1.bf16.msra.mxu0 %v1344
    %4873 = vmatprep.subr.bf16.mxu0 %v1349
    %4874 = vmatpush1.bf16.msra.mxu0 %v1348
    %4875 = vmatprep.subr.bf16.mxu0 %v1353
    %4876 = vmatpush1.bf16.msra.mxu0 %v1352
    %4877 = vmatprep.subr.bf16.mxu0 %v1357
    %4878 = vmatpush1.bf16.msra.mxu0 %v1356
    %4879 = vmatprep.subr.bf16.mxu0 %v1361
    %4880 = vmatpush1.bf16.msra.mxu0 %v1360
    %4881 = vmatprep.subr.bf16.mxu0 %v1365
    %4882 = vmatpush1.bf16.msra.mxu0 %v1364
    %4883 = vmatprep.subr.bf16.mxu0 %v1369
    %4884 = vmatpush1.bf16.msra.mxu0 %v1368
    %4885 = vmatprep.subr.bf16.mxu0 0
    %4886 = vmatpush1.bf16.msra.mxu0 0
    %4887 = vmatprep.subr.bf16.mxu0 0
    %4888 = vmatpush1.bf16.msra.mxu0 0
    %4889 = vmatprep.subr.bf16.mxu0 0
    %4890 = vmatpush1.bf16.msra.mxu0 0
    %4891 = vmatprep.subr.bf16.mxu0 0
    %4892 = vmatpush1.bf16.msra.mxu0 0
    %4893 = vmatprep.subr.bf16.mxu0 0
    %4894 = vmatpush1.bf16.msra.mxu0 0
    %4895 = vmatprep.subr.bf16.mxu0 0
    %4896 = vmatpush1.bf16.msra.mxu0 0
    %4897 = vmatprep.subr.bf16.mxu0 0
    %4898 = vmatpush1.bf16.msra.mxu0 0
    %4899 = vmatprep.subr.bf16.mxu0 0
    %4900 = vmatpush1.bf16.msra.mxu0 0
    %4901 = vmatprep.mubr.bf16.mxu0 0
    %4902 = vmatmul.mubr.bf16.gmra.mrb[0].mxu0 %v4675
    %v4903 = vpop.f32.mrb[0].mxu0
    %v4904 = vadd.f32 %v1227, %v4903
    %v4905 = vpop.f32.mrb[0].mxu0
    %v4906 = vadd.f32 %v1231, %v4905
    %v4907 = vpop.f32.mrb[0].mxu0
    %v4908 = vpop.f32.mrb[0].mxu0
    %4909 = vdwg.mxu0
    %4910 = vmatprep.subr.bf16.mxu0 %v1343
    %4911 = vmatpush1.bf16.msra.mxu0 %v1342
    %4912 = vmatprep.subr.bf16.mxu0 %v1347
    %4913 = vmatpush1.bf16.msra.mxu0 %v1346
    %4914 = vmatprep.subr.bf16.mxu0 %v1351
    %4915 = vmatpush1.bf16.msra.mxu0 %v1350
    %4916 = vmatprep.subr.bf16.mxu0 %v1355
    %4917 = vmatpush1.bf16.msra.mxu0 %v1354
    %4918 = vmatprep.subr.bf16.mxu0 %v1359
    %4919 = vmatpush1.bf16.msra.mxu0 %v1358
    %4920 = vmatprep.subr.bf16.mxu0 %v1363
    %4921 = vmatpush1.bf16.msra.mxu0 %v1362
    %4922 = vmatprep.subr.bf16.mxu0 %v1367
    %4923 = vmatpush1.bf16.msra.mxu0 %v1366
    %4924 = vmatprep.subr.bf16.mxu0 %v1371
    %4925 = vmatpush1.bf16.msra.mxu0 %v1370
    %4926 = vmatprep.subr.bf16.mxu0 0
    %4927 = vmatpush1.bf16.msra.mxu0 0
    %4928 = vmatprep.subr.bf16.mxu0 0
    %4929 = vmatpush1.bf16.msra.mxu0 0
    %4930 = vmatprep.subr.bf16.mxu0 0
    %4931 = vmatpush1.bf16.msra.mxu0 0
    %4932 = vmatprep.subr.bf16.mxu0 0
    %4933 = vmatpush1.bf16.msra.mxu0 0
    %4934 = vmatprep.subr.bf16.mxu0 0
    %4935 = vmatpush1.bf16.msra.mxu0 0
    %4936 = vmatprep.subr.bf16.mxu0 0
    %4937 = vmatpush1.bf16.msra.mxu0 0
    %4938 = vmatprep.subr.bf16.mxu0 0
    %4939 = vmatpush1.bf16.msra.mxu0 0
    %4940 = vmatprep.subr.bf16.mxu0 0
    %4941 = vmatpush1.bf16.msra.mxu0 0
    %4942 = vmatprep.mubr.bf16.mxu0 0
    %4943 = vmatmul.mubr.bf16.gmra.mrb[0].mxu0 %v4675
    %v4944 = vpop.f32.mrb[0].mxu0
    %v4945 = vadd.f32 %v1235, %v4944
    %v4946 = vpop.f32.mrb[0].mxu0
    %v4947 = vadd.f32 %v1239, %v4946
    %v4948 = vpop.f32.mrb[0].mxu0
    %v4949 = vpop.f32.mrb[0].mxu0
    %4950 = vdwg.mxu0
    %4951 = vmatprep.subr.bf16.mxu0 %v1615
    %4952 = vmatpush1.bf16.msra.mxu0 %v1614
    %4953 = vmatprep.subr.bf16.mxu0 %v1619
    %4954 = vmatpush1.bf16.msra.mxu0 %v1618
    %4955 = vmatprep.subr.bf16.mxu0 %v1623
    %4956 = vmatpush1.bf16.msra.mxu0 %v1622
    %4957 = vmatprep.subr.bf16.mxu0 %v1627
    %4958 = vmatpush1.bf16.msra.mxu0 %v1626
    %4959 = vmatprep.subr.bf16.mxu0 %v1631
    %4960 = vmatpush1.bf16.msra.mxu0 %v1630
    %4961 = vmatprep.subr.bf16.mxu0 %v1635
    %4962 = vmatpush1.bf16.msra.mxu0 %v1634
    %4963 = vmatprep.subr.bf16.mxu0 %v1639
    %4964 = vmatpush1.bf16.msra.mxu0 %v1638
    %4965 = vmatprep.subr.bf16.mxu0 %v1643
    %4966 = vmatpush1.bf16.msra.mxu0 %v1642
    %4967 = vmatprep.subr.bf16.mxu0 0
    %4968 = vmatpush1.bf16.msra.mxu0 0
    %4969 = vmatprep.subr.bf16.mxu0 0
    %4970 = vmatpush1.bf16.msra.mxu0 0
    %4971 = vmatprep.subr.bf16.mxu0 0
    %4972 = vmatpush1.bf16.msra.mxu0 0
    %4973 = vmatprep.subr.bf16.mxu0 0
    %4974 = vmatpush1.bf16.msra.mxu0 0
    %4975 = vmatprep.subr.bf16.mxu0 0
    %4976 = vmatpush1.bf16.msra.mxu0 0
    %4977 = vmatprep.subr.bf16.mxu0 0
    %4978 = vmatpush1.bf16.msra.mxu0 0
    %4979 = vmatprep.subr.bf16.mxu0 0
    %4980 = vmatpush1.bf16.msra.mxu0 0
    %4981 = vmatprep.subr.bf16.mxu0 0
    %4982 = vmatpush1.bf16.msra.mxu0 0
    %4983 = vmatprep.mubr.bf16.mxu0 0
    %4984 = vmatmul.mubr.bf16.gmra.mrb[0].mxu0 %v4868
    %v4985 = vpop.f32.mrb[0].mxu0
    %v4986 = vadd.f32 0.0, %v4985
    %v4987 = vpop.f32.mrb[0].mxu0
    %v4988 = vadd.f32 0.0, %v4987
    %v4989 = vpop.f32.mrb[0].mxu0
    %v4990 = vpop.f32.mrb[0].mxu0
    %4991 = vdwg.mxu0
    %4992 = vmatprep.subr.bf16.mxu0 %v1617
    %4993 = vmatpush1.bf16.msra.mxu0 %v1616
    %4994 = vmatprep.subr.bf16.mxu0 %v1621
    %4995 = vmatpush1.bf16.msra.mxu0 %v1620
    %4996 = vmatprep.subr.bf16.mxu0 %v1625
    %4997 = vmatpush1.bf16.msra.mxu0 %v1624
    %4998 = vmatprep.subr.bf16.mxu0 %v1629
    %4999 = vmatpush1.bf16.msra.mxu0 %v1628
    %5000 = vmatprep.subr.bf16.mxu0 %v1633
    %5001 = vmatpush1.bf16.msra.mxu0 %v1632
    %5002 = vmatprep.subr.bf16.mxu0 %v1637
    %5003 = vmatpush1.bf16.msra.mxu0 %v1636
    %5004 = vmatprep.subr.bf16.mxu0 %v1641
    %5005 = vmatpush1.bf16.msra.mxu0 %v1640
    %5006 = vmatprep.subr.bf16.mxu0 %v1645
    %5007 = vmatpush1.bf16.msra.mxu0 %v1644
    %5008 = vmatprep.subr.bf16.mxu0 0
    %5009 = vmatpush1.bf16.msra.mxu0 0
    %5010 = vmatprep.subr.bf16.mxu0 0
    %5011 = vmatpush1.bf16.msra.mxu0 0
    %5012 = vmatprep.subr.bf16.mxu0 0
    %5013 = vmatpush1.bf16.msra.mxu0 0
    %5014 = vmatprep.subr.bf16.mxu0 0
    %5015 = vmatpush1.bf16.msra.mxu0 0
    %5016 = vmatprep.subr.bf16.mxu0 0
    %5017 = vmatpush1.bf16.msra.mxu0 0
    %5018 = vmatprep.subr.bf16.mxu0 0
    %5019 = vmatpush1.bf16.msra.mxu0 0
    %5020 = vmatprep.subr.bf16.mxu0 0
    %5021 = vmatpush1.bf16.msra.mxu0 0
    %5022 = vmatprep.subr.bf16.mxu0 0
    %5023 = vmatpush1.bf16.msra.mxu0 0
    %5024 = vmatprep.mubr.bf16.mxu0 0
    %5025 = vmatmul.mubr.bf16.gmra.mrb[0].mxu0 %v4868
    %v5026 = vpop.f32.mrb[0].mxu0
    %v5027 = vadd.f32 0.0, %v5026
    %v5028 = vpop.f32.mrb[0].mxu0
    %v5029 = vadd.f32 0.0, %v5028
    %v5030 = vpop.f32.mrb[0].mxu0
    %v5031 = vpop.f32.mrb[0].mxu0
    %5032 = vdwg.mxu0
    %v5033 = vadd.f32 %v4904, %v4986
    %v5034 = vadd.f32 %v4906, %v4988
    %v5035 = vadd.f32 %v4945, %v5027
    %v5036 = vadd.f32 %v4947, %v5029
    %v5037 = vxor.u32 %v5033, 2147483648
    %v5038 = vxor.u32 %v5034, 2147483648
    %v5039 = vxor.u32 %v5035, 2147483648
    %v5040 = vmul.f32 %v5037, 1.442695
    %v5041 = vpow.pop %v5040
    %v5042 = vmul.f32 %v5038, 1.442695
    %v5043 = vpow.pop %v5042
    %v5044 = vmul.f32 %v5039, 1.442695
    %v5045 = vpow.pop %v5044
    %v5046 = vadd.f32 %v5041, 1.0
    %v5047 = vadd.f32 %v5043, 1.0
    %v5048 = vadd.f32 %v5045, 1.0
    %v5049 = vrcp.pop %v5046
    %v5050 = vmul.f32 1.0, %v5049
    %v5051 = vrcp.pop %v5047
    %v5052 = vmul.f32 1.0, %v5051
    %v5053 = vrcp.pop %v5048
    %v5054 = vmul.f32 1.0, %v5053
    %v5055 = vtanh.pop %v5036
    %v5056 = vmul.f32 %v5052, %v4865
    %v5057 = vmul.f32 %v5050, %v5055
    %v5058 = vadd.f32 %v5056, %v5057
    %v5059 = vtanh.pop %v5058
    %v5060 = vmul.f32 %v5054, %v5059
    %5061 = vst [vmem:[#allocation11] sm:$0xff] %v4674
    %5062 = vst [vmem:[#allocation12] sm:$0xff] %v4672
    %s5063 = scalar_lea.vmem [#allocation11], 8
    %5064 = vst [vmem:[%s5063] sm:$0xff] %v5060
    %s5065 = scalar_lea.vmem [#allocation12], 8
    %5066 = vst [vmem:[%s5065] sm:$0xff] %v5058
    // Predicated region
    $region50: #{encoder_forward.1} parent=1 // pred_check
      _
    $region51: #{encoder_forward.1} parent=1 // pred_check_branch
      %5068 = sbr.rel (0) target = $region53
    $region52: #{encoder_forward.1} parent=1 // pred_region
      %s5070 = ssub.s32 256, 256
      %5071 = vsyncadd [#allocation5], %s5070
      %s5072 = sshll.u32 [#allocation11], 4
      %s5073 = int_to_ptr.vmem [resolvable:$true] %s5072
      %5078 = dma.vmem_to_hbm [thread:$0]  %s5073, 256, %s8, [#allocation5], 128, 128, 8
    $region53: #{encoder_forward.1} parent=1 // pred_fallthru
      _
    // Predicated region
    $region54: #{encoder_forward.1} parent=1 // pred_check
      _
    $region55: #{encoder_forward.1} parent=1 // pred_check_branch
      %5080 = sbr.rel (0) target = $region57
    $region56: #{encoder_forward.1} parent=1 // pred_region
      %s5082 = ssub.s32 256, 256
      %5083 = vsyncadd [#allocation13], %s5082
      %s5084 = sshll.u32 [#allocation12], 4
      %s5085 = int_to_ptr.vmem [resolvable:$true] %s5084
      %5090 = dma.vmem_to_hbm [thread:$0]  %s5085, 256, %s9, [#allocation13], 128, 128, 8
    $region57: #{encoder_forward.1} parent=1 // pred_fallthru
      _
    // Predicated region
    $region58: #{encoder_forward.1} parent=1 // pred_check
      _
    $region59: #{encoder_forward.1} parent=1 // pred_check_branch
      %5092 = sbr.rel (0) target = $region61
    $region60: #{encoder_forward.1} parent=1 // pred_region
      %5093 = dma.done [#allocation5], 256
    $region61: #{encoder_forward.1} parent=1 // pred_fallthru
      _
    // Predicated region
    $region62: #{encoder_forward.1} parent=1 // pred_check
      _
    $region63: #{encoder_forward.1} parent=1 // pred_check_branch
      %5095 = sbr.rel (0) target = $region65
    $region64: #{encoder_forward.1} parent=1 // pred_region
      %5096 = dma.done [#allocation13], 256
    $region65: #{encoder_forward.1} parent=1 // pred_fallthru
      _
    %5097 = vsyncpa [#allocation4], 1
    %5098 = vsyncpa [#allocation7], 1
    %5099 = vsyncpa [#allocation10], 1
    %5100 = vsyncpa [#allocation5], 1
    %5101 = vsyncpa [#allocation13], 1

</llo_original>
